<compile_context>
chip_gen: v6e
topology: v6e:2x2x1
jax: 0.10.0
libtpu: 0.0.40
codegen_flags: <defaults>
</compile_context>

<pallas_src>
import math

import jax
import jax.numpy as jnp
from jax.experimental import pallas as pl
from jax.experimental.pallas import tpu as pltpu

# ---- static config -------------------------------------------------------
B, N, H, NH = 2, 8, 32, 4
D = H // NH                       # attention_head_size = 8
MAX_REL = 16                      # max_relative_positions
SPAN = MAX_REL                    # pos_ebd_size (position_buckets <= 0)
SCALE_FACTOR = 3                  # 1 + ('c2p' in pos_att_type) + ('p2c' in pos_att_type)
ATT_SCALING = math.sqrt(D)        # mup=False -> sqrt(head_size)
NEG_INF = float(jnp.finfo(jnp.float32).min)


# ---- Pallas kernel: the whole (B, NH) problem in one invocation ----------
def _dsa_kernel(x_ref, w_ref, bias_ref, rel_ref, mask_ref, out_ref):
    f32 = jnp.float32
    inv_scale_qc = 1.0 / (ATT_SCALING * SCALE_FACTOR)   # content scores + c2p bias
    inv_scale_p2c = 1.0 / ATT_SCALING                   # p2c bias

    def nt(a, b):   # a[m,d] @ b[n,d]^T -> [m,n]  (contraction on the last dims)
        return jax.lax.dot_general(a, b, (((1,), (1,)), ((), ())),
                                   preferred_element_type=f32)

    x = x_ref[...]          # [B*N, H]
    w = w_ref[...]          # [H, 3H]  columns: Wq | Wk | Wv (already transposed)
    bias = bias_ref[...]    # [1, 3H]  bq | bk | bv
    rel = rel_ref[...]      # [2*SPAN, H]

    # Fused projections: one MXU matmul for q|k|v over all batches/heads,
    # one for the shared positional projections (share_att_key=True).
    qkv = jnp.dot(x, w, preferred_element_type=f32) + bias      # [B*N, 3H]
    pos = jnp.dot(rel, w, preferred_element_type=f32) + bias    # [2*SPAN, 3H]

    q_all = qkv[:, 0 * H:1 * H] * inv_scale_qc   # scaling folded in once
    k_all = qkv[:, 1 * H:2 * H]
    v_all = qkv[:, 2 * H:3 * H]
    pos_q = pos[:, 0 * H:1 * H] * inv_scale_p2c
    pos_k = pos[:, 1 * H:2 * H]

    # Shared diagonal gather selector: sel[i,j,s] = (s == clip(i-j+SPAN, 0, 2*SPAN-1)).
    # c2p bias[i,j]            = c2p_att[i, clip(i-j+SPAN)]
    # p2c bias[i,j] (post-.T)  = p2c_att[j, clip(i-j+SPAN)]
    # -> same selector serves both; one fused select+reduce covers both biases.
    ii = jax.lax.broadcasted_iota(jnp.int32, (N, N, 2 * SPAN), 0)
    jj = jax.lax.broadcasted_iota(jnp.int32, (N, N, 2 * SPAN), 1)
    ss = jax.lax.broadcasted_iota(jnp.int32, (N, N, 2 * SPAN), 2)
    sel = ss == jnp.clip(ii - jj + SPAN, 0, 2 * SPAN - 1)       # [N, N, 2*SPAN] bool

    for b in range(B):                      # B*NH = 8 small tiles: fully unrolled
        rmask = mask_ref[b] == 0            # [N, N]
        rows = slice(b * N, (b + 1) * N)
        # Augmented keys for this batch: [pos_k ; k_b] -> one matmul per head
        # produces both the c2p attention and the content scores (same LHS q).
        k_aug = jnp.concatenate([pos_k, k_all[rows, :]], axis=0)   # [2*SPAN+N, H]
        ctx_heads = []
        for h in range(NH):
            cols = slice(h * D, (h + 1) * D)
            q = q_all[rows, cols]           # [N, D]  (pre-scaled)
            k = k_all[rows, cols]           # [N, D]
            v = v_all[rows, cols]           # [N, D]

            sc_c2p = nt(q, k_aug[:, cols])                  # [N, 2*SPAN + N]
            c2p = sc_c2p[:, :2 * SPAN]                      # [N, 2*SPAN]
            scores = sc_c2p[:, 2 * SPAN:]                   # [N, N]
            p2c = nt(k, pos_q[:, cols])                     # [N, 2*SPAN]

            rel_bias = jnp.sum(
                jnp.where(sel, c2p[:, None, :] + p2c[None, :, :], 0.0), axis=-1)
            scores = scores + rel_bias

            # XSoftmax: mask -> fill with f32 min -> softmax -> re-zero masked
            s = jnp.where(rmask, NEG_INF, scores)
            s = s - jnp.max(s, axis=-1, keepdims=True)
            e = jnp.exp(s)
            denom = jnp.sum(e, axis=-1, keepdims=True)
            probs = e * pl.reciprocal(denom, approx=True)
            probs = jnp.where(rmask, 0.0, probs)

            ctx_heads.append(jnp.dot(probs, v, preferred_element_type=f32))

        # lane-dense [N, H] store in context_layer layout (no wrapper transpose)
        out_ref[b] = jnp.concatenate(ctx_heads, axis=-1).astype(out_ref.dtype)


# ---- wrapper -------------------------------------------------------------
@jax.jit
def disentangled_self_attention(hidden_states, w_qkv, b_qkv, rel_embeddings, mask):
    x2d = hidden_states.reshape(B * N, H)
    return pl.pallas_call(
        _dsa_kernel,
        out_shape=jax.ShapeDtypeStruct((B, N, H), jnp.float32),
        grid=(1,),
        in_specs=[
            pl.BlockSpec((B * N, H), lambda i: (0, 0)),        # hidden_states (flat)
            pl.BlockSpec((H, 3 * H), lambda i: (0, 0)),        # fused Wq|Wk|Wv
            pl.BlockSpec((1, 3 * H), lambda i: (0, 0)),        # fused bq|bk|bv
            pl.BlockSpec((2 * SPAN, H), lambda i: (0, 0)),     # rel_embeddings
            pl.BlockSpec((B, N, N), lambda i: (0, 0, 0)),      # attention mask
        ],
        out_specs=pl.BlockSpec((B, N, H), lambda i: (0, 0, 0)),
        compiler_params=pltpu.CompilerParams(dimension_semantics=("arbitrary",)),
    )(x2d, w_qkv, b_qkv, rel_embeddings, mask)


# ---- pure-JAX reference (faithful to the PyTorch code) -------------------
def reference(hs, Wq, bq, Wk, bk, Wv, bv, rel_emb, rel_pos, mask4):
    P = jax.lax.Precision.HIGHEST

    def proj(x, W, b):
        return jnp.einsum('...nh,oh->...no', x, W, precision=P) + b

    def t4s(x):  # transpose_for_scores
        Bz, Nz, _ = x.shape
        return x.reshape(Bz, Nz, NH, D).transpose(0, 2, 1, 3).reshape(Bz * NH, Nz, D)

    q = t4s(proj(hs, Wq, bq))
    k = t4s(proj(hs, Wk, bk))
    v = t4s(proj(hs, Wv, bv))

    scores = jnp.einsum('bnd,bmd->bnm', q, k, precision=P) / (ATT_SCALING * SCALE_FACTOR)

    re = rel_emb[: 2 * SPAN][None]                        # [1, 2*SPAN, H]
    pos_k = jnp.tile(t4s(proj(re, Wk, bk)), (B, 1, 1))    # [B*NH, 2*SPAN, D]
    pos_q = jnp.tile(t4s(proj(re, Wq, bq)), (B, 1, 1))

    c2p_pos = jnp.clip(rel_pos + SPAN, 0, 2 * SPAN - 1)
    c2p_att = jnp.einsum('bnd,bsd->bns', q, pos_k, precision=P)
    c2p_b = jnp.take_along_axis(
        c2p_att, jnp.broadcast_to(c2p_pos[None], (B * NH, N, N)), axis=-1)
    bias = c2p_b / (ATT_SCALING * SCALE_FACTOR)

    p2c_pos = jnp.clip(-rel_pos + SPAN, 0, 2 * SPAN - 1)
    p2c_att = jnp.einsum('bnd,bsd->bns', k, pos_q, precision=P)
    p2c_b = jnp.take_along_axis(
        p2c_att, jnp.broadcast_to(p2c_pos[None], (B * NH, N, N)), axis=-1)
    bias = bias + jnp.swapaxes(p2c_b, -1, -2) / ATT_SCALING

    scores = (scores + bias).reshape(B, NH, N, N)

    rmask = mask4 == 0
    s = jnp.where(rmask, NEG_INF, scores)
    s = s - jnp.max(s, axis=-1, keepdims=True)
    e = jnp.exp(s)
    probs = e / jnp.sum(e, axis=-1, keepdims=True)
    probs = jnp.where(rmask, 0.0, probs)

    ctx = jnp.einsum('bhnm,bhmd->bhnd', probs, v.reshape(B, NH, N, D), precision=P)
    return ctx.transpose(0, 2, 1, 3).reshape(B, N, H)


if __name__ == "__main__":
    key = jax.random.PRNGKey(0)
    ks = jax.random.split(key, 9)

    hidden_states = jax.random.normal(ks[0], (B, N, H), jnp.float32)
    # nn.Linear weights [out, in], biases [out]
    Wq = 0.1 * jax.random.normal(ks[1], (H, H), jnp.float32)
    Wk = 0.1 * jax.random.normal(ks[2], (H, H), jnp.float32)
    Wv = 0.1 * jax.random.normal(ks[3], (H, H), jnp.float32)
    bq = 0.1 * jax.random.normal(ks[4], (H,), jnp.float32)
    bk = 0.1 * jax.random.normal(ks[5], (H,), jnp.float32)
    bv = 0.1 * jax.random.normal(ks[6], (H,), jnp.float32)
    rel_embeddings = 0.1 * jax.random.normal(ks[7], (2 * MAX_REL, H), jnp.float32)

    # attention mask; batch 1 has its last 2 tokens padded
    tok_mask = jnp.ones((B, N), jnp.float32).at[1, -2:].set(0.0)
    mask3 = (tok_mask[:, :, None] * tok_mask[:, None, :]).astype(jnp.float32)   # [B,N,N]
    mask4 = mask3[:, None, :, :]                                                # [B,1,N,N]

    # fused parameter layout for the kernel (nn.Linear: y = x @ W.T + b)
    w_qkv = jnp.concatenate([Wq.T, Wk.T, Wv.T], axis=1)      # [H, 3H]
    b_qkv = jnp.concatenate([bq, bk, bv])[None, :]           # [1, 3H]

    # StableDropout with p=0.0 (eval) is identity; applied as no-op here.
    out = disentangled_self_attention(hidden_states, w_qkv, b_qkv, rel_embeddings, mask3)
    out = jax.block_until_ready(out)

    # build_relative_position (bucket_size <= 0): rel_pos[i, j] = i - j
    rel_pos = (jnp.arange(N)[:, None] - jnp.arange(N)[None, :]).astype(jnp.int32)
    ref = reference(hidden_states, Wq, bq, Wk, bk, Wv, bv, rel_embeddings, rel_pos, mask4)

    assert out.shape == (B, N, H)
    # approx-reciprocal softmax normalization (EUP) adds a few 1e-4 relative error;
    # tolerance kept a small multiple above that.
    assert jnp.allclose(out, ref, atol=2e-3, rtol=2e-3), float(jnp.max(jnp.abs(out - ref)))

    print("KERNEL_OK")
</pallas_src>

<mosaic_0001>
module attributes {stable_mosaic.version = 11 : i64} {
  func.func @_dsa_kernel(%arg0: i32, %arg1: memref<16x32xf32, #tpu.memory_space<vmem>>, %arg2: memref<32x96xf32, #tpu.memory_space<vmem>>, %arg3: memref<1x96xf32, #tpu.memory_space<vmem>>, %arg4: memref<32x32xf32, #tpu.memory_space<vmem>>, %arg5: memref<2x8x8xf32, #tpu.memory_space<vmem>>, %arg6: memref<2x8x32xf32, #tpu.memory_space<vmem>>) attributes {dimension_semantics = [#tpu.dimension_semantics<arbitrary>], iteration_bounds = array<i64: 1>, scalar_prefetch = 0 : i64, scratch_operands = 0 : i64, tpu.core_type = #tpu.core_type<tc>, window_params = [{pipeline_mode = #tpu.pipeline_mode<synchronous>, transform_indices = @transform_0, window_bounds = array<i64: 16, 32>}, {pipeline_mode = #tpu.pipeline_mode<synchronous>, transform_indices = @transform_1, window_bounds = array<i64: 32, 96>}, {pipeline_mode = #tpu.pipeline_mode<synchronous>, transform_indices = @transform_2, window_bounds = array<i64: 1, 96>}, {pipeline_mode = #tpu.pipeline_mode<synchronous>, transform_indices = @transform_3, window_bounds = array<i64: 32, 32>}, {pipeline_mode = #tpu.pipeline_mode<synchronous>, transform_indices = @transform_4, window_bounds = array<i64: 2, 8, 8>}, {pipeline_mode = #tpu.pipeline_mode<synchronous>, transform_indices = @transform_5, window_bounds = array<i64: 2, 8, 32>}]} {
    %c0 = arith.constant 0 : index
    %c0_0 = arith.constant 0 : index
    %0 = vector.load %arg1[%c0, %c0_0] : memref<16x32xf32, #tpu.memory_space<vmem>>, vector<16x32xf32>
    %c0_1 = arith.constant 0 : index
    %c0_2 = arith.constant 0 : index
    %1 = vector.load %arg2[%c0_1, %c0_2] : memref<32x96xf32, #tpu.memory_space<vmem>>, vector<32x96xf32>
    %c0_3 = arith.constant 0 : index
    %c0_4 = arith.constant 0 : index
    %2 = vector.load %arg3[%c0_3, %c0_4] : memref<1x96xf32, #tpu.memory_space<vmem>>, vector<1x96xf32>
    %c0_5 = arith.constant 0 : index
    %c0_6 = arith.constant 0 : index
    %3 = vector.load %arg4[%c0_5, %c0_6] : memref<32x32xf32, #tpu.memory_space<vmem>>, vector<32x32xf32>
    %cst = arith.constant dense<0.000000e+00> : vector<16x96xf32>
    %4 = tpu.matmul %0, %1, %cst {dimension_numbers = #tpu.dot_dimension_numbers<[1], [0], [0], [1], [0, 0, 1, 1], [], []>} : vector<16x32xf32>, vector<32x96xf32>, vector<16x96xf32> -> vector<16x96xf32>
    %5 = vector.broadcast %2 : vector<1x96xf32> to vector<16x96xf32>
    %6 = arith.addf %4, %5 : vector<16x96xf32>
    %cst_7 = arith.constant dense<0.000000e+00> : vector<32x96xf32>
    %7 = tpu.matmul %3, %1, %cst_7 {dimension_numbers = #tpu.dot_dimension_numbers<[1], [0], [0], [1], [0, 0, 1, 1], [], []>} : vector<32x32xf32>, vector<32x96xf32>, vector<32x96xf32> -> vector<32x96xf32>
    %8 = vector.broadcast %2 : vector<1x96xf32> to vector<32x96xf32>
    %9 = arith.addf %7, %8 : vector<32x96xf32>
    %10 = vector.extract_strided_slice %6 {offsets = [0, 0], sizes = [16, 32], strides = [1, 1]} : vector<16x96xf32> to vector<16x32xf32>
    %cst_8 = arith.constant 0.117851131 : f32
    %11 = vector.broadcast %cst_8 : f32 to vector<16x32xf32>
    %12 = arith.mulf %10, %11 : vector<16x32xf32>
    %13 = vector.extract_strided_slice %6 {offsets = [0, 32], sizes = [16, 32], strides = [1, 1]} : vector<16x96xf32> to vector<16x32xf32>
    %14 = vector.extract_strided_slice %6 {offsets = [0, 64], sizes = [16, 32], strides = [1, 1]} : vector<16x96xf32> to vector<16x32xf32>
    %15 = vector.extract_strided_slice %9 {offsets = [0, 0], sizes = [32, 32], strides = [1, 1]} : vector<32x96xf32> to vector<32x32xf32>
    %cst_9 = arith.constant 0.353553385 : f32
    %16 = vector.broadcast %cst_9 : f32 to vector<32x32xf32>
    %17 = arith.mulf %15, %16 : vector<32x32xf32>
    %18 = vector.extract_strided_slice %9 {offsets = [0, 32], sizes = [32, 32], strides = [1, 1]} : vector<32x96xf32> to vector<32x32xf32>
    %19 = tpu.iota {dimensions = array<i32: 0>} : vector<8x8x32xi32>
    %20 = tpu.iota {dimensions = array<i32: 1>} : vector<8x8x32xi32>
    %21 = tpu.iota {dimensions = array<i32: 2>} : vector<8x8x32xi32>
    %22 = arith.subi %19, %20 : vector<8x8x32xi32>
    %c16_i32 = arith.constant 16 : i32
    %23 = vector.broadcast %c16_i32 : i32 to vector<8x8x32xi32>
    %24 = arith.addi %22, %23 : vector<8x8x32xi32>
    %c0_i32 = arith.constant 0 : i32
    %c31_i32 = arith.constant 31 : i32
    %25 = vector.broadcast %c0_i32 : i32 to vector<8x8x32xi32>
    %26 = arith.maxsi %25, %24 : vector<8x8x32xi32>
    %27 = vector.broadcast %c31_i32 : i32 to vector<8x8x32xi32>
    %28 = arith.minsi %27, %26 : vector<8x8x32xi32>
    %29 = arith.cmpi eq, %21, %28 : vector<8x8x32xi32>
    %c0_10 = arith.constant 0 : index
    %c0_11 = arith.constant 0 : index
    %c0_12 = arith.constant 0 : index
    %30 = vector.load %arg5[%c0_10, %c0_11, %c0_12] : memref<2x8x8xf32, #tpu.memory_space<vmem>>, vector<1x8x8xf32>
    %31 = vector.shape_cast %30 : vector<1x8x8xf32> to vector<8x8xf32>
    %cst_13 = arith.constant 0.000000e+00 : f32
    %32 = vector.broadcast %cst_13 : f32 to vector<8x8xf32>
    %33 = arith.cmpf oeq, %31, %32 : vector<8x8xf32>
    %34 = vector.extract_strided_slice %13 {offsets = [0, 0], sizes = [8, 32], strides = [1, 1]} : vector<16x32xf32> to vector<8x32xf32>
    %35 = tpu.concatenate %18, %34 in 0 : vector<32x32xf32>, vector<8x32xf32> -> vector<40x32xf32>
    %36 = vector.extract_strided_slice %12 {offsets = [0, 0], sizes = [8, 8], strides = [1, 1]} : vector<16x32xf32> to vector<8x8xf32>
    %37 = vector.extract_strided_slice %13 {offsets = [0, 0], sizes = [8, 8], strides = [1, 1]} : vector<16x32xf32> to vector<8x8xf32>
    %38 = vector.extract_strided_slice %14 {offsets = [0, 0], sizes = [8, 8], strides = [1, 1]} : vector<16x32xf32> to vector<8x8xf32>
    %39 = vector.extract_strided_slice %35 {offsets = [0, 0], sizes = [40, 8], strides = [1, 1]} : vector<40x32xf32> to vector<40x8xf32>
    %cst_14 = arith.constant dense<0.000000e+00> : vector<8x40xf32>
    %40 = tpu.matmul %36, %39, %cst_14 {dimension_numbers = #tpu.dot_dimension_numbers<[1], [1], [0], [0], [0, 0, 1, 0], [], []>} : vector<8x8xf32>, vector<40x8xf32>, vector<8x40xf32> -> vector<8x40xf32>
    %41 = vector.extract_strided_slice %40 {offsets = [0, 0], sizes = [8, 32], strides = [1, 1]} : vector<8x40xf32> to vector<8x32xf32>
    %42 = vector.extract_strided_slice %40 {offsets = [0, 32], sizes = [8, 8], strides = [1, 1]} : vector<8x40xf32> to vector<8x8xf32>
    %43 = vector.extract_strided_slice %17 {offsets = [0, 0], sizes = [32, 8], strides = [1, 1]} : vector<32x32xf32> to vector<32x8xf32>
    %cst_15 = arith.constant dense<0.000000e+00> : vector<8x32xf32>
    %44 = tpu.matmul %37, %43, %cst_15 {dimension_numbers = #tpu.dot_dimension_numbers<[1], [1], [0], [0], [0, 0, 1, 0], [], []>} : vector<8x8xf32>, vector<32x8xf32>, vector<8x32xf32> -> vector<8x32xf32>
    %45 = vector.shape_cast %41 : vector<8x32xf32> to vector<8x1x32xf32>
    %46 = vector.shape_cast %44 : vector<8x32xf32> to vector<1x8x32xf32>
    %47 = vector.broadcast %45 : vector<8x1x32xf32> to vector<8x8x32xf32>
    %48 = vector.broadcast %46 : vector<1x8x32xf32> to vector<8x8x32xf32>
    %49 = arith.addf %47, %48 : vector<8x8x32xf32>
    %cst_16 = arith.constant 0.000000e+00 : f32
    %50 = vector.broadcast %cst_16 : f32 to vector<8x8x32xf32>
    %51 = arith.select %29, %49, %50 : vector<8x8x32xi1>, vector<8x8x32xf32>
    %cst_17 = arith.constant dense<0.000000e+00> : vector<8x8xf32>
    %52 = vector.multi_reduction <add>, %51, %cst_17 [2] : vector<8x8x32xf32> to vector<8x8xf32>
    %53 = arith.addf %42, %52 : vector<8x8xf32>
    %cst_18 = arith.constant -3.40282347E+38 : f32
    %54 = vector.broadcast %cst_18 : f32 to vector<8x8xf32>
    %55 = arith.select %33, %54, %53 : vector<8x8xi1>, vector<8x8xf32>
    %cst_19 = arith.constant dense<0xFF800000> : vector<8xf32>
    %56 = vector.multi_reduction <maximumf>, %55, %cst_19 [1] : vector<8x8xf32> to vector<8xf32>
    %57 = vector.shape_cast %56 : vector<8xf32> to vector<8x1xf32>
    %58 = vector.broadcast %57 : vector<8x1xf32> to vector<8x8xf32>
    %59 = arith.subf %55, %58 : vector<8x8xf32>
    %60 = math.exp %59 : vector<8x8xf32>
    %cst_20 = arith.constant dense<0.000000e+00> : vector<8xf32>
    %61 = vector.multi_reduction <add>, %60, %cst_20 [1] : vector<8x8xf32> to vector<8xf32>
    %62 = vector.shape_cast %61 : vector<8xf32> to vector<8x1xf32>
    %63 = tpu.reciprocal %62 {approx = true} : vector<8x1xf32> -> vector<8x1xf32>
    %64 = vector.broadcast %63 : vector<8x1xf32> to vector<8x8xf32>
    %65 = arith.mulf %60, %64 : vector<8x8xf32>
    %cst_21 = arith.constant 0.000000e+00 : f32
    %66 = vector.broadcast %cst_21 : f32 to vector<8x8xf32>
    %67 = arith.select %33, %66, %65 : vector<8x8xi1>, vector<8x8xf32>
    %cst_22 = arith.constant dense<0.000000e+00> : vector<8x8xf32>
    %68 = tpu.matmul %67, %38, %cst_22 {dimension_numbers = #tpu.dot_dimension_numbers<[1], [0], [0], [1], [0, 0, 1, 1], [], []>} : vector<8x8xf32>, vector<8x8xf32>, vector<8x8xf32> -> vector<8x8xf32>
    %69 = vector.extract_strided_slice %12 {offsets = [0, 8], sizes = [8, 8], strides = [1, 1]} : vector<16x32xf32> to vector<8x8xf32>
    %70 = vector.extract_strided_slice %13 {offsets = [0, 8], sizes = [8, 8], strides = [1, 1]} : vector<16x32xf32> to vector<8x8xf32>
    %71 = vector.extract_strided_slice %14 {offsets = [0, 8], sizes = [8, 8], strides = [1, 1]} : vector<16x32xf32> to vector<8x8xf32>
    %72 = vector.extract_strided_slice %35 {offsets = [0, 8], sizes = [40, 8], strides = [1, 1]} : vector<40x32xf32> to vector<40x8xf32>
    %cst_23 = arith.constant dense<0.000000e+00> : vector<8x40xf32>
    %73 = tpu.matmul %69, %72, %cst_23 {dimension_numbers = #tpu.dot_dimension_numbers<[1], [1], [0], [0], [0, 0, 1, 0], [], []>} : vector<8x8xf32>, vector<40x8xf32>, vector<8x40xf32> -> vector<8x40xf32>
    %74 = vector.extract_strided_slice %73 {offsets = [0, 0], sizes = [8, 32], strides = [1, 1]} : vector<8x40xf32> to vector<8x32xf32>
    %75 = vector.extract_strided_slice %73 {offsets = [0, 32], sizes = [8, 8], strides = [1, 1]} : vector<8x40xf32> to vector<8x8xf32>
    %76 = vector.extract_strided_slice %17 {offsets = [0, 8], sizes = [32, 8], strides = [1, 1]} : vector<32x32xf32> to vector<32x8xf32>
    %cst_24 = arith.constant dense<0.000000e+00> : vector<8x32xf32>
    %77 = tpu.matmul %70, %76, %cst_24 {dimension_numbers = #tpu.dot_dimension_numbers<[1], [1], [0], [0], [0, 0, 1, 0], [], []>} : vector<8x8xf32>, vector<32x8xf32>, vector<8x32xf32> -> vector<8x32xf32>
    %78 = vector.shape_cast %74 : vector<8x32xf32> to vector<8x1x32xf32>
    %79 = vector.shape_cast %77 : vector<8x32xf32> to vector<1x8x32xf32>
    %80 = vector.broadcast %78 : vector<8x1x32xf32> to vector<8x8x32xf32>
    %81 = vector.broadcast %79 : vector<1x8x32xf32> to vector<8x8x32xf32>
    %82 = arith.addf %80, %81 : vector<8x8x32xf32>
    %cst_25 = arith.constant 0.000000e+00 : f32
    %83 = vector.broadcast %cst_25 : f32 to vector<8x8x32xf32>
    %84 = arith.select %29, %82, %83 : vector<8x8x32xi1>, vector<8x8x32xf32>
    %cst_26 = arith.constant dense<0.000000e+00> : vector<8x8xf32>
    %85 = vector.multi_reduction <add>, %84, %cst_26 [2] : vector<8x8x32xf32> to vector<8x8xf32>
    %86 = arith.addf %75, %85 : vector<8x8xf32>
    %cst_27 = arith.constant -3.40282347E+38 : f32
    %87 = vector.broadcast %cst_27 : f32 to vector<8x8xf32>
    %88 = arith.select %33, %87, %86 : vector<8x8xi1>, vector<8x8xf32>
    %cst_28 = arith.constant dense<0xFF800000> : vector<8xf32>
    %89 = vector.multi_reduction <maximumf>, %88, %cst_28 [1] : vector<8x8xf32> to vector<8xf32>
    %90 = vector.shape_cast %89 : vector<8xf32> to vector<8x1xf32>
    %91 = vector.broadcast %90 : vector<8x1xf32> to vector<8x8xf32>
    %92 = arith.subf %88, %91 : vector<8x8xf32>
    %93 = math.exp %92 : vector<8x8xf32>
    %cst_29 = arith.constant dense<0.000000e+00> : vector<8xf32>
    %94 = vector.multi_reduction <add>, %93, %cst_29 [1] : vector<8x8xf32> to vector<8xf32>
    %95 = vector.shape_cast %94 : vector<8xf32> to vector<8x1xf32>
    %96 = tpu.reciprocal %95 {approx = true} : vector<8x1xf32> -> vector<8x1xf32>
    %97 = vector.broadcast %96 : vector<8x1xf32> to vector<8x8xf32>
    %98 = arith.mulf %93, %97 : vector<8x8xf32>
    %cst_30 = arith.constant 0.000000e+00 : f32
    %99 = vector.broadcast %cst_30 : f32 to vector<8x8xf32>
    %100 = arith.select %33, %99, %98 : vector<8x8xi1>, vector<8x8xf32>
    %cst_31 = arith.constant dense<0.000000e+00> : vector<8x8xf32>
    %101 = tpu.matmul %100, %71, %cst_31 {dimension_numbers = #tpu.dot_dimension_numbers<[1], [0], [0], [1], [0, 0, 1, 1], [], []>} : vector<8x8xf32>, vector<8x8xf32>, vector<8x8xf32> -> vector<8x8xf32>
    %102 = vector.extract_strided_slice %12 {offsets = [0, 16], sizes = [8, 8], strides = [1, 1]} : vector<16x32xf32> to vector<8x8xf32>
    %103 = vector.extract_strided_slice %13 {offsets = [0, 16], sizes = [8, 8], strides = [1, 1]} : vector<16x32xf32> to vector<8x8xf32>
    %104 = vector.extract_strided_slice %14 {offsets = [0, 16], sizes = [8, 8], strides = [1, 1]} : vector<16x32xf32> to vector<8x8xf32>
    %105 = vector.extract_strided_slice %35 {offsets = [0, 16], sizes = [40, 8], strides = [1, 1]} : vector<40x32xf32> to vector<40x8xf32>
    %cst_32 = arith.constant dense<0.000000e+00> : vector<8x40xf32>
    %106 = tpu.matmul %102, %105, %cst_32 {dimension_numbers = #tpu.dot_dimension_numbers<[1], [1], [0], [0], [0, 0, 1, 0], [], []>} : vector<8x8xf32>, vector<40x8xf32>, vector<8x40xf32> -> vector<8x40xf32>
    %107 = vector.extract_strided_slice %106 {offsets = [0, 0], sizes = [8, 32], strides = [1, 1]} : vector<8x40xf32> to vector<8x32xf32>
    %108 = vector.extract_strided_slice %106 {offsets = [0, 32], sizes = [8, 8], strides = [1, 1]} : vector<8x40xf32> to vector<8x8xf32>
    %109 = vector.extract_strided_slice %17 {offsets = [0, 16], sizes = [32, 8], strides = [1, 1]} : vector<32x32xf32> to vector<32x8xf32>
    %cst_33 = arith.constant dense<0.000000e+00> : vector<8x32xf32>
    %110 = tpu.matmul %103, %109, %cst_33 {dimension_numbers = #tpu.dot_dimension_numbers<[1], [1], [0], [0], [0, 0, 1, 0], [], []>} : vector<8x8xf32>, vector<32x8xf32>, vector<8x32xf32> -> vector<8x32xf32>
    %111 = vector.shape_cast %107 : vector<8x32xf32> to vector<8x1x32xf32>
    %112 = vector.shape_cast %110 : vector<8x32xf32> to vector<1x8x32xf32>
    %113 = vector.broadcast %111 : vector<8x1x32xf32> to vector<8x8x32xf32>
    %114 = vector.broadcast %112 : vector<1x8x32xf32> to vector<8x8x32xf32>
    %115 = arith.addf %113, %114 : vector<8x8x32xf32>
    %cst_34 = arith.constant 0.000000e+00 : f32
    %116 = vector.broadcast %cst_34 : f32 to vector<8x8x32xf32>
    %117 = arith.select %29, %115, %116 : vector<8x8x32xi1>, vector<8x8x32xf32>
    %cst_35 = arith.constant dense<0.000000e+00> : vector<8x8xf32>
    %118 = vector.multi_reduction <add>, %117, %cst_35 [2] : vector<8x8x32xf32> to vector<8x8xf32>
    %119 = arith.addf %108, %118 : vector<8x8xf32>
    %cst_36 = arith.constant -3.40282347E+38 : f32
    %120 = vector.broadcast %cst_36 : f32 to vector<8x8xf32>
    %121 = arith.select %33, %120, %119 : vector<8x8xi1>, vector<8x8xf32>
    %cst_37 = arith.constant dense<0xFF800000> : vector<8xf32>
    %122 = vector.multi_reduction <maximumf>, %121, %cst_37 [1] : vector<8x8xf32> to vector<8xf32>
    %123 = vector.shape_cast %122 : vector<8xf32> to vector<8x1xf32>
    %124 = vector.broadcast %123 : vector<8x1xf32> to vector<8x8xf32>
    %125 = arith.subf %121, %124 : vector<8x8xf32>
    %126 = math.exp %125 : vector<8x8xf32>
    %cst_38 = arith.constant dense<0.000000e+00> : vector<8xf32>
    %127 = vector.multi_reduction <add>, %126, %cst_38 [1] : vector<8x8xf32> to vector<8xf32>
    %128 = vector.shape_cast %127 : vector<8xf32> to vector<8x1xf32>
    %129 = tpu.reciprocal %128 {approx = true} : vector<8x1xf32> -> vector<8x1xf32>
    %130 = vector.broadcast %129 : vector<8x1xf32> to vector<8x8xf32>
    %131 = arith.mulf %126, %130 : vector<8x8xf32>
    %cst_39 = arith.constant 0.000000e+00 : f32
    %132 = vector.broadcast %cst_39 : f32 to vector<8x8xf32>
    %133 = arith.select %33, %132, %131 : vector<8x8xi1>, vector<8x8xf32>
    %cst_40 = arith.constant dense<0.000000e+00> : vector<8x8xf32>
    %134 = tpu.matmul %133, %104, %cst_40 {dimension_numbers = #tpu.dot_dimension_numbers<[1], [0], [0], [1], [0, 0, 1, 1], [], []>} : vector<8x8xf32>, vector<8x8xf32>, vector<8x8xf32> -> vector<8x8xf32>
    %135 = vector.extract_strided_slice %12 {offsets = [0, 24], sizes = [8, 8], strides = [1, 1]} : vector<16x32xf32> to vector<8x8xf32>
    %136 = vector.extract_strided_slice %13 {offsets = [0, 24], sizes = [8, 8], strides = [1, 1]} : vector<16x32xf32> to vector<8x8xf32>
    %137 = vector.extract_strided_slice %14 {offsets = [0, 24], sizes = [8, 8], strides = [1, 1]} : vector<16x32xf32> to vector<8x8xf32>
    %138 = vector.extract_strided_slice %35 {offsets = [0, 24], sizes = [40, 8], strides = [1, 1]} : vector<40x32xf32> to vector<40x8xf32>
    %cst_41 = arith.constant dense<0.000000e+00> : vector<8x40xf32>
    %139 = tpu.matmul %135, %138, %cst_41 {dimension_numbers = #tpu.dot_dimension_numbers<[1], [1], [0], [0], [0, 0, 1, 0], [], []>} : vector<8x8xf32>, vector<40x8xf32>, vector<8x40xf32> -> vector<8x40xf32>
    %140 = vector.extract_strided_slice %139 {offsets = [0, 0], sizes = [8, 32], strides = [1, 1]} : vector<8x40xf32> to vector<8x32xf32>
    %141 = vector.extract_strided_slice %139 {offsets = [0, 32], sizes = [8, 8], strides = [1, 1]} : vector<8x40xf32> to vector<8x8xf32>
    %142 = vector.extract_strided_slice %17 {offsets = [0, 24], sizes = [32, 8], strides = [1, 1]} : vector<32x32xf32> to vector<32x8xf32>
    %cst_42 = arith.constant dense<0.000000e+00> : vector<8x32xf32>
    %143 = tpu.matmul %136, %142, %cst_42 {dimension_numbers = #tpu.dot_dimension_numbers<[1], [1], [0], [0], [0, 0, 1, 0], [], []>} : vector<8x8xf32>, vector<32x8xf32>, vector<8x32xf32> -> vector<8x32xf32>
    %144 = vector.shape_cast %140 : vector<8x32xf32> to vector<8x1x32xf32>
    %145 = vector.shape_cast %143 : vector<8x32xf32> to vector<1x8x32xf32>
    %146 = vector.broadcast %144 : vector<8x1x32xf32> to vector<8x8x32xf32>
    %147 = vector.broadcast %145 : vector<1x8x32xf32> to vector<8x8x32xf32>
    %148 = arith.addf %146, %147 : vector<8x8x32xf32>
    %cst_43 = arith.constant 0.000000e+00 : f32
    %149 = vector.broadcast %cst_43 : f32 to vector<8x8x32xf32>
    %150 = arith.select %29, %148, %149 : vector<8x8x32xi1>, vector<8x8x32xf32>
    %cst_44 = arith.constant dense<0.000000e+00> : vector<8x8xf32>
    %151 = vector.multi_reduction <add>, %150, %cst_44 [2] : vector<8x8x32xf32> to vector<8x8xf32>
    %152 = arith.addf %141, %151 : vector<8x8xf32>
    %cst_45 = arith.constant -3.40282347E+38 : f32
    %153 = vector.broadcast %cst_45 : f32 to vector<8x8xf32>
    %154 = arith.select %33, %153, %152 : vector<8x8xi1>, vector<8x8xf32>
    %cst_46 = arith.constant dense<0xFF800000> : vector<8xf32>
    %155 = vector.multi_reduction <maximumf>, %154, %cst_46 [1] : vector<8x8xf32> to vector<8xf32>
    %156 = vector.shape_cast %155 : vector<8xf32> to vector<8x1xf32>
    %157 = vector.broadcast %156 : vector<8x1xf32> to vector<8x8xf32>
    %158 = arith.subf %154, %157 : vector<8x8xf32>
    %159 = math.exp %158 : vector<8x8xf32>
    %cst_47 = arith.constant dense<0.000000e+00> : vector<8xf32>
    %160 = vector.multi_reduction <add>, %159, %cst_47 [1] : vector<8x8xf32> to vector<8xf32>
    %161 = vector.shape_cast %160 : vector<8xf32> to vector<8x1xf32>
    %162 = tpu.reciprocal %161 {approx = true} : vector<8x1xf32> -> vector<8x1xf32>
    %163 = vector.broadcast %162 : vector<8x1xf32> to vector<8x8xf32>
    %164 = arith.mulf %159, %163 : vector<8x8xf32>
    %cst_48 = arith.constant 0.000000e+00 : f32
    %165 = vector.broadcast %cst_48 : f32 to vector<8x8xf32>
    %166 = arith.select %33, %165, %164 : vector<8x8xi1>, vector<8x8xf32>
    %cst_49 = arith.constant dense<0.000000e+00> : vector<8x8xf32>
    %167 = tpu.matmul %166, %137, %cst_49 {dimension_numbers = #tpu.dot_dimension_numbers<[1], [0], [0], [1], [0, 0, 1, 1], [], []>} : vector<8x8xf32>, vector<8x8xf32>, vector<8x8xf32> -> vector<8x8xf32>
    %168 = tpu.concatenate %68, %101, %134, %167 in 1 : vector<8x8xf32>, vector<8x8xf32>, vector<8x8xf32>, vector<8x8xf32> -> vector<8x32xf32>
    %c0_50 = arith.constant 0 : index
    %c0_51 = arith.constant 0 : index
    %c0_52 = arith.constant 0 : index
    %169 = vector.load %arg6[%c0_50, %c0_51, %c0_52] : memref<2x8x32xf32, #tpu.memory_space<vmem>>, vector<1x8x32xf32>
    %170 = vector.shape_cast %169 : vector<1x8x32xf32> to vector<8x32xf32>
    %171 = vector.shape_cast %168 : vector<8x32xf32> to vector<1x8x32xf32>
    tpu.vector_store %arg6[%c0_50, %c0_51, %c0_52], %171 {strides = array<i32>} : memref<2x8x32xf32, #tpu.memory_space<vmem>>, vector<1x8x32xf32>,
    %c1 = arith.constant 1 : index
    %c0_53 = arith.constant 0 : index
    %c0_54 = arith.constant 0 : index
    %172 = vector.load %arg5[%c1, %c0_53, %c0_54] : memref<2x8x8xf32, #tpu.memory_space<vmem>>, vector<1x8x8xf32>
    %173 = vector.shape_cast %172 : vector<1x8x8xf32> to vector<8x8xf32>
    %cst_55 = arith.constant 0.000000e+00 : f32
    %174 = vector.broadcast %cst_55 : f32 to vector<8x8xf32>
    %175 = arith.cmpf oeq, %173, %174 : vector<8x8xf32>
    %176 = vector.extract_strided_slice %13 {offsets = [8, 0], sizes = [8, 32], strides = [1, 1]} : vector<16x32xf32> to vector<8x32xf32>
    %177 = tpu.concatenate %18, %176 in 0 : vector<32x32xf32>, vector<8x32xf32> -> vector<40x32xf32>
    %178 = vector.extract_strided_slice %12 {offsets = [8, 0], sizes = [8, 8], strides = [1, 1]} : vector<16x32xf32> to vector<8x8xf32>
    %179 = vector.extract_strided_slice %13 {offsets = [8, 0], sizes = [8, 8], strides = [1, 1]} : vector<16x32xf32> to vector<8x8xf32>
    %180 = vector.extract_strided_slice %14 {offsets = [8, 0], sizes = [8, 8], strides = [1, 1]} : vector<16x32xf32> to vector<8x8xf32>
    %181 = vector.extract_strided_slice %177 {offsets = [0, 0], sizes = [40, 8], strides = [1, 1]} : vector<40x32xf32> to vector<40x8xf32>
    %cst_56 = arith.constant dense<0.000000e+00> : vector<8x40xf32>
    %182 = tpu.matmul %178, %181, %cst_56 {dimension_numbers = #tpu.dot_dimension_numbers<[1], [1], [0], [0], [0, 0, 1, 0], [], []>} : vector<8x8xf32>, vector<40x8xf32>, vector<8x40xf32> -> vector<8x40xf32>
    %183 = vector.extract_strided_slice %182 {offsets = [0, 0], sizes = [8, 32], strides = [1, 1]} : vector<8x40xf32> to vector<8x32xf32>
    %184 = vector.extract_strided_slice %182 {offsets = [0, 32], sizes = [8, 8], strides = [1, 1]} : vector<8x40xf32> to vector<8x8xf32>
    %185 = vector.extract_strided_slice %17 {offsets = [0, 0], sizes = [32, 8], strides = [1, 1]} : vector<32x32xf32> to vector<32x8xf32>
    %cst_57 = arith.constant dense<0.000000e+00> : vector<8x32xf32>
    %186 = tpu.matmul %179, %185, %cst_57 {dimension_numbers = #tpu.dot_dimension_numbers<[1], [1], [0], [0], [0, 0, 1, 0], [], []>} : vector<8x8xf32>, vector<32x8xf32>, vector<8x32xf32> -> vector<8x32xf32>
    %187 = vector.shape_cast %183 : vector<8x32xf32> to vector<8x1x32xf32>
    %188 = vector.shape_cast %186 : vector<8x32xf32> to vector<1x8x32xf32>
    %189 = vector.broadcast %187 : vector<8x1x32xf32> to vector<8x8x32xf32>
    %190 = vector.broadcast %188 : vector<1x8x32xf32> to vector<8x8x32xf32>
    %191 = arith.addf %189, %190 : vector<8x8x32xf32>
    %cst_58 = arith.constant 0.000000e+00 : f32
    %192 = vector.broadcast %cst_58 : f32 to vector<8x8x32xf32>
    %193 = arith.select %29, %191, %192 : vector<8x8x32xi1>, vector<8x8x32xf32>
    %cst_59 = arith.constant dense<0.000000e+00> : vector<8x8xf32>
    %194 = vector.multi_reduction <add>, %193, %cst_59 [2] : vector<8x8x32xf32> to vector<8x8xf32>
    %195 = arith.addf %184, %194 : vector<8x8xf32>
    %cst_60 = arith.constant -3.40282347E+38 : f32
    %196 = vector.broadcast %cst_60 : f32 to vector<8x8xf32>
    %197 = arith.select %175, %196, %195 : vector<8x8xi1>, vector<8x8xf32>
    %cst_61 = arith.constant dense<0xFF800000> : vector<8xf32>
    %198 = vector.multi_reduction <maximumf>, %197, %cst_61 [1] : vector<8x8xf32> to vector<8xf32>
    %199 = vector.shape_cast %198 : vector<8xf32> to vector<8x1xf32>
    %200 = vector.broadcast %199 : vector<8x1xf32> to vector<8x8xf32>
    %201 = arith.subf %197, %200 : vector<8x8xf32>
    %202 = math.exp %201 : vector<8x8xf32>
    %cst_62 = arith.constant dense<0.000000e+00> : vector<8xf32>
    %203 = vector.multi_reduction <add>, %202, %cst_62 [1] : vector<8x8xf32> to vector<8xf32>
    %204 = vector.shape_cast %203 : vector<8xf32> to vector<8x1xf32>
    %205 = tpu.reciprocal %204 {approx = true} : vector<8x1xf32> -> vector<8x1xf32>
    %206 = vector.broadcast %205 : vector<8x1xf32> to vector<8x8xf32>
    %207 = arith.mulf %202, %206 : vector<8x8xf32>
    %cst_63 = arith.constant 0.000000e+00 : f32
    %208 = vector.broadcast %cst_63 : f32 to vector<8x8xf32>
    %209 = arith.select %175, %208, %207 : vector<8x8xi1>, vector<8x8xf32>
    %cst_64 = arith.constant dense<0.000000e+00> : vector<8x8xf32>
    %210 = tpu.matmul %209, %180, %cst_64 {dimension_numbers = #tpu.dot_dimension_numbers<[1], [0], [0], [1], [0, 0, 1, 1], [], []>} : vector<8x8xf32>, vector<8x8xf32>, vector<8x8xf32> -> vector<8x8xf32>
    %211 = vector.extract_strided_slice %12 {offsets = [8, 8], sizes = [8, 8], strides = [1, 1]} : vector<16x32xf32> to vector<8x8xf32>
    %212 = vector.extract_strided_slice %13 {offsets = [8, 8], sizes = [8, 8], strides = [1, 1]} : vector<16x32xf32> to vector<8x8xf32>
    %213 = vector.extract_strided_slice %14 {offsets = [8, 8], sizes = [8, 8], strides = [1, 1]} : vector<16x32xf32> to vector<8x8xf32>
    %214 = vector.extract_strided_slice %177 {offsets = [0, 8], sizes = [40, 8], strides = [1, 1]} : vector<40x32xf32> to vector<40x8xf32>
    %cst_65 = arith.constant dense<0.000000e+00> : vector<8x40xf32>
    %215 = tpu.matmul %211, %214, %cst_65 {dimension_numbers = #tpu.dot_dimension_numbers<[1], [1], [0], [0], [0, 0, 1, 0], [], []>} : vector<8x8xf32>, vector<40x8xf32>, vector<8x40xf32> -> vector<8x40xf32>
    %216 = vector.extract_strided_slice %215 {offsets = [0, 0], sizes = [8, 32], strides = [1, 1]} : vector<8x40xf32> to vector<8x32xf32>
    %217 = vector.extract_strided_slice %215 {offsets = [0, 32], sizes = [8, 8], strides = [1, 1]} : vector<8x40xf32> to vector<8x8xf32>
    %218 = vector.extract_strided_slice %17 {offsets = [0, 8], sizes = [32, 8], strides = [1, 1]} : vector<32x32xf32> to vector<32x8xf32>
    %cst_66 = arith.constant dense<0.000000e+00> : vector<8x32xf32>
    %219 = tpu.matmul %212, %218, %cst_66 {dimension_numbers = #tpu.dot_dimension_numbers<[1], [1], [0], [0], [0, 0, 1, 0], [], []>} : vector<8x8xf32>, vector<32x8xf32>, vector<8x32xf32> -> vector<8x32xf32>
    %220 = vector.shape_cast %216 : vector<8x32xf32> to vector<8x1x32xf32>
    %221 = vector.shape_cast %219 : vector<8x32xf32> to vector<1x8x32xf32>
    %222 = vector.broadcast %220 : vector<8x1x32xf32> to vector<8x8x32xf32>
    %223 = vector.broadcast %221 : vector<1x8x32xf32> to vector<8x8x32xf32>
    %224 = arith.addf %222, %223 : vector<8x8x32xf32>
    %cst_67 = arith.constant 0.000000e+00 : f32
    %225 = vector.broadcast %cst_67 : f32 to vector<8x8x32xf32>
    %226 = arith.select %29, %224, %225 : vector<8x8x32xi1>, vector<8x8x32xf32>
    %cst_68 = arith.constant dense<0.000000e+00> : vector<8x8xf32>
    %227 = vector.multi_reduction <add>, %226, %cst_68 [2] : vector<8x8x32xf32> to vector<8x8xf32>
    %228 = arith.addf %217, %227 : vector<8x8xf32>
    %cst_69 = arith.constant -3.40282347E+38 : f32
    %229 = vector.broadcast %cst_69 : f32 to vector<8x8xf32>
    %230 = arith.select %175, %229, %228 : vector<8x8xi1>, vector<8x8xf32>
    %cst_70 = arith.constant dense<0xFF800000> : vector<8xf32>
    %231 = vector.multi_reduction <maximumf>, %230, %cst_70 [1] : vector<8x8xf32> to vector<8xf32>
    %232 = vector.shape_cast %231 : vector<8xf32> to vector<8x1xf32>
    %233 = vector.broadcast %232 : vector<8x1xf32> to vector<8x8xf32>
    %234 = arith.subf %230, %233 : vector<8x8xf32>
    %235 = math.exp %234 : vector<8x8xf32>
    %cst_71 = arith.constant dense<0.000000e+00> : vector<8xf32>
    %236 = vector.multi_reduction <add>, %235, %cst_71 [1] : vector<8x8xf32> to vector<8xf32>
    %237 = vector.shape_cast %236 : vector<8xf32> to vector<8x1xf32>
    %238 = tpu.reciprocal %237 {approx = true} : vector<8x1xf32> -> vector<8x1xf32>
    %239 = vector.broadcast %238 : vector<8x1xf32> to vector<8x8xf32>
    %240 = arith.mulf %235, %239 : vector<8x8xf32>
    %cst_72 = arith.constant 0.000000e+00 : f32
    %241 = vector.broadcast %cst_72 : f32 to vector<8x8xf32>
    %242 = arith.select %175, %241, %240 : vector<8x8xi1>, vector<8x8xf32>
    %cst_73 = arith.constant dense<0.000000e+00> : vector<8x8xf32>
    %243 = tpu.matmul %242, %213, %cst_73 {dimension_numbers = #tpu.dot_dimension_numbers<[1], [0], [0], [1], [0, 0, 1, 1], [], []>} : vector<8x8xf32>, vector<8x8xf32>, vector<8x8xf32> -> vector<8x8xf32>
    %244 = vector.extract_strided_slice %12 {offsets = [8, 16], sizes = [8, 8], strides = [1, 1]} : vector<16x32xf32> to vector<8x8xf32>
    %245 = vector.extract_strided_slice %13 {offsets = [8, 16], sizes = [8, 8], strides = [1, 1]} : vector<16x32xf32> to vector<8x8xf32>
    %246 = vector.extract_strided_slice %14 {offsets = [8, 16], sizes = [8, 8], strides = [1, 1]} : vector<16x32xf32> to vector<8x8xf32>
    %247 = vector.extract_strided_slice %177 {offsets = [0, 16], sizes = [40, 8], strides = [1, 1]} : vector<40x32xf32> to vector<40x8xf32>
    %cst_74 = arith.constant dense<0.000000e+00> : vector<8x40xf32>
    %248 = tpu.matmul %244, %247, %cst_74 {dimension_numbers = #tpu.dot_dimension_numbers<[1], [1], [0], [0], [0, 0, 1, 0], [], []>} : vector<8x8xf32>, vector<40x8xf32>, vector<8x40xf32> -> vector<8x40xf32>
    %249 = vector.extract_strided_slice %248 {offsets = [0, 0], sizes = [8, 32], strides = [1, 1]} : vector<8x40xf32> to vector<8x32xf32>
    %250 = vector.extract_strided_slice %248 {offsets = [0, 32], sizes = [8, 8], strides = [1, 1]} : vector<8x40xf32> to vector<8x8xf32>
    %251 = vector.extract_strided_slice %17 {offsets = [0, 16], sizes = [32, 8], strides = [1, 1]} : vector<32x32xf32> to vector<32x8xf32>
    %cst_75 = arith.constant dense<0.000000e+00> : vector<8x32xf32>
    %252 = tpu.matmul %245, %251, %cst_75 {dimension_numbers = #tpu.dot_dimension_numbers<[1], [1], [0], [0], [0, 0, 1, 0], [], []>} : vector<8x8xf32>, vector<32x8xf32>, vector<8x32xf32> -> vector<8x32xf32>
    %253 = vector.shape_cast %249 : vector<8x32xf32> to vector<8x1x32xf32>
    %254 = vector.shape_cast %252 : vector<8x32xf32> to vector<1x8x32xf32>
    %255 = vector.broadcast %253 : vector<8x1x32xf32> to vector<8x8x32xf32>
    %256 = vector.broadcast %254 : vector<1x8x32xf32> to vector<8x8x32xf32>
    %257 = arith.addf %255, %256 : vector<8x8x32xf32>
    %cst_76 = arith.constant 0.000000e+00 : f32
    %258 = vector.broadcast %cst_76 : f32 to vector<8x8x32xf32>
    %259 = arith.select %29, %257, %258 : vector<8x8x32xi1>, vector<8x8x32xf32>
    %cst_77 = arith.constant dense<0.000000e+00> : vector<8x8xf32>
    %260 = vector.multi_reduction <add>, %259, %cst_77 [2] : vector<8x8x32xf32> to vector<8x8xf32>
    %261 = arith.addf %250, %260 : vector<8x8xf32>
    %cst_78 = arith.constant -3.40282347E+38 : f32
    %262 = vector.broadcast %cst_78 : f32 to vector<8x8xf32>
    %263 = arith.select %175, %262, %261 : vector<8x8xi1>, vector<8x8xf32>
    %cst_79 = arith.constant dense<0xFF800000> : vector<8xf32>
    %264 = vector.multi_reduction <maximumf>, %263, %cst_79 [1] : vector<8x8xf32> to vector<8xf32>
    %265 = vector.shape_cast %264 : vector<8xf32> to vector<8x1xf32>
    %266 = vector.broadcast %265 : vector<8x1xf32> to vector<8x8xf32>
    %267 = arith.subf %263, %266 : vector<8x8xf32>
    %268 = math.exp %267 : vector<8x8xf32>
    %cst_80 = arith.constant dense<0.000000e+00> : vector<8xf32>
    %269 = vector.multi_reduction <add>, %268, %cst_80 [1] : vector<8x8xf32> to vector<8xf32>
    %270 = vector.shape_cast %269 : vector<8xf32> to vector<8x1xf32>
    %271 = tpu.reciprocal %270 {approx = true} : vector<8x1xf32> -> vector<8x1xf32>
    %272 = vector.broadcast %271 : vector<8x1xf32> to vector<8x8xf32>
    %273 = arith.mulf %268, %272 : vector<8x8xf32>
    %cst_81 = arith.constant 0.000000e+00 : f32
    %274 = vector.broadcast %cst_81 : f32 to vector<8x8xf32>
    %275 = arith.select %175, %274, %273 : vector<8x8xi1>, vector<8x8xf32>
    %cst_82 = arith.constant dense<0.000000e+00> : vector<8x8xf32>
    %276 = tpu.matmul %275, %246, %cst_82 {dimension_numbers = #tpu.dot_dimension_numbers<[1], [0], [0], [1], [0, 0, 1, 1], [], []>} : vector<8x8xf32>, vector<8x8xf32>, vector<8x8xf32> -> vector<8x8xf32>
    %277 = vector.extract_strided_slice %12 {offsets = [8, 24], sizes = [8, 8], strides = [1, 1]} : vector<16x32xf32> to vector<8x8xf32>
    %278 = vector.extract_strided_slice %13 {offsets = [8, 24], sizes = [8, 8], strides = [1, 1]} : vector<16x32xf32> to vector<8x8xf32>
    %279 = vector.extract_strided_slice %14 {offsets = [8, 24], sizes = [8, 8], strides = [1, 1]} : vector<16x32xf32> to vector<8x8xf32>
    %280 = vector.extract_strided_slice %177 {offsets = [0, 24], sizes = [40, 8], strides = [1, 1]} : vector<40x32xf32> to vector<40x8xf32>
    %cst_83 = arith.constant dense<0.000000e+00> : vector<8x40xf32>
    %281 = tpu.matmul %277, %280, %cst_83 {dimension_numbers = #tpu.dot_dimension_numbers<[1], [1], [0], [0], [0, 0, 1, 0], [], []>} : vector<8x8xf32>, vector<40x8xf32>, vector<8x40xf32> -> vector<8x40xf32>
    %282 = vector.extract_strided_slice %281 {offsets = [0, 0], sizes = [8, 32], strides = [1, 1]} : vector<8x40xf32> to vector<8x32xf32>
    %283 = vector.extract_strided_slice %281 {offsets = [0, 32], sizes = [8, 8], strides = [1, 1]} : vector<8x40xf32> to vector<8x8xf32>
    %284 = vector.extract_strided_slice %17 {offsets = [0, 24], sizes = [32, 8], strides = [1, 1]} : vector<32x32xf32> to vector<32x8xf32>
    %cst_84 = arith.constant dense<0.000000e+00> : vector<8x32xf32>
    %285 = tpu.matmul %278, %284, %cst_84 {dimension_numbers = #tpu.dot_dimension_numbers<[1], [1], [0], [0], [0, 0, 1, 0], [], []>} : vector<8x8xf32>, vector<32x8xf32>, vector<8x32xf32> -> vector<8x32xf32>
    %286 = vector.shape_cast %282 : vector<8x32xf32> to vector<8x1x32xf32>
    %287 = vector.shape_cast %285 : vector<8x32xf32> to vector<1x8x32xf32>
    %288 = vector.broadcast %286 : vector<8x1x32xf32> to vector<8x8x32xf32>
    %289 = vector.broadcast %287 : vector<1x8x32xf32> to vector<8x8x32xf32>
    %290 = arith.addf %288, %289 : vector<8x8x32xf32>
    %cst_85 = arith.constant 0.000000e+00 : f32
    %291 = vector.broadcast %cst_85 : f32 to vector<8x8x32xf32>
    %292 = arith.select %29, %290, %291 : vector<8x8x32xi1>, vector<8x8x32xf32>
    %cst_86 = arith.constant dense<0.000000e+00> : vector<8x8xf32>
    %293 = vector.multi_reduction <add>, %292, %cst_86 [2] : vector<8x8x32xf32> to vector<8x8xf32>
    %294 = arith.addf %283, %293 : vector<8x8xf32>
    %cst_87 = arith.constant -3.40282347E+38 : f32
    %295 = vector.broadcast %cst_87 : f32 to vector<8x8xf32>
    %296 = arith.select %175, %295, %294 : vector<8x8xi1>, vector<8x8xf32>
    %cst_88 = arith.constant dense<0xFF800000> : vector<8xf32>
    %297 = vector.multi_reduction <maximumf>, %296, %cst_88 [1] : vector<8x8xf32> to vector<8xf32>
    %298 = vector.shape_cast %297 : vector<8xf32> to vector<8x1xf32>
    %299 = vector.broadcast %298 : vector<8x1xf32> to vector<8x8xf32>
    %300 = arith.subf %296, %299 : vector<8x8xf32>
    %301 = math.exp %300 : vector<8x8xf32>
    %cst_89 = arith.constant dense<0.000000e+00> : vector<8xf32>
    %302 = vector.multi_reduction <add>, %301, %cst_89 [1] : vector<8x8xf32> to vector<8xf32>
    %303 = vector.shape_cast %302 : vector<8xf32> to vector<8x1xf32>
    %304 = tpu.reciprocal %303 {approx = true} : vector<8x1xf32> -> vector<8x1xf32>
    %305 = vector.broadcast %304 : vector<8x1xf32> to vector<8x8xf32>
    %306 = arith.mulf %301, %305 : vector<8x8xf32>
    %cst_90 = arith.constant 0.000000e+00 : f32
    %307 = vector.broadcast %cst_90 : f32 to vector<8x8xf32>
    %308 = arith.select %175, %307, %306 : vector<8x8xi1>, vector<8x8xf32>
    %cst_91 = arith.constant dense<0.000000e+00> : vector<8x8xf32>
    %309 = tpu.matmul %308, %279, %cst_91 {dimension_numbers = #tpu.dot_dimension_numbers<[1], [0], [0], [1], [0, 0, 1, 1], [], []>} : vector<8x8xf32>, vector<8x8xf32>, vector<8x8xf32> -> vector<8x8xf32>
    %310 = tpu.concatenate %210, %243, %276, %309 in 1 : vector<8x8xf32>, vector<8x8xf32>, vector<8x8xf32>, vector<8x8xf32> -> vector<8x32xf32>
    %c1_92 = arith.constant 1 : index
    %c0_93 = arith.constant 0 : index
    %c0_94 = arith.constant 0 : index
    %311 = vector.load %arg6[%c1_92, %c0_93, %c0_94] : memref<2x8x32xf32, #tpu.memory_space<vmem>>, vector<1x8x32xf32>
    %312 = vector.shape_cast %311 : vector<1x8x32xf32> to vector<8x32xf32>
    %313 = vector.shape_cast %310 : vector<8x32xf32> to vector<1x8x32xf32>
    tpu.vector_store %arg6[%c1_92, %c0_93, %c0_94], %313 {strides = array<i32>} : memref<2x8x32xf32, #tpu.memory_space<vmem>>, vector<1x8x32xf32>,
    return
  }
  func.func @transform_0(%arg0: i32) -> (i32, i32) {
    %c0_i32 = arith.constant 0 : i32
    %c0_i32_0 = arith.constant 0 : i32
    %c0_i32_1 = arith.constant 0 : i32
    return %c0_i32, %c0_i32_0 : i32, i32
  }
  func.func @transform_1(%arg0: i32) -> (i32, i32) {
    %c0_i32 = arith.constant 0 : i32
    %c0_i32_0 = arith.constant 0 : i32
    %c0_i32_1 = arith.constant 0 : i32
    return %c0_i32, %c0_i32_0 : i32, i32
  }
  func.func @transform_2(%arg0: i32) -> (i32, i32) {
    %c0_i32 = arith.constant 0 : i32
    %c0_i32_0 = arith.constant 0 : i32
    %c0_i32_1 = arith.constant 0 : i32
    return %c0_i32, %c0_i32_0 : i32, i32
  }
  func.func @transform_3(%arg0: i32) -> (i32, i32) {
    %c0_i32 = arith.constant 0 : i32
    %c0_i32_0 = arith.constant 0 : i32
    %c0_i32_1 = arith.constant 0 : i32
    return %c0_i32, %c0_i32_0 : i32, i32
  }
  func.func @transform_4(%arg0: i32) -> (i32, i32, i32) {
    %c0_i32 = arith.constant 0 : i32
    %c0_i32_0 = arith.constant 0 : i32
    %c0_i32_1 = arith.constant 0 : i32
    %c0_i32_2 = arith.constant 0 : i32
    return %c0_i32, %c0_i32_0, %c0_i32_1 : i32, i32, i32
  }
  func.func @transform_5(%arg0: i32) -> (i32, i32, i32) {
    %c0_i32 = arith.constant 0 : i32
    %c0_i32_0 = arith.constant 0 : i32
    %c0_i32_1 = arith.constant 0 : i32
    %c0_i32_2 = arith.constant 0 : i32
    return %c0_i32, %c0_i32_0, %c0_i32_1 : i32, i32, i32
  }
}

</mosaic_0001>

<llo_original>
// kernel: disentangled_self_attention.1
$region0: #{disentangled_self_attention.1}
  #allocation0 [shape = 'u32[]', space=smem, size = 0x4, offset = 0x4, fixed_abs, tag = 'smem constant byte address 0x4 - core index']
  #allocation1 [shape = 'u32[144,128]{1,0:T(1,128)}', space=vmem, size = 0x12000, scoped, tag = 'internal scratch']
  %s0 = inlined_call_operand.hbm [shape: f32[16,32], index: 0, kind: input, shape index: {}]
  %s1 = inlined_call_operand.hbm [shape: f32[32,96], index: 1, kind: input, shape index: {}]
  %s2 = inlined_call_operand.vmem [shape: f32[1,96], index: 2, kind: input, shape index: {}]
  %s3 = inlined_call_operand.hbm [shape: f32[32,32], index: 3, kind: input, shape index: {}]
  %s4 = inlined_call_operand.hbm [shape: f32[2,8,8], index: 4, kind: input, shape index: {}]
  %s5 = inlined_call_operand.hbm [shape: f32[2,8,32], index: 5, kind: output, shape index: {}]
  %s6 = sld [smem:[#allocation0]]
  $region46: #{disentangled_self_attention.1} parent=0
    _
  %s8 = ssub.s32 1, %s6
  %s9 = scalar_select 0, %s8, %s6
  $region1: #{disentangled_self_attention.1} parent=0
    #allocation2 [shape = 'u8[8192]{0}', space=vmem, size = 0x2000, scoped, tag = 'input window, operand 0, single buffered']
    #allocation3 [shape = 's32[1]{0}', space=sflag, size = 0x4, scoped, tag = 'scoped memory for disentangled_self_attention.1']
    #allocation4 [shape = 's32[1]{0}', space=sflag, size = 0x4, scoped, tag = 'scoped memory for disentangled_self_attention.1']
    #allocation5 [shape = 'u8[16384]{0}', space=vmem, size = 0x4000, scoped, tag = 'input window, operand 1, single buffered']
    #allocation6 [shape = 's32[1]{0}', space=sflag, size = 0x4, scoped, tag = 'scoped memory for disentangled_self_attention.1']
    #allocation7 [shape = 'u8[16384]{0}', space=vmem, size = 0x4000, scoped, tag = 'input window, operand 3, single buffered']
    #allocation8 [shape = 'u8[8192]{0}', space=vmem, size = 0x2000, scoped, tag = 'input window, operand 4, single buffered']
    #allocation9 [shape = 's32[1]{0}', space=sflag, size = 0x4, scoped, tag = 'scoped memory for disentangled_self_attention.1']
    #allocation10 [shape = 'u8[8192]{0}', space=vmem, size = 0x2000, scoped, tag = 'output window, operand 0, single buffered']
    %10 = vsyncpa [#allocation3], 0
    %11 = vsyncpa [#allocation6], 0
    %12 = vsyncpa [#allocation9], 0
    %13 = vsyncpa [#allocation4], 0
    // Predicated region
    $region2: #{disentangled_self_attention.1} parent=1 // pred_check
      _
    $region3: #{disentangled_self_attention.1} parent=1 // pred_check_branch
      %15 = sbr.rel (0) target = $region5
    $region4: #{disentangled_self_attention.1} parent=1 // pred_region
      %s17 = ssub.s32 256, 256
      %18 = vsyncadd [#allocation3], %s17
      %s19 = sshll.u32 [#allocation2], 4
      %s20 = int_to_ptr.vmem [resolvable:$true] %s19
      %25 = dma.hbm_to_vmem [thread:$0]  %s0, 256, %s20, [#allocation3], 128, 128, 8
    $region5: #{disentangled_self_attention.1} parent=1 // pred_fallthru
      _
    // Predicated region
    $region6: #{disentangled_self_attention.1} parent=1 // pred_check
      _
    $region7: #{disentangled_self_attention.1} parent=1 // pred_check_branch
      %27 = sbr.rel (0) target = $region9
    $region8: #{disentangled_self_attention.1} parent=1 // pred_region
      %s29 = ssub.s32 512, 512
      %30 = vsyncadd [#allocation6], %s29
      %s31 = sshll.u32 [#allocation5], 4
      %s32 = int_to_ptr.vmem [resolvable:$true] %s31
      %37 = dma.hbm_to_vmem [thread:$0]  %s1, 512, %s32, [#allocation6], 128, 128, 8
    $region9: #{disentangled_self_attention.1} parent=1 // pred_fallthru
      _
    // Predicated region
    $region10: #{disentangled_self_attention.1} parent=1 // pred_check
      _
    $region11: #{disentangled_self_attention.1} parent=1 // pred_check_branch
      %39 = sbr.rel (0) target = $region13
    $region12: #{disentangled_self_attention.1} parent=1 // pred_region
      _
    $region13: #{disentangled_self_attention.1} parent=1 // pred_fallthru
      _
    // Predicated region
    $region14: #{disentangled_self_attention.1} parent=1 // pred_check
      _
    $region15: #{disentangled_self_attention.1} parent=1 // pred_check_branch
      %41 = sbr.rel (0) target = $region17
    $region16: #{disentangled_self_attention.1} parent=1 // pred_region
      %s43 = ssub.s32 512, 512
      %44 = vsyncadd [#allocation6], %s43
      %s45 = sshll.u32 [#allocation7], 4
      %s46 = int_to_ptr.vmem [resolvable:$true] %s45
      %51 = dma.hbm_to_vmem [thread:$0]  %s3, 512, %s46, [#allocation6], 128, 128, 8
    $region17: #{disentangled_self_attention.1} parent=1 // pred_fallthru
      _
    // Predicated region
    $region18: #{disentangled_self_attention.1} parent=1 // pred_check
      _
    $region19: #{disentangled_self_attention.1} parent=1 // pred_check_branch
      %53 = sbr.rel (0) target = $region21
    $region20: #{disentangled_self_attention.1} parent=1 // pred_region
      %s55 = ssub.s32 256, 256
      %56 = vsyncadd [#allocation9], %s55
      %s57 = sshll.u32 [#allocation8], 4
      %s58 = int_to_ptr.vmem [resolvable:$true] %s57
      %63 = dma.hbm_to_vmem [thread:$0]  %s4, 256, %s58, [#allocation9], 128, 128, 8
    $region21: #{disentangled_self_attention.1} parent=1 // pred_fallthru
      _
    // Predicated region
    $region22: #{disentangled_self_attention.1} parent=1 // pred_check
      _
    $region23: #{disentangled_self_attention.1} parent=1 // pred_check_branch
      %65 = sbr.rel (0) target = $region25
    $region24: #{disentangled_self_attention.1} parent=1 // pred_region
      %66 = dma.done [#allocation3], 256
    $region25: #{disentangled_self_attention.1} parent=1 // pred_fallthru
      _
    // Predicated region
    $region26: #{disentangled_self_attention.1} parent=1 // pred_check
      _
    $region27: #{disentangled_self_attention.1} parent=1 // pred_check_branch
      %68 = sbr.rel (0) target = $region29
    $region28: #{disentangled_self_attention.1} parent=1 // pred_region
      %69 = dma.done [#allocation6], 512
    $region29: #{disentangled_self_attention.1} parent=1 // pred_fallthru
      _
    // Predicated region
    $region30: #{disentangled_self_attention.1} parent=1 // pred_check
      _
    $region31: #{disentangled_self_attention.1} parent=1 // pred_check_branch
      %71 = sbr.rel (0) target = $region33
    $region32: #{disentangled_self_attention.1} parent=1 // pred_region
      %72 = dma.done [#allocation6], 512
    $region33: #{disentangled_self_attention.1} parent=1 // pred_fallthru
      _
    // Predicated region
    $region34: #{disentangled_self_attention.1} parent=1 // pred_check
      _
    $region35: #{disentangled_self_attention.1} parent=1 // pred_check_branch
      %74 = sbr.rel (0) target = $region37
    $region36: #{disentangled_self_attention.1} parent=1 // pred_region
      %75 = dma.done [#allocation9], 256
    $region37: #{disentangled_self_attention.1} parent=1 // pred_fallthru
      _
    %v76 = vld [vmem:[#allocation2] sm:$0xff]
    %v77 = vld [vmem:[#allocation2 + $0x8] sm:$0xff]
    %v78 = vld [vmem:[#allocation5] sm:$0xff]
    %v79 = vld [vmem:[#allocation5 + $0x8] sm:$0xff]
    %v80 = vld [vmem:[#allocation5 + $0x10] sm:$0xff]
    %v81 = vld [vmem:[#allocation5 + $0x18] sm:$0xff]
    %v82 = vld [vmem:[%s2] sm:$0x1]
    %v83 = vld [vmem:[#allocation7] sm:$0xff]
    %v84 = vld [vmem:[#allocation7 + $0x8] sm:$0xff]
    %v85 = vld [vmem:[#allocation7 + $0x10] sm:$0xff]
    %v86 = vld [vmem:[#allocation7 + $0x18] sm:$0xff]
    %v88 = vlaneseq
    %v89 = vshrl.u32 %v88, 7
    %v90 = vsub.s32 0, %v89
    %v91 = vrot.slane %v82, %v90
    %vm93 = vcmask 261120
    %v95 = vsel %vm93, %v76, 0
    %v98 = vsel %vm93, %v77, 0
    %100 = vmatprep.subr.mxu0 0.0
    %101 = vmatpush1.msra.mxu0 0.0
    %102 = vmatprep.subr.mxu0 0.0
    %103 = vmatpush1.msra.mxu0 0.0
    %104 = vmatprep.subr.mxu0 0.0
    %105 = vmatpush1.msra.mxu0 0.0
    %106 = vmatprep.subr.mxu0 0.0
    %107 = vmatpush1.msra.mxu0 0.0
    %108 = vmatprep.subr.mxu0 0.0
    %109 = vmatpush1.msra.mxu0 0.0
    %110 = vmatprep.subr.mxu0 0.0
    %111 = vmatpush1.msra.mxu0 0.0
    %112 = vmatprep.subr.mxu0 0.0
    %113 = vmatpush1.msra.mxu0 0.0
    %114 = vmatprep.subr.mxu0 0.0
    %115 = vmatpush1.msra.mxu0 0.0
    %116 = vmatprep.subr.mxu0 0.0
    %117 = vmatpush1.msra.mxu0 0.0
    %118 = vmatprep.subr.mxu0 0.0
    %119 = vmatpush1.msra.mxu0 0.0
    %120 = vmatprep.subr.mxu0 0.0
    %121 = vmatpush1.msra.mxu0 0.0
    %122 = vmatprep.subr.mxu0 0.0
    %123 = vmatpush1.msra.mxu0 0.0
    %124 = vmatprep.subr.mxu0 0.0
    %125 = vmatpush1.msra.mxu0 %v81
    %126 = vmatprep.subr.mxu0 0.0
    %127 = vmatpush1.msra.mxu0 %v80
    %128 = vmatprep.subr.mxu0 0.0
    %129 = vmatpush1.msra.mxu0 %v79
    %130 = vmatprep.subr.mxu0 0.0
    %131 = vmatpush1.msra.mxu0 %v78
    %132 = vmatprep.subr.mxu0 0.0
    %133 = vmatpush2.msra.mxu0 0.0
    %134 = vmatprep.subr.mxu0 0.0
    %135 = vmatpush2.msra.mxu0 0.0
    %136 = vmatprep.subr.mxu0 0.0
    %137 = vmatpush2.msra.mxu0 0.0
    %138 = vmatprep.subr.mxu0 0.0
    %139 = vmatpush2.msra.mxu0 0.0
    %140 = vmatprep.subr.mxu0 0.0
    %141 = vmatpush2.msra.mxu0 0.0
    %142 = vmatprep.subr.mxu0 0.0
    %143 = vmatpush2.msra.mxu0 0.0
    %144 = vmatprep.subr.mxu0 0.0
    %145 = vmatpush2.msra.mxu0 0.0
    %146 = vmatprep.subr.mxu0 0.0
    %147 = vmatpush2.msra.mxu0 0.0
    %148 = vmatprep.subr.mxu0 0.0
    %149 = vmatpush2.msra.mxu0 0.0
    %150 = vmatprep.subr.mxu0 0.0
    %151 = vmatpush2.msra.mxu0 0.0
    %152 = vmatprep.subr.mxu0 0.0
    %153 = vmatpush2.msra.mxu0 0.0
    %154 = vmatprep.subr.mxu0 0.0
    %155 = vmatpush2.msra.mxu0 0.0
    %156 = vmatprep.subr.mxu0 0.0
    %157 = vmatpush2.msra.mxu0 0.0
    %158 = vmatprep.subr.mxu0 0.0
    %159 = vmatpush2.msra.mxu0 0.0
    %160 = vmatprep.subr.mxu0 0.0
    %161 = vmatpush2.msra.mxu0 0.0
    %162 = vmatprep.subr.mxu0 0.0
    %163 = vmatpush2.msra.mxu0 0.0
    %164 = vmatprep.mubr.f32.mxu0 0.0
    %165 = vmatmul.mubr.f32.gmra.mxu0 %v95
    %v166 = vpop.f32.mrf.mxu0
    %v167 = vadd.f32 %v91, %v166
    %v168 = vpop.f32.mrf.mxu0
    %169 = vmatprep.mubr.f32.mxu0 0.0
    %170 = vmatmul.mubr.f32.gmra.mxu0 %v98
    %v171 = vpop.f32.mrf.mxu0
    %v172 = vadd.f32 %v91, %v171
    %v173 = vpop.f32.mrf.mxu0
    %174 = vdwg.mxu0
    %v176 = vsel %vm93, %v83, 0
    %v179 = vsel %vm93, %v84, 0
    %v182 = vsel %vm93, %v85, 0
    %v185 = vsel %vm93, %v86, 0
    %187 = vmatprep.subr.mxu0 0.0
    %188 = vmatpush1.msra.mxu0 0.0
    %189 = vmatprep.subr.mxu0 0.0
    %190 = vmatpush1.msra.mxu0 0.0
    %191 = vmatprep.subr.mxu0 0.0
    %192 = vmatpush1.msra.mxu0 0.0
    %193 = vmatprep.subr.mxu0 0.0
    %194 = vmatpush1.msra.mxu0 0.0
    %195 = vmatprep.subr.mxu0 0.0
    %196 = vmatpush1.msra.mxu0 0.0
    %197 = vmatprep.subr.mxu0 0.0
    %198 = vmatpush1.msra.mxu0 0.0
    %199 = vmatprep.subr.mxu0 0.0
    %200 = vmatpush1.msra.mxu0 0.0
    %201 = vmatprep.subr.mxu0 0.0
    %202 = vmatpush1.msra.mxu0 0.0
    %203 = vmatprep.subr.mxu0 0.0
    %204 = vmatpush1.msra.mxu0 0.0
    %205 = vmatprep.subr.mxu0 0.0
    %206 = vmatpush1.msra.mxu0 0.0
    %207 = vmatprep.subr.mxu0 0.0
    %208 = vmatpush1.msra.mxu0 0.0
    %209 = vmatprep.subr.mxu0 0.0
    %210 = vmatpush1.msra.mxu0 0.0
    %211 = vmatprep.subr.mxu0 0.0
    %212 = vmatpush1.msra.mxu0 %v81
    %213 = vmatprep.subr.mxu0 0.0
    %214 = vmatpush1.msra.mxu0 %v80
    %215 = vmatprep.subr.mxu0 0.0
    %216 = vmatpush1.msra.mxu0 %v79
    %217 = vmatprep.subr.mxu0 0.0
    %218 = vmatpush1.msra.mxu0 %v78
    %219 = vmatprep.subr.mxu0 0.0
    %220 = vmatpush2.msra.mxu0 0.0
    %221 = vmatprep.subr.mxu0 0.0
    %222 = vmatpush2.msra.mxu0 0.0
    %223 = vmatprep.subr.mxu0 0.0
    %224 = vmatpush2.msra.mxu0 0.0
    %225 = vmatprep.subr.mxu0 0.0
    %226 = vmatpush2.msra.mxu0 0.0
    %227 = vmatprep.subr.mxu0 0.0
    %228 = vmatpush2.msra.mxu0 0.0
    %229 = vmatprep.subr.mxu0 0.0
    %230 = vmatpush2.msra.mxu0 0.0
    %231 = vmatprep.subr.mxu0 0.0
    %232 = vmatpush2.msra.mxu0 0.0
    %233 = vmatprep.subr.mxu0 0.0
    %234 = vmatpush2.msra.mxu0 0.0
    %235 = vmatprep.subr.mxu0 0.0
    %236 = vmatpush2.msra.mxu0 0.0
    %237 = vmatprep.subr.mxu0 0.0
    %238 = vmatpush2.msra.mxu0 0.0
    %239 = vmatprep.subr.mxu0 0.0
    %240 = vmatpush2.msra.mxu0 0.0
    %241 = vmatprep.subr.mxu0 0.0
    %242 = vmatpush2.msra.mxu0 0.0
    %243 = vmatprep.subr.mxu0 0.0
    %244 = vmatpush2.msra.mxu0 0.0
    %245 = vmatprep.subr.mxu0 0.0
    %246 = vmatpush2.msra.mxu0 0.0
    %247 = vmatprep.subr.mxu0 0.0
    %248 = vmatpush2.msra.mxu0 0.0
    %249 = vmatprep.subr.mxu0 0.0
    %250 = vmatpush2.msra.mxu0 0.0
    %251 = vmatprep.mubr.f32.mxu0 0.0
    %252 = vmatmul.mubr.f32.gmra.mxu0 %v176
    %v253 = vpop.f32.mrf.mxu0
    %v254 = vadd.f32 %v91, %v253
    %v255 = vpop.f32.mrf.mxu0
    %256 = vmatprep.mubr.f32.mxu0 0.0
    %257 = vmatmul.mubr.f32.gmra.mxu0 %v179
    %v258 = vpop.f32.mrf.mxu0
    %v259 = vadd.f32 %v91, %v258
    %v260 = vpop.f32.mrf.mxu0
    %261 = vmatprep.mubr.f32.mxu0 0.0
    %262 = vmatmul.mubr.f32.gmra.mxu0 %v182
    %v263 = vpop.f32.mrf.mxu0
    %v264 = vadd.f32 %v91, %v263
    %v265 = vpop.f32.mrf.mxu0
    %266 = vmatprep.mubr.f32.mxu0 0.0
    %267 = vmatmul.mubr.f32.gmra.mxu0 %v185
    %v268 = vpop.f32.mrf.mxu0
    %v269 = vadd.f32 %v91, %v268
    %v270 = vpop.f32.mrf.mxu0
    %271 = vdwg.mxu0
    %v272 = vmul.f32 %v167, 0.11785113
    %v273 = vmul.f32 %v172, 0.11785113
    %v274 = vmul.f32 %v254, 0.35355338
    %v275 = vmul.f32 %v259, 0.35355338
    %v276 = vmul.f32 %v264, 0.35355338
    %v277 = vmul.f32 %v269, 0.35355338
    %v278 = vlaneseq
    %v279 = vshrl.u32 %v278, 7
    %v280 = vlaneseq
    %v281 = vand.u32 %v280, 127
    %v282 = vsub.s32 0, %v279
    %v283 = vsub.s32 1, %v279
    %v284 = vsub.s32 2, %v279
    %v285 = vsub.s32 3, %v279
    %v286 = vsub.s32 4, %v279
    %v287 = vsub.s32 5, %v279
    %v288 = vsub.s32 6, %v279
    %v289 = vsub.s32 7, %v279
    %v290 = vadd.s32 %v282, 16
    %v291 = vadd.s32 %v283, 16
    %v292 = vadd.s32 %v284, 16
    %v293 = vadd.s32 %v285, 16
    %v294 = vadd.s32 %v286, 16
    %v295 = vadd.s32 %v287, 16
    %v296 = vadd.s32 %v288, 16
    %v297 = vadd.s32 %v289, 16
    %vm298 = vcmp.gt.s32.totalorder %v290, 0
    %v299 = vsel %vm298, %v290, 0
    %vm300 = vcmp.gt.s32.totalorder %v291, 0
    %v301 = vsel %vm300, %v291, 0
    %vm302 = vcmp.gt.s32.totalorder %v292, 0
    %v303 = vsel %vm302, %v292, 0
    %vm304 = vcmp.gt.s32.totalorder %v293, 0
    %v305 = vsel %vm304, %v293, 0
    %vm306 = vcmp.gt.s32.totalorder %v294, 0
    %v307 = vsel %vm306, %v294, 0
    %vm308 = vcmp.gt.s32.totalorder %v295, 0
    %v309 = vsel %vm308, %v295, 0
    %vm310 = vcmp.gt.s32.totalorder %v296, 0
    %v311 = vsel %vm310, %v296, 0
    %vm312 = vcmp.gt.s32.totalorder %v297, 0
    %v313 = vsel %vm312, %v297, 0
    %vm314 = vcmp.lt.s32.totalorder %v299, 31
    %v315 = vsel %vm314, %v299, 31
    %vm316 = vcmp.lt.s32.totalorder %v301, 31
    %v317 = vsel %vm316, %v301, 31
    %vm318 = vcmp.lt.s32.totalorder %v303, 31
    %v319 = vsel %vm318, %v303, 31
    %vm320 = vcmp.lt.s32.totalorder %v305, 31
    %v321 = vsel %vm320, %v305, 31
    %vm322 = vcmp.lt.s32.totalorder %v307, 31
    %v323 = vsel %vm322, %v307, 31
    %vm324 = vcmp.lt.s32.totalorder %v309, 31
    %v325 = vsel %vm324, %v309, 31
    %vm326 = vcmp.lt.s32.totalorder %v311, 31
    %v327 = vsel %vm326, %v311, 31
    %vm328 = vcmp.lt.s32.totalorder %v313, 31
    %v329 = vsel %vm328, %v313, 31
    %vm330 = vcmp.eq.s32.totalorder %v281, %v315
    %vm331 = vcmp.eq.s32.totalorder %v281, %v317
    %vm332 = vcmp.eq.s32.totalorder %v281, %v319
    %vm333 = vcmp.eq.s32.totalorder %v281, %v321
    %vm334 = vcmp.eq.s32.totalorder %v281, %v323
    %vm335 = vcmp.eq.s32.totalorder %v281, %v325
    %vm336 = vcmp.eq.s32.totalorder %v281, %v327
    %vm337 = vcmp.eq.s32.totalorder %v281, %v329
    %v338 = vld [vmem:[#allocation8] sm:$0xff]
    %vm339 = vcmp.eq.f32.partialorder %v338, 0.0
    %345 = vrot.lane.b32.xlu0 %v254, 96
    %v346 = vpop.permute.xlu0 %345
    %347 = vrot.lane.b32.xlu0 %v259, 96
    %v348 = vpop.permute.xlu0 %347
    %349 = vrot.lane.b32.xlu0 %v264, 96
    %v350 = vpop.permute.xlu0 %349
    %351 = vrot.lane.b32.xlu0 %v269, 96
    %v352 = vpop.permute.xlu0 %351
    %353 = vrot.lane.b32.xlu0 %v167, 96
    %v354 = vpop.permute.xlu0 %353
    %vm355 = vcmask 64512
    %v357 = vsel %vm355, %v272, 0
    %v359 = vsel %vm355, %v346, 0
    %v361 = vsel %vm355, %v348, 0
    %v363 = vsel %vm355, %v350, 0
    %v365 = vsel %vm355, %v352, 0
    %v367 = vsel %vm355, %v354, 0
    %369 = vmatprep.subr.mxu0 0.0
    %370 = vmatpush1.xpose.msra.mxu0 0.0
    %371 = vmatprep.subr.mxu0 0.0
    %372 = vmatpush1.xpose.msra.mxu0 0.0
    %373 = vmatprep.subr.mxu0 0.0
    %374 = vmatpush1.xpose.msra.mxu0 0.0
    %375 = vmatprep.subr.mxu0 0.0
    %376 = vmatpush1.xpose.msra.mxu0 0.0
    %377 = vmatprep.subr.mxu0 0.0
    %378 = vmatpush1.xpose.msra.mxu0 0.0
    %379 = vmatprep.subr.mxu0 0.0
    %380 = vmatpush1.xpose.msra.mxu0 0.0
    %381 = vmatprep.subr.mxu0 0.0
    %382 = vmatpush1.xpose.msra.mxu0 0.0
    %383 = vmatprep.subr.mxu0 0.0
    %384 = vmatpush1.xpose.msra.mxu0 0.0
    %385 = vmatprep.subr.mxu0 0.0
    %386 = vmatpush1.xpose.msra.mxu0 0.0
    %387 = vmatprep.subr.mxu0 0.0
    %388 = vmatpush1.xpose.msra.mxu0 0.0
    %389 = vmatprep.subr.mxu0 0.0
    %390 = vmatpush1.xpose.msra.mxu0 0.0
    %391 = vmatprep.subr.mxu0 0.0
    %392 = vmatpush1.xpose.msra.mxu0 %v367
    %393 = vmatprep.subr.mxu0 0.0
    %394 = vmatpush1.xpose.msra.mxu0 %v365
    %395 = vmatprep.subr.mxu0 0.0
    %396 = vmatpush1.xpose.msra.mxu0 %v363
    %397 = vmatprep.subr.mxu0 0.0
    %398 = vmatpush1.xpose.msra.mxu0 %v361
    %399 = vmatprep.subr.mxu0 0.0
    %400 = vmatpush1.xpose.msra.mxu0 %v359
    %401 = vmatprep.subr.mxu0 0.0
    %402 = vmatpush2.xpose.msra.mxu0 0.0
    %403 = vmatprep.subr.mxu0 0.0
    %404 = vmatpush2.xpose.msra.mxu0 0.0
    %405 = vmatprep.subr.mxu0 0.0
    %406 = vmatpush2.xpose.msra.mxu0 0.0
    %407 = vmatprep.subr.mxu0 0.0
    %408 = vmatpush2.xpose.msra.mxu0 0.0
    %409 = vmatprep.subr.mxu0 0.0
    %410 = vmatpush2.xpose.msra.mxu0 0.0
    %411 = vmatprep.subr.mxu0 0.0
    %412 = vmatpush2.xpose.msra.mxu0 0.0
    %413 = vmatprep.subr.mxu0 0.0
    %414 = vmatpush2.xpose.msra.mxu0 0.0
    %415 = vmatprep.subr.mxu0 0.0
    %416 = vmatpush2.xpose.msra.mxu0 0.0
    %417 = vmatprep.subr.mxu0 0.0
    %418 = vmatpush2.xpose.msra.mxu0 0.0
    %419 = vmatprep.subr.mxu0 0.0
    %420 = vmatpush2.xpose.msra.mxu0 0.0
    %421 = vmatprep.subr.mxu0 0.0
    %422 = vmatpush2.xpose.msra.mxu0 0.0
    %423 = vmatprep.subr.mxu0 0.0
    %424 = vmatpush2.xpose.msra.mxu0 0.0
    %425 = vmatprep.subr.mxu0 0.0
    %426 = vmatpush2.xpose.msra.mxu0 0.0
    %427 = vmatprep.subr.mxu0 0.0
    %428 = vmatpush2.xpose.msra.mxu0 0.0
    %429 = vmatprep.subr.mxu0 0.0
    %430 = vmatpush2.xpose.msra.mxu0 0.0
    %431 = vmatprep.subr.mxu0 0.0
    %432 = vmatpush2.xpose.msra.mxu0 0.0
    %433 = vmatprep.mubr.f32.mxu0 0.0
    %434 = vmatmul.mubr.f32.gmra.mxu0 %v357
    %v435 = vpop.f32.mrf.mxu0
    %v436 = vadd.f32 0.0, %v435
    %v437 = vpop.f32.mrf.mxu0
    %438 = vdwg.mxu0
    %v440 = vsel %vm355, %v274, 0
    %v443 = vsel %vm355, %v275, 0
    %v446 = vsel %vm355, %v276, 0
    %v449 = vsel %vm355, %v277, 0
    %451 = vmatprep.subr.mxu0 0.0
    %452 = vmatpush1.xpose.msra.mxu0 0.0
    %453 = vmatprep.subr.mxu0 0.0
    %454 = vmatpush1.xpose.msra.mxu0 0.0
    %455 = vmatprep.subr.mxu0 0.0
    %456 = vmatpush1.xpose.msra.mxu0 0.0
    %457 = vmatprep.subr.mxu0 0.0
    %458 = vmatpush1.xpose.msra.mxu0 0.0
    %459 = vmatprep.subr.mxu0 0.0
    %460 = vmatpush1.xpose.msra.mxu0 0.0
    %461 = vmatprep.subr.mxu0 0.0
    %462 = vmatpush1.xpose.msra.mxu0 0.0
    %463 = vmatprep.subr.mxu0 0.0
    %464 = vmatpush1.xpose.msra.mxu0 0.0
    %465 = vmatprep.subr.mxu0 0.0
    %466 = vmatpush1.xpose.msra.mxu0 0.0
    %467 = vmatprep.subr.mxu0 0.0
    %468 = vmatpush1.xpose.msra.mxu0 0.0
    %469 = vmatprep.subr.mxu0 0.0
    %470 = vmatpush1.xpose.msra.mxu0 0.0
    %471 = vmatprep.subr.mxu0 0.0
    %472 = vmatpush1.xpose.msra.mxu0 0.0
    %473 = vmatprep.subr.mxu0 0.0
    %474 = vmatpush1.xpose.msra.mxu0 0.0
    %475 = vmatprep.subr.mxu0 0.0
    %476 = vmatpush1.xpose.msra.mxu0 %v449
    %477 = vmatprep.subr.mxu0 0.0
    %478 = vmatpush1.xpose.msra.mxu0 %v446
    %479 = vmatprep.subr.mxu0 0.0
    %480 = vmatpush1.xpose.msra.mxu0 %v443
    %481 = vmatprep.subr.mxu0 0.0
    %482 = vmatpush1.xpose.msra.mxu0 %v440
    %483 = vmatprep.subr.mxu0 0.0
    %484 = vmatpush2.xpose.msra.mxu0 0.0
    %485 = vmatprep.subr.mxu0 0.0
    %486 = vmatpush2.xpose.msra.mxu0 0.0
    %487 = vmatprep.subr.mxu0 0.0
    %488 = vmatpush2.xpose.msra.mxu0 0.0
    %489 = vmatprep.subr.mxu0 0.0
    %490 = vmatpush2.xpose.msra.mxu0 0.0
    %491 = vmatprep.subr.mxu0 0.0
    %492 = vmatpush2.xpose.msra.mxu0 0.0
    %493 = vmatprep.subr.mxu0 0.0
    %494 = vmatpush2.xpose.msra.mxu0 0.0
    %495 = vmatprep.subr.mxu0 0.0
    %496 = vmatpush2.xpose.msra.mxu0 0.0
    %497 = vmatprep.subr.mxu0 0.0
    %498 = vmatpush2.xpose.msra.mxu0 0.0
    %499 = vmatprep.subr.mxu0 0.0
    %500 = vmatpush2.xpose.msra.mxu0 0.0
    %501 = vmatprep.subr.mxu0 0.0
    %502 = vmatpush2.xpose.msra.mxu0 0.0
    %503 = vmatprep.subr.mxu0 0.0
    %504 = vmatpush2.xpose.msra.mxu0 0.0
    %505 = vmatprep.subr.mxu0 0.0
    %506 = vmatpush2.xpose.msra.mxu0 0.0
    %507 = vmatprep.subr.mxu0 0.0
    %508 = vmatpush2.xpose.msra.mxu0 0.0
    %509 = vmatprep.subr.mxu0 0.0
    %510 = vmatpush2.xpose.msra.mxu0 0.0
    %511 = vmatprep.subr.mxu0 0.0
    %512 = vmatpush2.xpose.msra.mxu0 0.0
    %513 = vmatprep.subr.mxu0 0.0
    %514 = vmatpush2.xpose.msra.mxu0 0.0
    %515 = vmatprep.mubr.f32.mxu0 0.0
    %516 = vmatmul.mubr.f32.gmra.mxu0 %v367
    %v517 = vpop.f32.mrf.mxu0
    %v518 = vadd.f32 0.0, %v517
    %v519 = vpop.f32.mrf.mxu0
    %520 = vdwg.mxu0
    %v522 = vcombine.high %v436, %v436
    %v524 = vunpack.c.l.s4 1966171168
    %v525 = vunpack.c.0.s8 %v524
    %v526 = vlaneseq
    %v527 = vshrl.u32 %v526, 7
    %v528 = vsub.s32 %v525, %v527
    %v529 = vrot.slane %v436, %v528
    %v531 = vunpack.c.l.s4 1966171168
    %v532 = vunpack.c.0.s8 %v531
    %v533 = vlaneseq
    %v534 = vshrl.u32 %v533, 7
    %v535 = vsub.s32 %v532, %v534
    %v536 = vrot.slane %v522, %v535
    %v537 = vcombine.high %v529, %v529
    %v538 = vcombine.high %v536, %v536
    %v540 = vunpack.c.l.s4 1966171168
    %v541 = vunpack.c.0.s8 %v540
    %v542 = vlaneseq
    %v543 = vshrl.u32 %v542, 7
    %v544 = vsub.s32 %v541, %v543
    %v545 = vrot.slane %v529, %v544
    %v547 = vunpack.c.l.s4 1966171168
    %v548 = vunpack.c.0.s8 %v547
    %v549 = vlaneseq
    %v550 = vshrl.u32 %v549, 7
    %v551 = vsub.s32 %v548, %v550
    %v552 = vrot.slane %v536, %v551
    %v554 = vunpack.c.l.s4 1966171168
    %v555 = vunpack.c.0.s8 %v554
    %v556 = vlaneseq
    %v557 = vshrl.u32 %v556, 7
    %v558 = vsub.s32 %v555, %v557
    %v559 = vrot.slane %v537, %v558
    %v561 = vunpack.c.l.s4 1966171168
    %v562 = vunpack.c.0.s8 %v561
    %v563 = vlaneseq
    %v564 = vshrl.u32 %v563, 7
    %v565 = vsub.s32 %v562, %v564
    %v566 = vrot.slane %v538, %v565
    %v567 = vcombine.high %v545, %v545
    %v568 = vcombine.high %v552, %v552
    %v569 = vcombine.high %v559, %v559
    %v570 = vcombine.high %v566, %v566
    %v571 = vlaneseq
    %v572 = vshrl.u32 %v571, 7
    %v573 = vsub.s32 0, %v572
    %v574 = vrot.slane %v545, %v573
    %v575 = vlaneseq
    %v576 = vshrl.u32 %v575, 7
    %v577 = vsub.s32 0, %v576
    %v578 = vrot.slane %v559, %v577
    %v579 = vlaneseq
    %v580 = vshrl.u32 %v579, 7
    %v581 = vsub.s32 0, %v580
    %v582 = vrot.slane %v567, %v581
    %v583 = vlaneseq
    %v584 = vshrl.u32 %v583, 7
    %v585 = vsub.s32 0, %v584
    %v586 = vrot.slane %v569, %v585
    %v587 = vlaneseq
    %v588 = vshrl.u32 %v587, 7
    %v589 = vsub.s32 0, %v588
    %v590 = vrot.slane %v552, %v589
    %v591 = vlaneseq
    %v592 = vshrl.u32 %v591, 7
    %v593 = vsub.s32 0, %v592
    %v594 = vrot.slane %v566, %v593
    %v595 = vlaneseq
    %v596 = vshrl.u32 %v595, 7
    %v597 = vsub.s32 0, %v596
    %v598 = vrot.slane %v568, %v597
    %v599 = vlaneseq
    %v600 = vshrl.u32 %v599, 7
    %v601 = vsub.s32 0, %v600
    %v602 = vrot.slane %v570, %v601
    %v611 = vadd.f32 %v574, %v518
    %v612 = vadd.f32 %v578, %v518
    %v613 = vadd.f32 %v582, %v518
    %v614 = vadd.f32 %v586, %v518
    %v615 = vadd.f32 %v590, %v518
    %v616 = vadd.f32 %v594, %v518
    %v617 = vadd.f32 %v598, %v518
    %v618 = vadd.f32 %v602, %v518
    %v619 = vsel %vm330, %v611, 0.0
    %v620 = vsel %vm331, %v612, 0.0
    %v621 = vsel %vm332, %v613, 0.0
    %v622 = vsel %vm333, %v614, 0.0
    %v623 = vsel %vm334, %v615, 0.0
    %v624 = vsel %vm335, %v616, 0.0
    %v625 = vsel %vm336, %v617, 0.0
    %v626 = vsel %vm337, %v618, 0.0
    %v627 = vsel %vm93, %v619, 0.0
    %628 = vadd.xlane.f32.xlu0 %v627
    %v629 = vpop.xlane.xlu0 %628
    %v630 = vsel %vm93, %v620, 0.0
    %631 = vadd.xlane.f32.xlu0 %v630
    %v632 = vpop.xlane.xlu0 %631
    %v633 = vsel %vm93, %v621, 0.0
    %634 = vadd.xlane.f32.xlu0 %v633
    %v635 = vpop.xlane.xlu0 %634
    %v636 = vsel %vm93, %v622, 0.0
    %637 = vadd.xlane.f32.xlu0 %v636
    %v638 = vpop.xlane.xlu0 %637
    %v639 = vsel %vm93, %v623, 0.0
    %640 = vadd.xlane.f32.xlu0 %v639
    %v641 = vpop.xlane.xlu0 %640
    %v642 = vsel %vm93, %v624, 0.0
    %643 = vadd.xlane.f32.xlu0 %v642
    %v644 = vpop.xlane.xlu0 %643
    %v645 = vsel %vm93, %v625, 0.0
    %646 = vadd.xlane.f32.xlu0 %v645
    %v647 = vpop.xlane.xlu0 %646
    %v648 = vsel %vm93, %v626, 0.0
    %649 = vadd.xlane.f32.xlu0 %v648
    %v650 = vpop.xlane.xlu0 %649
    %v659 = vadd.s32 %v281, 4294967264
    %v660 = vlaneseq
    %v661 = vshrl.u32 %v660, 7
    %v662 = vsub.s32 %v659, %v661
    %v663 = vrot.slane %v629, %v662
    %v664 = vlaneseq
    %v665 = vshrl.u32 %v664, 7
    %v666 = vsub.s32 %v659, %v665
    %v667 = vrot.slane %v632, %v666
    %v668 = vlaneseq
    %v669 = vshrl.u32 %v668, 7
    %v670 = vsub.s32 %v659, %v669
    %v671 = vrot.slane %v635, %v670
    %v672 = vlaneseq
    %v673 = vshrl.u32 %v672, 7
    %v674 = vsub.s32 %v659, %v673
    %v675 = vrot.slane %v638, %v674
    %v676 = vlaneseq
    %v677 = vshrl.u32 %v676, 7
    %v678 = vsub.s32 %v659, %v677
    %v679 = vrot.slane %v641, %v678
    %v680 = vlaneseq
    %v681 = vshrl.u32 %v680, 7
    %v682 = vsub.s32 %v659, %v681
    %v683 = vrot.slane %v644, %v682
    %v684 = vlaneseq
    %v685 = vshrl.u32 %v684, 7
    %v686 = vsub.s32 %v659, %v685
    %v687 = vrot.slane %v647, %v686
    %v688 = vlaneseq
    %v689 = vshrl.u32 %v688, 7
    %v690 = vsub.s32 %v659, %v689
    %v691 = vrot.slane %v650, %v690
    %vm692 = vcmask 1041409
    %v693 = vsel %vm692, %v667, %v663
    %vm694 = vcmask 1042434
    %v695 = vsel %vm694, %v671, %v693
    %vm696 = vcmask 1043459
    %v697 = vsel %vm696, %v675, %v695
    %vm698 = vcmask 1044484
    %v699 = vsel %vm698, %v679, %v697
    %vm700 = vcmask 1045509
    %v701 = vsel %vm700, %v683, %v699
    %vm702 = vcmask 1046534
    %v703 = vsel %vm702, %v687, %v701
    %vm704 = vcmask 1047559
    %v705 = vsel %vm704, %v691, %v703
    %v707 = vadd.f32 %v436, %v705
    %709 = vrot.lane.b32.xlu0 %v707, 96
    %v710 = vpop.permute.xlu0 %709
    %v712 = vsel %vm339, -3.4028235e+38, %v710
    %v713 = vsel %vm355, %v712, -inf
    %714 = vmax.xlane.f32.xlu0 %v713
    %v715 = vpop.xlane.xlu0 %714
    %v716 = vsub.f32 %v712, %v715
    %v717 = vmul.f32 %v716, 1.442695
    %v718 = vpow.pop %v717
    %v719 = vsel %vm355, %v718, 0.0
    %720 = vadd.xlane.f32.xlu0 %v719
    %v721 = vpop.xlane.xlu0 %720
    %v722 = vrcp.pop %v721
    %v723 = vmul.f32 %v718, %v722
    %v724 = vsel %vm339, 0.0, %v723
    %725 = vrot.lane.b32.xlu0 %v167, 64
    %v726 = vpop.permute.xlu0 %725
    %v729 = vsel %vm355, %v724, 0
    %731 = vmatprep.subr.mxu0 0.0
    %732 = vmatpush1.msra.mxu0 0.0
    %733 = vmatprep.subr.mxu0 0.0
    %734 = vmatpush1.msra.mxu0 0.0
    %735 = vmatprep.subr.mxu0 0.0
    %736 = vmatpush1.msra.mxu0 0.0
    %737 = vmatprep.subr.mxu0 0.0
    %738 = vmatpush1.msra.mxu0 0.0
    %739 = vmatprep.subr.mxu0 0.0
    %740 = vmatpush1.msra.mxu0 0.0
    %741 = vmatprep.subr.mxu0 0.0
    %742 = vmatpush1.msra.mxu0 0.0
    %743 = vmatprep.subr.mxu0 0.0
    %744 = vmatpush1.msra.mxu0 0.0
    %745 = vmatprep.subr.mxu0 0.0
    %746 = vmatpush1.msra.mxu0 0.0
    %747 = vmatprep.subr.mxu0 0.0
    %748 = vmatpush1.msra.mxu0 0.0
    %749 = vmatprep.subr.mxu0 0.0
    %750 = vmatpush1.msra.mxu0 0.0
    %751 = vmatprep.subr.mxu0 0.0
    %752 = vmatpush1.msra.mxu0 0.0
    %753 = vmatprep.subr.mxu0 0.0
    %754 = vmatpush1.msra.mxu0 0.0
    %755 = vmatprep.subr.mxu0 0.0
    %756 = vmatpush1.msra.mxu0 0.0
    %757 = vmatprep.subr.mxu0 0.0
    %758 = vmatpush1.msra.mxu0 0.0
    %759 = vmatprep.subr.mxu0 0.0
    %760 = vmatpush1.msra.mxu0 0.0
    %761 = vmatprep.subr.mxu0 0.0
    %762 = vmatpush1.msra.mxu0 %v726
    %763 = vmatprep.subr.mxu0 0.0
    %764 = vmatpush2.msra.mxu0 0.0
    %765 = vmatprep.subr.mxu0 0.0
    %766 = vmatpush2.msra.mxu0 0.0
    %767 = vmatprep.subr.mxu0 0.0
    %768 = vmatpush2.msra.mxu0 0.0
    %769 = vmatprep.subr.mxu0 0.0
    %770 = vmatpush2.msra.mxu0 0.0
    %771 = vmatprep.subr.mxu0 0.0
    %772 = vmatpush2.msra.mxu0 0.0
    %773 = vmatprep.subr.mxu0 0.0
    %774 = vmatpush2.msra.mxu0 0.0
    %775 = vmatprep.subr.mxu0 0.0
    %776 = vmatpush2.msra.mxu0 0.0
    %777 = vmatprep.subr.mxu0 0.0
    %778 = vmatpush2.msra.mxu0 0.0
    %779 = vmatprep.subr.mxu0 0.0
    %780 = vmatpush2.msra.mxu0 0.0
    %781 = vmatprep.subr.mxu0 0.0
    %782 = vmatpush2.msra.mxu0 0.0
    %783 = vmatprep.subr.mxu0 0.0
    %784 = vmatpush2.msra.mxu0 0.0
    %785 = vmatprep.subr.mxu0 0.0
    %786 = vmatpush2.msra.mxu0 0.0
    %787 = vmatprep.subr.mxu0 0.0
    %788 = vmatpush2.msra.mxu0 0.0
    %789 = vmatprep.subr.mxu0 0.0
    %790 = vmatpush2.msra.mxu0 0.0
    %791 = vmatprep.subr.mxu0 0.0
    %792 = vmatpush2.msra.mxu0 0.0
    %793 = vmatprep.subr.mxu0 0.0
    %794 = vmatpush2.msra.mxu0 0.0
    %795 = vmatprep.mubr.f32.mxu0 0.0
    %796 = vmatmul.mubr.f32.gmra.mxu0 %v729
    %v797 = vpop.f32.mrf.mxu0
    %v798 = vadd.f32 0.0, %v797
    %v799 = vpop.f32.mrf.mxu0
    %800 = vdwg.mxu0
    %801 = vrot.lane.b32.xlu0 %v272, 120
    %v802 = vpop.permute.xlu0 %801
    %803 = vrot.lane.b32.xlu0 %v254, 88
    %v804 = vpop.permute.xlu0 %803
    %805 = vrot.lane.b32.xlu0 %v259, 88
    %v806 = vpop.permute.xlu0 %805
    %807 = vrot.lane.b32.xlu0 %v264, 88
    %v808 = vpop.permute.xlu0 %807
    %809 = vrot.lane.b32.xlu0 %v269, 88
    %v810 = vpop.permute.xlu0 %809
    %811 = vrot.lane.b32.xlu0 %v167, 88
    %v812 = vpop.permute.xlu0 %811
    %v813 = vsel %vm355, %v802, 0
    %v815 = vsel %vm355, %v804, 0
    %v817 = vsel %vm355, %v806, 0
    %v819 = vsel %vm355, %v808, 0
    %v821 = vsel %vm355, %v810, 0
    %v823 = vsel %vm355, %v812, 0
    %825 = vmatprep.subr.mxu0 0.0
    %826 = vmatpush1.xpose.msra.mxu0 0.0
    %827 = vmatprep.subr.mxu0 0.0
    %828 = vmatpush1.xpose.msra.mxu0 0.0
    %829 = vmatprep.subr.mxu0 0.0
    %830 = vmatpush1.xpose.msra.mxu0 0.0
    %831 = vmatprep.subr.mxu0 0.0
    %832 = vmatpush1.xpose.msra.mxu0 0.0
    %833 = vmatprep.subr.mxu0 0.0
    %834 = vmatpush1.xpose.msra.mxu0 0.0
    %835 = vmatprep.subr.mxu0 0.0
    %836 = vmatpush1.xpose.msra.mxu0 0.0
    %837 = vmatprep.subr.mxu0 0.0
    %838 = vmatpush1.xpose.msra.mxu0 0.0
    %839 = vmatprep.subr.mxu0 0.0
    %840 = vmatpush1.xpose.msra.mxu0 0.0
    %841 = vmatprep.subr.mxu0 0.0
    %842 = vmatpush1.xpose.msra.mxu0 0.0
    %843 = vmatprep.subr.mxu0 0.0
    %844 = vmatpush1.xpose.msra.mxu0 0.0
    %845 = vmatprep.subr.mxu0 0.0
    %846 = vmatpush1.xpose.msra.mxu0 0.0
    %847 = vmatprep.subr.mxu0 0.0
    %848 = vmatpush1.xpose.msra.mxu0 %v823
    %849 = vmatprep.subr.mxu0 0.0
    %850 = vmatpush1.xpose.msra.mxu0 %v821
    %851 = vmatprep.subr.mxu0 0.0
    %852 = vmatpush1.xpose.msra.mxu0 %v819
    %853 = vmatprep.subr.mxu0 0.0
    %854 = vmatpush1.xpose.msra.mxu0 %v817
    %855 = vmatprep.subr.mxu0 0.0
    %856 = vmatpush1.xpose.msra.mxu0 %v815
    %857 = vmatprep.subr.mxu0 0.0
    %858 = vmatpush2.xpose.msra.mxu0 0.0
    %859 = vmatprep.subr.mxu0 0.0
    %860 = vmatpush2.xpose.msra.mxu0 0.0
    %861 = vmatprep.subr.mxu0 0.0
    %862 = vmatpush2.xpose.msra.mxu0 0.0
    %863 = vmatprep.subr.mxu0 0.0
    %864 = vmatpush2.xpose.msra.mxu0 0.0
    %865 = vmatprep.subr.mxu0 0.0
    %866 = vmatpush2.xpose.msra.mxu0 0.0
    %867 = vmatprep.subr.mxu0 0.0
    %868 = vmatpush2.xpose.msra.mxu0 0.0
    %869 = vmatprep.subr.mxu0 0.0
    %870 = vmatpush2.xpose.msra.mxu0 0.0
    %871 = vmatprep.subr.mxu0 0.0
    %872 = vmatpush2.xpose.msra.mxu0 0.0
    %873 = vmatprep.subr.mxu0 0.0
    %874 = vmatpush2.xpose.msra.mxu0 0.0
    %875 = vmatprep.subr.mxu0 0.0
    %876 = vmatpush2.xpose.msra.mxu0 0.0
    %877 = vmatprep.subr.mxu0 0.0
    %878 = vmatpush2.xpose.msra.mxu0 0.0
    %879 = vmatprep.subr.mxu0 0.0
    %880 = vmatpush2.xpose.msra.mxu0 0.0
    %881 = vmatprep.subr.mxu0 0.0
    %882 = vmatpush2.xpose.msra.mxu0 0.0
    %883 = vmatprep.subr.mxu0 0.0
    %884 = vmatpush2.xpose.msra.mxu0 0.0
    %885 = vmatprep.subr.mxu0 0.0
    %886 = vmatpush2.xpose.msra.mxu0 0.0
    %887 = vmatprep.subr.mxu0 0.0
    %888 = vmatpush2.xpose.msra.mxu0 0.0
    %889 = vmatprep.mubr.f32.mxu0 0.0
    %890 = vmatmul.mubr.f32.gmra.mxu0 %v813
    %v891 = vpop.f32.mrf.mxu0
    %v892 = vadd.f32 0.0, %v891
    %v893 = vpop.f32.mrf.mxu0
    %894 = vdwg.mxu0
    %895 = vrot.lane.b32.xlu0 %v274, 120
    %v896 = vpop.permute.xlu0 %895
    %897 = vrot.lane.b32.xlu0 %v275, 120
    %v898 = vpop.permute.xlu0 %897
    %899 = vrot.lane.b32.xlu0 %v276, 120
    %v900 = vpop.permute.xlu0 %899
    %901 = vrot.lane.b32.xlu0 %v277, 120
    %v902 = vpop.permute.xlu0 %901
    %v903 = vsel %vm355, %v896, 0
    %v905 = vsel %vm355, %v898, 0
    %v907 = vsel %vm355, %v900, 0
    %v909 = vsel %vm355, %v902, 0
    %911 = vmatprep.subr.mxu0 0.0
    %912 = vmatpush1.xpose.msra.mxu0 0.0
    %913 = vmatprep.subr.mxu0 0.0
    %914 = vmatpush1.xpose.msra.mxu0 0.0
    %915 = vmatprep.subr.mxu0 0.0
    %916 = vmatpush1.xpose.msra.mxu0 0.0
    %917 = vmatprep.subr.mxu0 0.0
    %918 = vmatpush1.xpose.msra.mxu0 0.0
    %919 = vmatprep.subr.mxu0 0.0
    %920 = vmatpush1.xpose.msra.mxu0 0.0
    %921 = vmatprep.subr.mxu0 0.0
    %922 = vmatpush1.xpose.msra.mxu0 0.0
    %923 = vmatprep.subr.mxu0 0.0
    %924 = vmatpush1.xpose.msra.mxu0 0.0
    %925 = vmatprep.subr.mxu0 0.0
    %926 = vmatpush1.xpose.msra.mxu0 0.0
    %927 = vmatprep.subr.mxu0 0.0
    %928 = vmatpush1.xpose.msra.mxu0 0.0
    %929 = vmatprep.subr.mxu0 0.0
    %930 = vmatpush1.xpose.msra.mxu0 0.0
    %931 = vmatprep.subr.mxu0 0.0
    %932 = vmatpush1.xpose.msra.mxu0 0.0
    %933 = vmatprep.subr.mxu0 0.0
    %934 = vmatpush1.xpose.msra.mxu0 0.0
    %935 = vmatprep.subr.mxu0 0.0
    %936 = vmatpush1.xpose.msra.mxu0 %v909
    %937 = vmatprep.subr.mxu0 0.0
    %938 = vmatpush1.xpose.msra.mxu0 %v907
    %939 = vmatprep.subr.mxu0 0.0
    %940 = vmatpush1.xpose.msra.mxu0 %v905
    %941 = vmatprep.subr.mxu0 0.0
    %942 = vmatpush1.xpose.msra.mxu0 %v903
    %943 = vmatprep.subr.mxu0 0.0
    %944 = vmatpush2.xpose.msra.mxu0 0.0
    %945 = vmatprep.subr.mxu0 0.0
    %946 = vmatpush2.xpose.msra.mxu0 0.0
    %947 = vmatprep.subr.mxu0 0.0
    %948 = vmatpush2.xpose.msra.mxu0 0.0
    %949 = vmatprep.subr.mxu0 0.0
    %950 = vmatpush2.xpose.msra.mxu0 0.0
    %951 = vmatprep.subr.mxu0 0.0
    %952 = vmatpush2.xpose.msra.mxu0 0.0
    %953 = vmatprep.subr.mxu0 0.0
    %954 = vmatpush2.xpose.msra.mxu0 0.0
    %955 = vmatprep.subr.mxu0 0.0
    %956 = vmatpush2.xpose.msra.mxu0 0.0
    %957 = vmatprep.subr.mxu0 0.0
    %958 = vmatpush2.xpose.msra.mxu0 0.0
    %959 = vmatprep.subr.mxu0 0.0
    %960 = vmatpush2.xpose.msra.mxu0 0.0
    %961 = vmatprep.subr.mxu0 0.0
    %962 = vmatpush2.xpose.msra.mxu0 0.0
    %963 = vmatprep.subr.mxu0 0.0
    %964 = vmatpush2.xpose.msra.mxu0 0.0
    %965 = vmatprep.subr.mxu0 0.0
    %966 = vmatpush2.xpose.msra.mxu0 0.0
    %967 = vmatprep.subr.mxu0 0.0
    %968 = vmatpush2.xpose.msra.mxu0 0.0
    %969 = vmatprep.subr.mxu0 0.0
    %970 = vmatpush2.xpose.msra.mxu0 0.0
    %971 = vmatprep.subr.mxu0 0.0
    %972 = vmatpush2.xpose.msra.mxu0 0.0
    %973 = vmatprep.subr.mxu0 0.0
    %974 = vmatpush2.xpose.msra.mxu0 0.0
    %975 = vmatprep.mubr.f32.mxu0 0.0
    %976 = vmatmul.mubr.f32.gmra.mxu0 %v823
    %v977 = vpop.f32.mrf.mxu0
    %v978 = vadd.f32 0.0, %v977
    %v979 = vpop.f32.mrf.mxu0
    %980 = vdwg.mxu0
    %v982 = vcombine.high %v892, %v892
    %v984 = vunpack.c.l.s4 1966171168
    %v985 = vunpack.c.0.s8 %v984
    %v986 = vlaneseq
    %v987 = vshrl.u32 %v986, 7
    %v988 = vsub.s32 %v985, %v987
    %v989 = vrot.slane %v892, %v988
    %v991 = vunpack.c.l.s4 1966171168
    %v992 = vunpack.c.0.s8 %v991
    %v993 = vlaneseq
    %v994 = vshrl.u32 %v993, 7
    %v995 = vsub.s32 %v992, %v994
    %v996 = vrot.slane %v982, %v995
    %v997 = vcombine.high %v989, %v989
    %v998 = vcombine.high %v996, %v996
    %v1000 = vunpack.c.l.s4 1966171168
    %v1001 = vunpack.c.0.s8 %v1000
    %v1002 = vlaneseq
    %v1003 = vshrl.u32 %v1002, 7
    %v1004 = vsub.s32 %v1001, %v1003
    %v1005 = vrot.slane %v989, %v1004
    %v1007 = vunpack.c.l.s4 1966171168
    %v1008 = vunpack.c.0.s8 %v1007
    %v1009 = vlaneseq
    %v1010 = vshrl.u32 %v1009, 7
    %v1011 = vsub.s32 %v1008, %v1010
    %v1012 = vrot.slane %v996, %v1011
    %v1014 = vunpack.c.l.s4 1966171168
    %v1015 = vunpack.c.0.s8 %v1014
    %v1016 = vlaneseq
    %v1017 = vshrl.u32 %v1016, 7
    %v1018 = vsub.s32 %v1015, %v1017
    %v1019 = vrot.slane %v997, %v1018
    %v1021 = vunpack.c.l.s4 1966171168
    %v1022 = vunpack.c.0.s8 %v1021
    %v1023 = vlaneseq
    %v1024 = vshrl.u32 %v1023, 7
    %v1025 = vsub.s32 %v1022, %v1024
    %v1026 = vrot.slane %v998, %v1025
    %v1027 = vcombine.high %v1005, %v1005
    %v1028 = vcombine.high %v1012, %v1012
    %v1029 = vcombine.high %v1019, %v1019
    %v1030 = vcombine.high %v1026, %v1026
    %v1031 = vlaneseq
    %v1032 = vshrl.u32 %v1031, 7
    %v1033 = vsub.s32 0, %v1032
    %v1034 = vrot.slane %v1005, %v1033
    %v1035 = vlaneseq
    %v1036 = vshrl.u32 %v1035, 7
    %v1037 = vsub.s32 0, %v1036
    %v1038 = vrot.slane %v1019, %v1037
    %v1039 = vlaneseq
    %v1040 = vshrl.u32 %v1039, 7
    %v1041 = vsub.s32 0, %v1040
    %v1042 = vrot.slane %v1027, %v1041
    %v1043 = vlaneseq
    %v1044 = vshrl.u32 %v1043, 7
    %v1045 = vsub.s32 0, %v1044
    %v1046 = vrot.slane %v1029, %v1045
    %v1047 = vlaneseq
    %v1048 = vshrl.u32 %v1047, 7
    %v1049 = vsub.s32 0, %v1048
    %v1050 = vrot.slane %v1012, %v1049
    %v1051 = vlaneseq
    %v1052 = vshrl.u32 %v1051, 7
    %v1053 = vsub.s32 0, %v1052
    %v1054 = vrot.slane %v1026, %v1053
    %v1055 = vlaneseq
    %v1056 = vshrl.u32 %v1055, 7
    %v1057 = vsub.s32 0, %v1056
    %v1058 = vrot.slane %v1028, %v1057
    %v1059 = vlaneseq
    %v1060 = vshrl.u32 %v1059, 7
    %v1061 = vsub.s32 0, %v1060
    %v1062 = vrot.slane %v1030, %v1061
    %v1071 = vadd.f32 %v1034, %v978
    %v1072 = vadd.f32 %v1038, %v978
    %v1073 = vadd.f32 %v1042, %v978
    %v1074 = vadd.f32 %v1046, %v978
    %v1075 = vadd.f32 %v1050, %v978
    %v1076 = vadd.f32 %v1054, %v978
    %v1077 = vadd.f32 %v1058, %v978
    %v1078 = vadd.f32 %v1062, %v978
    %v1079 = vsel %vm330, %v1071, 0.0
    %v1080 = vsel %vm331, %v1072, 0.0
    %v1081 = vsel %vm332, %v1073, 0.0
    %v1082 = vsel %vm333, %v1074, 0.0
    %v1083 = vsel %vm334, %v1075, 0.0
    %v1084 = vsel %vm335, %v1076, 0.0
    %v1085 = vsel %vm336, %v1077, 0.0
    %v1086 = vsel %vm337, %v1078, 0.0
    %v1087 = vsel %vm93, %v1079, 0.0
    %1088 = vadd.xlane.f32.xlu0 %v1087
    %v1089 = vpop.xlane.xlu0 %1088
    %v1090 = vsel %vm93, %v1080, 0.0
    %1091 = vadd.xlane.f32.xlu0 %v1090
    %v1092 = vpop.xlane.xlu0 %1091
    %v1093 = vsel %vm93, %v1081, 0.0
    %1094 = vadd.xlane.f32.xlu0 %v1093
    %v1095 = vpop.xlane.xlu0 %1094
    %v1096 = vsel %vm93, %v1082, 0.0
    %1097 = vadd.xlane.f32.xlu0 %v1096
    %v1098 = vpop.xlane.xlu0 %1097
    %v1099 = vsel %vm93, %v1083, 0.0
    %1100 = vadd.xlane.f32.xlu0 %v1099
    %v1101 = vpop.xlane.xlu0 %1100
    %v1102 = vsel %vm93, %v1084, 0.0
    %1103 = vadd.xlane.f32.xlu0 %v1102
    %v1104 = vpop.xlane.xlu0 %1103
    %v1105 = vsel %vm93, %v1085, 0.0
    %1106 = vadd.xlane.f32.xlu0 %v1105
    %v1107 = vpop.xlane.xlu0 %1106
    %v1108 = vsel %vm93, %v1086, 0.0
    %1109 = vadd.xlane.f32.xlu0 %v1108
    %v1110 = vpop.xlane.xlu0 %1109
    %v1119 = vlaneseq
    %v1120 = vshrl.u32 %v1119, 7
    %v1121 = vsub.s32 %v659, %v1120
    %v1122 = vrot.slane %v1089, %v1121
    %v1123 = vlaneseq
    %v1124 = vshrl.u32 %v1123, 7
    %v1125 = vsub.s32 %v659, %v1124
    %v1126 = vrot.slane %v1092, %v1125
    %v1127 = vlaneseq
    %v1128 = vshrl.u32 %v1127, 7
    %v1129 = vsub.s32 %v659, %v1128
    %v1130 = vrot.slane %v1095, %v1129
    %v1131 = vlaneseq
    %v1132 = vshrl.u32 %v1131, 7
    %v1133 = vsub.s32 %v659, %v1132
    %v1134 = vrot.slane %v1098, %v1133
    %v1135 = vlaneseq
    %v1136 = vshrl.u32 %v1135, 7
    %v1137 = vsub.s32 %v659, %v1136
    %v1138 = vrot.slane %v1101, %v1137
    %v1139 = vlaneseq
    %v1140 = vshrl.u32 %v1139, 7
    %v1141 = vsub.s32 %v659, %v1140
    %v1142 = vrot.slane %v1104, %v1141
    %v1143 = vlaneseq
    %v1144 = vshrl.u32 %v1143, 7
    %v1145 = vsub.s32 %v659, %v1144
    %v1146 = vrot.slane %v1107, %v1145
    %v1147 = vlaneseq
    %v1148 = vshrl.u32 %v1147, 7
    %v1149 = vsub.s32 %v659, %v1148
    %v1150 = vrot.slane %v1110, %v1149
    %v1151 = vsel %vm692, %v1126, %v1122
    %v1152 = vsel %vm694, %v1130, %v1151
    %v1153 = vsel %vm696, %v1134, %v1152
    %v1154 = vsel %vm698, %v1138, %v1153
    %v1155 = vsel %vm700, %v1142, %v1154
    %v1156 = vsel %vm702, %v1146, %v1155
    %v1157 = vsel %vm704, %v1150, %v1156
    %v1159 = vadd.f32 %v892, %v1157
    %1161 = vrot.lane.b32.xlu0 %v1159, 96
    %v1162 = vpop.permute.xlu0 %1161
    %v1164 = vsel %vm339, -3.4028235e+38, %v1162
    %v1165 = vsel %vm355, %v1164, -inf
    %1166 = vmax.xlane.f32.xlu0 %v1165
    %v1167 = vpop.xlane.xlu0 %1166
    %v1168 = vsub.f32 %v1164, %v1167
    %v1169 = vmul.f32 %v1168, 1.442695
    %v1170 = vpow.pop %v1169
    %v1171 = vsel %vm355, %v1170, 0.0
    %1172 = vadd.xlane.f32.xlu0 %v1171
    %v1173 = vpop.xlane.xlu0 %1172
    %v1174 = vrcp.pop %v1173
    %v1175 = vmul.f32 %v1170, %v1174
    %v1176 = vsel %vm339, 0.0, %v1175
    %1177 = vrot.lane.b32.xlu0 %v167, 56
    %v1178 = vpop.permute.xlu0 %1177
    %v1181 = vsel %vm355, %v1176, 0
    %1183 = vmatprep.subr.mxu0 0.0
    %1184 = vmatpush1.msra.mxu0 0.0
    %1185 = vmatprep.subr.mxu0 0.0
    %1186 = vmatpush1.msra.mxu0 0.0
    %1187 = vmatprep.subr.mxu0 0.0
    %1188 = vmatpush1.msra.mxu0 0.0
    %1189 = vmatprep.subr.mxu0 0.0
    %1190 = vmatpush1.msra.mxu0 0.0
    %1191 = vmatprep.subr.mxu0 0.0
    %1192 = vmatpush1.msra.mxu0 0.0
    %1193 = vmatprep.subr.mxu0 0.0
    %1194 = vmatpush1.msra.mxu0 0.0
    %1195 = vmatprep.subr.mxu0 0.0
    %1196 = vmatpush1.msra.mxu0 0.0
    %1197 = vmatprep.subr.mxu0 0.0
    %1198 = vmatpush1.msra.mxu0 0.0
    %1199 = vmatprep.subr.mxu0 0.0
    %1200 = vmatpush1.msra.mxu0 0.0
    %1201 = vmatprep.subr.mxu0 0.0
    %1202 = vmatpush1.msra.mxu0 0.0
    %1203 = vmatprep.subr.mxu0 0.0
    %1204 = vmatpush1.msra.mxu0 0.0
    %1205 = vmatprep.subr.mxu0 0.0
    %1206 = vmatpush1.msra.mxu0 0.0
    %1207 = vmatprep.subr.mxu0 0.0
    %1208 = vmatpush1.msra.mxu0 0.0
    %1209 = vmatprep.subr.mxu0 0.0
    %1210 = vmatpush1.msra.mxu0 0.0
    %1211 = vmatprep.subr.mxu0 0.0
    %1212 = vmatpush1.msra.mxu0 0.0
    %1213 = vmatprep.subr.mxu0 0.0
    %1214 = vmatpush1.msra.mxu0 %v1178
    %1215 = vmatprep.subr.mxu0 0.0
    %1216 = vmatpush2.msra.mxu0 0.0
    %1217 = vmatprep.subr.mxu0 0.0
    %1218 = vmatpush2.msra.mxu0 0.0
    %1219 = vmatprep.subr.mxu0 0.0
    %1220 = vmatpush2.msra.mxu0 0.0
    %1221 = vmatprep.subr.mxu0 0.0
    %1222 = vmatpush2.msra.mxu0 0.0
    %1223 = vmatprep.subr.mxu0 0.0
    %1224 = vmatpush2.msra.mxu0 0.0
    %1225 = vmatprep.subr.mxu0 0.0
    %1226 = vmatpush2.msra.mxu0 0.0
    %1227 = vmatprep.subr.mxu0 0.0
    %1228 = vmatpush2.msra.mxu0 0.0
    %1229 = vmatprep.subr.mxu0 0.0
    %1230 = vmatpush2.msra.mxu0 0.0
    %1231 = vmatprep.subr.mxu0 0.0
    %1232 = vmatpush2.msra.mxu0 0.0
    %1233 = vmatprep.subr.mxu0 0.0
    %1234 = vmatpush2.msra.mxu0 0.0
    %1235 = vmatprep.subr.mxu0 0.0
    %1236 = vmatpush2.msra.mxu0 0.0
    %1237 = vmatprep.subr.mxu0 0.0
    %1238 = vmatpush2.msra.mxu0 0.0
    %1239 = vmatprep.subr.mxu0 0.0
    %1240 = vmatpush2.msra.mxu0 0.0
    %1241 = vmatprep.subr.mxu0 0.0
    %1242 = vmatpush2.msra.mxu0 0.0
    %1243 = vmatprep.subr.mxu0 0.0
    %1244 = vmatpush2.msra.mxu0 0.0
    %1245 = vmatprep.subr.mxu0 0.0
    %1246 = vmatpush2.msra.mxu0 0.0
    %1247 = vmatprep.mubr.f32.mxu0 0.0
    %1248 = vmatmul.mubr.f32.gmra.mxu0 %v1181
    %v1249 = vpop.f32.mrf.mxu0
    %v1250 = vadd.f32 0.0, %v1249
    %v1251 = vpop.f32.mrf.mxu0
    %1252 = vdwg.mxu0
    %1253 = vrot.lane.b32.xlu0 %v272, 112
    %v1254 = vpop.permute.xlu0 %1253
    %1255 = vrot.lane.b32.xlu0 %v254, 80
    %v1256 = vpop.permute.xlu0 %1255
    %1257 = vrot.lane.b32.xlu0 %v259, 80
    %v1258 = vpop.permute.xlu0 %1257
    %1259 = vrot.lane.b32.xlu0 %v264, 80
    %v1260 = vpop.permute.xlu0 %1259
    %1261 = vrot.lane.b32.xlu0 %v269, 80
    %v1262 = vpop.permute.xlu0 %1261
    %1263 = vrot.lane.b32.xlu0 %v167, 80
    %v1264 = vpop.permute.xlu0 %1263
    %v1265 = vsel %vm355, %v1254, 0
    %v1267 = vsel %vm355, %v1256, 0
    %v1269 = vsel %vm355, %v1258, 0
    %v1271 = vsel %vm355, %v1260, 0
    %v1273 = vsel %vm355, %v1262, 0
    %v1275 = vsel %vm355, %v1264, 0
    %1277 = vmatprep.subr.mxu0 0.0
    %1278 = vmatpush1.xpose.msra.mxu0 0.0
    %1279 = vmatprep.subr.mxu0 0.0
    %1280 = vmatpush1.xpose.msra.mxu0 0.0
    %1281 = vmatprep.subr.mxu0 0.0
    %1282 = vmatpush1.xpose.msra.mxu0 0.0
    %1283 = vmatprep.subr.mxu0 0.0
    %1284 = vmatpush1.xpose.msra.mxu0 0.0
    %1285 = vmatprep.subr.mxu0 0.0
    %1286 = vmatpush1.xpose.msra.mxu0 0.0
    %1287 = vmatprep.subr.mxu0 0.0
    %1288 = vmatpush1.xpose.msra.mxu0 0.0
    %1289 = vmatprep.subr.mxu0 0.0
    %1290 = vmatpush1.xpose.msra.mxu0 0.0
    %1291 = vmatprep.subr.mxu0 0.0
    %1292 = vmatpush1.xpose.msra.mxu0 0.0
    %1293 = vmatprep.subr.mxu0 0.0
    %1294 = vmatpush1.xpose.msra.mxu0 0.0
    %1295 = vmatprep.subr.mxu0 0.0
    %1296 = vmatpush1.xpose.msra.mxu0 0.0
    %1297 = vmatprep.subr.mxu0 0.0
    %1298 = vmatpush1.xpose.msra.mxu0 0.0
    %1299 = vmatprep.subr.mxu0 0.0
    %1300 = vmatpush1.xpose.msra.mxu0 %v1275
    %1301 = vmatprep.subr.mxu0 0.0
    %1302 = vmatpush1.xpose.msra.mxu0 %v1273
    %1303 = vmatprep.subr.mxu0 0.0
    %1304 = vmatpush1.xpose.msra.mxu0 %v1271
    %1305 = vmatprep.subr.mxu0 0.0
    %1306 = vmatpush1.xpose.msra.mxu0 %v1269
    %1307 = vmatprep.subr.mxu0 0.0
    %1308 = vmatpush1.xpose.msra.mxu0 %v1267
    %1309 = vmatprep.subr.mxu0 0.0
    %1310 = vmatpush2.xpose.msra.mxu0 0.0
    %1311 = vmatprep.subr.mxu0 0.0
    %1312 = vmatpush2.xpose.msra.mxu0 0.0
    %1313 = vmatprep.subr.mxu0 0.0
    %1314 = vmatpush2.xpose.msra.mxu0 0.0
    %1315 = vmatprep.subr.mxu0 0.0
    %1316 = vmatpush2.xpose.msra.mxu0 0.0
    %1317 = vmatprep.subr.mxu0 0.0
    %1318 = vmatpush2.xpose.msra.mxu0 0.0
    %1319 = vmatprep.subr.mxu0 0.0
    %1320 = vmatpush2.xpose.msra.mxu0 0.0
    %1321 = vmatprep.subr.mxu0 0.0
    %1322 = vmatpush2.xpose.msra.mxu0 0.0
    %1323 = vmatprep.subr.mxu0 0.0
    %1324 = vmatpush2.xpose.msra.mxu0 0.0
    %1325 = vmatprep.subr.mxu0 0.0
    %1326 = vmatpush2.xpose.msra.mxu0 0.0
    %1327 = vmatprep.subr.mxu0 0.0
    %1328 = vmatpush2.xpose.msra.mxu0 0.0
    %1329 = vmatprep.subr.mxu0 0.0
    %1330 = vmatpush2.xpose.msra.mxu0 0.0
    %1331 = vmatprep.subr.mxu0 0.0
    %1332 = vmatpush2.xpose.msra.mxu0 0.0
    %1333 = vmatprep.subr.mxu0 0.0
    %1334 = vmatpush2.xpose.msra.mxu0 0.0
    %1335 = vmatprep.subr.mxu0 0.0
    %1336 = vmatpush2.xpose.msra.mxu0 0.0
    %1337 = vmatprep.subr.mxu0 0.0
    %1338 = vmatpush2.xpose.msra.mxu0 0.0
    %1339 = vmatprep.subr.mxu0 0.0
    %1340 = vmatpush2.xpose.msra.mxu0 0.0
    %1341 = vmatprep.mubr.f32.mxu0 0.0
    %1342 = vmatmul.mubr.f32.gmra.mxu0 %v1265
    %v1343 = vpop.f32.mrf.mxu0
    %v1344 = vadd.f32 0.0, %v1343
    %v1345 = vpop.f32.mrf.mxu0
    %1346 = vdwg.mxu0
    %1347 = vrot.lane.b32.xlu0 %v274, 112
    %v1348 = vpop.permute.xlu0 %1347
    %1349 = vrot.lane.b32.xlu0 %v275, 112
    %v1350 = vpop.permute.xlu0 %1349
    %1351 = vrot.lane.b32.xlu0 %v276, 112
    %v1352 = vpop.permute.xlu0 %1351
    %1353 = vrot.lane.b32.xlu0 %v277, 112
    %v1354 = vpop.permute.xlu0 %1353
    %v1355 = vsel %vm355, %v1348, 0
    %v1357 = vsel %vm355, %v1350, 0
    %v1359 = vsel %vm355, %v1352, 0
    %v1361 = vsel %vm355, %v1354, 0
    %1363 = vmatprep.subr.mxu0 0.0
    %1364 = vmatpush1.xpose.msra.mxu0 0.0
    %1365 = vmatprep.subr.mxu0 0.0
    %1366 = vmatpush1.xpose.msra.mxu0 0.0
    %1367 = vmatprep.subr.mxu0 0.0
    %1368 = vmatpush1.xpose.msra.mxu0 0.0
    %1369 = vmatprep.subr.mxu0 0.0
    %1370 = vmatpush1.xpose.msra.mxu0 0.0
    %1371 = vmatprep.subr.mxu0 0.0
    %1372 = vmatpush1.xpose.msra.mxu0 0.0
    %1373 = vmatprep.subr.mxu0 0.0
    %1374 = vmatpush1.xpose.msra.mxu0 0.0
    %1375 = vmatprep.subr.mxu0 0.0
    %1376 = vmatpush1.xpose.msra.mxu0 0.0
    %1377 = vmatprep.subr.mxu0 0.0
    %1378 = vmatpush1.xpose.msra.mxu0 0.0
    %1379 = vmatprep.subr.mxu0 0.0
    %1380 = vmatpush1.xpose.msra.mxu0 0.0
    %1381 = vmatprep.subr.mxu0 0.0
    %1382 = vmatpush1.xpose.msra.mxu0 0.0
    %1383 = vmatprep.subr.mxu0 0.0
    %1384 = vmatpush1.xpose.msra.mxu0 0.0
    %1385 = vmatprep.subr.mxu0 0.0
    %1386 = vmatpush1.xpose.msra.mxu0 0.0
    %1387 = vmatprep.subr.mxu0 0.0
    %1388 = vmatpush1.xpose.msra.mxu0 %v1361
    %1389 = vmatprep.subr.mxu0 0.0
    %1390 = vmatpush1.xpose.msra.mxu0 %v1359
    %1391 = vmatprep.subr.mxu0 0.0
    %1392 = vmatpush1.xpose.msra.mxu0 %v1357
    %1393 = vmatprep.subr.mxu0 0.0
    %1394 = vmatpush1.xpose.msra.mxu0 %v1355
    %1395 = vmatprep.subr.mxu0 0.0
    %1396 = vmatpush2.xpose.msra.mxu0 0.0
    %1397 = vmatprep.subr.mxu0 0.0
    %1398 = vmatpush2.xpose.msra.mxu0 0.0
    %1399 = vmatprep.subr.mxu0 0.0
    %1400 = vmatpush2.xpose.msra.mxu0 0.0
    %1401 = vmatprep.subr.mxu0 0.0
    %1402 = vmatpush2.xpose.msra.mxu0 0.0
    %1403 = vmatprep.subr.mxu0 0.0
    %1404 = vmatpush2.xpose.msra.mxu0 0.0
    %1405 = vmatprep.subr.mxu0 0.0
    %1406 = vmatpush2.xpose.msra.mxu0 0.0
    %1407 = vmatprep.subr.mxu0 0.0
    %1408 = vmatpush2.xpose.msra.mxu0 0.0
    %1409 = vmatprep.subr.mxu0 0.0
    %1410 = vmatpush2.xpose.msra.mxu0 0.0
    %1411 = vmatprep.subr.mxu0 0.0
    %1412 = vmatpush2.xpose.msra.mxu0 0.0
    %1413 = vmatprep.subr.mxu0 0.0
    %1414 = vmatpush2.xpose.msra.mxu0 0.0
    %1415 = vmatprep.subr.mxu0 0.0
    %1416 = vmatpush2.xpose.msra.mxu0 0.0
    %1417 = vmatprep.subr.mxu0 0.0
    %1418 = vmatpush2.xpose.msra.mxu0 0.0
    %1419 = vmatprep.subr.mxu0 0.0
    %1420 = vmatpush2.xpose.msra.mxu0 0.0
    %1421 = vmatprep.subr.mxu0 0.0
    %1422 = vmatpush2.xpose.msra.mxu0 0.0
    %1423 = vmatprep.subr.mxu0 0.0
    %1424 = vmatpush2.xpose.msra.mxu0 0.0
    %1425 = vmatprep.subr.mxu0 0.0
    %1426 = vmatpush2.xpose.msra.mxu0 0.0
    %1427 = vmatprep.mubr.f32.mxu0 0.0
    %1428 = vmatmul.mubr.f32.gmra.mxu0 %v1275
    %v1429 = vpop.f32.mrf.mxu0
    %v1430 = vadd.f32 0.0, %v1429
    %v1431 = vpop.f32.mrf.mxu0
    %1432 = vdwg.mxu0
    %v1434 = vcombine.high %v1344, %v1344
    %v1436 = vunpack.c.l.s4 1966171168
    %v1437 = vunpack.c.0.s8 %v1436
    %v1438 = vlaneseq
    %v1439 = vshrl.u32 %v1438, 7
    %v1440 = vsub.s32 %v1437, %v1439
    %v1441 = vrot.slane %v1344, %v1440
    %v1443 = vunpack.c.l.s4 1966171168
    %v1444 = vunpack.c.0.s8 %v1443
    %v1445 = vlaneseq
    %v1446 = vshrl.u32 %v1445, 7
    %v1447 = vsub.s32 %v1444, %v1446
    %v1448 = vrot.slane %v1434, %v1447
    %v1449 = vcombine.high %v1441, %v1441
    %v1450 = vcombine.high %v1448, %v1448
    %v1452 = vunpack.c.l.s4 1966171168
    %v1453 = vunpack.c.0.s8 %v1452
    %v1454 = vlaneseq
    %v1455 = vshrl.u32 %v1454, 7
    %v1456 = vsub.s32 %v1453, %v1455
    %v1457 = vrot.slane %v1441, %v1456
    %v1459 = vunpack.c.l.s4 1966171168
    %v1460 = vunpack.c.0.s8 %v1459
    %v1461 = vlaneseq
    %v1462 = vshrl.u32 %v1461, 7
    %v1463 = vsub.s32 %v1460, %v1462
    %v1464 = vrot.slane %v1448, %v1463
    %v1466 = vunpack.c.l.s4 1966171168
    %v1467 = vunpack.c.0.s8 %v1466
    %v1468 = vlaneseq
    %v1469 = vshrl.u32 %v1468, 7
    %v1470 = vsub.s32 %v1467, %v1469
    %v1471 = vrot.slane %v1449, %v1470
    %v1473 = vunpack.c.l.s4 1966171168
    %v1474 = vunpack.c.0.s8 %v1473
    %v1475 = vlaneseq
    %v1476 = vshrl.u32 %v1475, 7
    %v1477 = vsub.s32 %v1474, %v1476
    %v1478 = vrot.slane %v1450, %v1477
    %v1479 = vcombine.high %v1457, %v1457
    %v1480 = vcombine.high %v1464, %v1464
    %v1481 = vcombine.high %v1471, %v1471
    %v1482 = vcombine.high %v1478, %v1478
    %v1483 = vlaneseq
    %v1484 = vshrl.u32 %v1483, 7
    %v1485 = vsub.s32 0, %v1484
    %v1486 = vrot.slane %v1457, %v1485
    %v1487 = vlaneseq
    %v1488 = vshrl.u32 %v1487, 7
    %v1489 = vsub.s32 0, %v1488
    %v1490 = vrot.slane %v1471, %v1489
    %v1491 = vlaneseq
    %v1492 = vshrl.u32 %v1491, 7
    %v1493 = vsub.s32 0, %v1492
    %v1494 = vrot.slane %v1479, %v1493
    %v1495 = vlaneseq
    %v1496 = vshrl.u32 %v1495, 7
    %v1497 = vsub.s32 0, %v1496
    %v1498 = vrot.slane %v1481, %v1497
    %v1499 = vlaneseq
    %v1500 = vshrl.u32 %v1499, 7
    %v1501 = vsub.s32 0, %v1500
    %v1502 = vrot.slane %v1464, %v1501
    %v1503 = vlaneseq
    %v1504 = vshrl.u32 %v1503, 7
    %v1505 = vsub.s32 0, %v1504
    %v1506 = vrot.slane %v1478, %v1505
    %v1507 = vlaneseq
    %v1508 = vshrl.u32 %v1507, 7
    %v1509 = vsub.s32 0, %v1508
    %v1510 = vrot.slane %v1480, %v1509
    %v1511 = vlaneseq
    %v1512 = vshrl.u32 %v1511, 7
    %v1513 = vsub.s32 0, %v1512
    %v1514 = vrot.slane %v1482, %v1513
    %v1523 = vadd.f32 %v1486, %v1430
    %v1524 = vadd.f32 %v1490, %v1430
    %v1525 = vadd.f32 %v1494, %v1430
    %v1526 = vadd.f32 %v1498, %v1430
    %v1527 = vadd.f32 %v1502, %v1430
    %v1528 = vadd.f32 %v1506, %v1430
    %v1529 = vadd.f32 %v1510, %v1430
    %v1530 = vadd.f32 %v1514, %v1430
    %v1531 = vsel %vm330, %v1523, 0.0
    %v1532 = vsel %vm331, %v1524, 0.0
    %v1533 = vsel %vm332, %v1525, 0.0
    %v1534 = vsel %vm333, %v1526, 0.0
    %v1535 = vsel %vm334, %v1527, 0.0
    %v1536 = vsel %vm335, %v1528, 0.0
    %v1537 = vsel %vm336, %v1529, 0.0
    %v1538 = vsel %vm337, %v1530, 0.0
    %v1539 = vsel %vm93, %v1531, 0.0
    %1540 = vadd.xlane.f32.xlu0 %v1539
    %v1541 = vpop.xlane.xlu0 %1540
    %v1542 = vsel %vm93, %v1532, 0.0
    %1543 = vadd.xlane.f32.xlu0 %v1542
    %v1544 = vpop.xlane.xlu0 %1543
    %v1545 = vsel %vm93, %v1533, 0.0
    %1546 = vadd.xlane.f32.xlu0 %v1545
    %v1547 = vpop.xlane.xlu0 %1546
    %v1548 = vsel %vm93, %v1534, 0.0
    %1549 = vadd.xlane.f32.xlu0 %v1548
    %v1550 = vpop.xlane.xlu0 %1549
    %v1551 = vsel %vm93, %v1535, 0.0
    %1552 = vadd.xlane.f32.xlu0 %v1551
    %v1553 = vpop.xlane.xlu0 %1552
    %v1554 = vsel %vm93, %v1536, 0.0
    %1555 = vadd.xlane.f32.xlu0 %v1554
    %v1556 = vpop.xlane.xlu0 %1555
    %v1557 = vsel %vm93, %v1537, 0.0
    %1558 = vadd.xlane.f32.xlu0 %v1557
    %v1559 = vpop.xlane.xlu0 %1558
    %v1560 = vsel %vm93, %v1538, 0.0
    %1561 = vadd.xlane.f32.xlu0 %v1560
    %v1562 = vpop.xlane.xlu0 %1561
    %v1571 = vlaneseq
    %v1572 = vshrl.u32 %v1571, 7
    %v1573 = vsub.s32 %v659, %v1572
    %v1574 = vrot.slane %v1541, %v1573
    %v1575 = vlaneseq
    %v1576 = vshrl.u32 %v1575, 7
    %v1577 = vsub.s32 %v659, %v1576
    %v1578 = vrot.slane %v1544, %v1577
    %v1579 = vlaneseq
    %v1580 = vshrl.u32 %v1579, 7
    %v1581 = vsub.s32 %v659, %v1580
    %v1582 = vrot.slane %v1547, %v1581
    %v1583 = vlaneseq
    %v1584 = vshrl.u32 %v1583, 7
    %v1585 = vsub.s32 %v659, %v1584
    %v1586 = vrot.slane %v1550, %v1585
    %v1587 = vlaneseq
    %v1588 = vshrl.u32 %v1587, 7
    %v1589 = vsub.s32 %v659, %v1588
    %v1590 = vrot.slane %v1553, %v1589
    %v1591 = vlaneseq
    %v1592 = vshrl.u32 %v1591, 7
    %v1593 = vsub.s32 %v659, %v1592
    %v1594 = vrot.slane %v1556, %v1593
    %v1595 = vlaneseq
    %v1596 = vshrl.u32 %v1595, 7
    %v1597 = vsub.s32 %v659, %v1596
    %v1598 = vrot.slane %v1559, %v1597
    %v1599 = vlaneseq
    %v1600 = vshrl.u32 %v1599, 7
    %v1601 = vsub.s32 %v659, %v1600
    %v1602 = vrot.slane %v1562, %v1601
    %v1603 = vsel %vm692, %v1578, %v1574
    %v1604 = vsel %vm694, %v1582, %v1603
    %v1605 = vsel %vm696, %v1586, %v1604
    %v1606 = vsel %vm698, %v1590, %v1605
    %v1607 = vsel %vm700, %v1594, %v1606
    %v1608 = vsel %vm702, %v1598, %v1607
    %v1609 = vsel %vm704, %v1602, %v1608
    %v1611 = vadd.f32 %v1344, %v1609
    %1613 = vrot.lane.b32.xlu0 %v1611, 96
    %v1614 = vpop.permute.xlu0 %1613
    %v1616 = vsel %vm339, -3.4028235e+38, %v1614
    %v1617 = vsel %vm355, %v1616, -inf
    %1618 = vmax.xlane.f32.xlu0 %v1617
    %v1619 = vpop.xlane.xlu0 %1618
    %v1620 = vsub.f32 %v1616, %v1619
    %v1621 = vmul.f32 %v1620, 1.442695
    %v1622 = vpow.pop %v1621
    %v1623 = vsel %vm355, %v1622, 0.0
    %1624 = vadd.xlane.f32.xlu0 %v1623
    %v1625 = vpop.xlane.xlu0 %1624
    %v1626 = vrcp.pop %v1625
    %v1627 = vmul.f32 %v1622, %v1626
    %v1628 = vsel %vm339, 0.0, %v1627
    %1629 = vrot.lane.b32.xlu0 %v167, 48
    %v1630 = vpop.permute.xlu0 %1629
    %v1633 = vsel %vm355, %v1628, 0
    %1635 = vmatprep.subr.mxu0 0.0
    %1636 = vmatpush1.msra.mxu0 0.0
    %1637 = vmatprep.subr.mxu0 0.0
    %1638 = vmatpush1.msra.mxu0 0.0
    %1639 = vmatprep.subr.mxu0 0.0
    %1640 = vmatpush1.msra.mxu0 0.0
    %1641 = vmatprep.subr.mxu0 0.0
    %1642 = vmatpush1.msra.mxu0 0.0
    %1643 = vmatprep.subr.mxu0 0.0
    %1644 = vmatpush1.msra.mxu0 0.0
    %1645 = vmatprep.subr.mxu0 0.0
    %1646 = vmatpush1.msra.mxu0 0.0
    %1647 = vmatprep.subr.mxu0 0.0
    %1648 = vmatpush1.msra.mxu0 0.0
    %1649 = vmatprep.subr.mxu0 0.0
    %1650 = vmatpush1.msra.mxu0 0.0
    %1651 = vmatprep.subr.mxu0 0.0
    %1652 = vmatpush1.msra.mxu0 0.0
    %1653 = vmatprep.subr.mxu0 0.0
    %1654 = vmatpush1.msra.mxu0 0.0
    %1655 = vmatprep.subr.mxu0 0.0
    %1656 = vmatpush1.msra.mxu0 0.0
    %1657 = vmatprep.subr.mxu0 0.0
    %1658 = vmatpush1.msra.mxu0 0.0
    %1659 = vmatprep.subr.mxu0 0.0
    %1660 = vmatpush1.msra.mxu0 0.0
    %1661 = vmatprep.subr.mxu0 0.0
    %1662 = vmatpush1.msra.mxu0 0.0
    %1663 = vmatprep.subr.mxu0 0.0
    %1664 = vmatpush1.msra.mxu0 0.0
    %1665 = vmatprep.subr.mxu0 0.0
    %1666 = vmatpush1.msra.mxu0 %v1630
    %1667 = vmatprep.subr.mxu0 0.0
    %1668 = vmatpush2.msra.mxu0 0.0
    %1669 = vmatprep.subr.mxu0 0.0
    %1670 = vmatpush2.msra.mxu0 0.0
    %1671 = vmatprep.subr.mxu0 0.0
    %1672 = vmatpush2.msra.mxu0 0.0
    %1673 = vmatprep.subr.mxu0 0.0
    %1674 = vmatpush2.msra.mxu0 0.0
    %1675 = vmatprep.subr.mxu0 0.0
    %1676 = vmatpush2.msra.mxu0 0.0
    %1677 = vmatprep.subr.mxu0 0.0
    %1678 = vmatpush2.msra.mxu0 0.0
    %1679 = vmatprep.subr.mxu0 0.0
    %1680 = vmatpush2.msra.mxu0 0.0
    %1681 = vmatprep.subr.mxu0 0.0
    %1682 = vmatpush2.msra.mxu0 0.0
    %1683 = vmatprep.subr.mxu0 0.0
    %1684 = vmatpush2.msra.mxu0 0.0
    %1685 = vmatprep.subr.mxu0 0.0
    %1686 = vmatpush2.msra.mxu0 0.0
    %1687 = vmatprep.subr.mxu0 0.0
    %1688 = vmatpush2.msra.mxu0 0.0
    %1689 = vmatprep.subr.mxu0 0.0
    %1690 = vmatpush2.msra.mxu0 0.0
    %1691 = vmatprep.subr.mxu0 0.0
    %1692 = vmatpush2.msra.mxu0 0.0
    %1693 = vmatprep.subr.mxu0 0.0
    %1694 = vmatpush2.msra.mxu0 0.0
    %1695 = vmatprep.subr.mxu0 0.0
    %1696 = vmatpush2.msra.mxu0 0.0
    %1697 = vmatprep.subr.mxu0 0.0
    %1698 = vmatpush2.msra.mxu0 0.0
    %1699 = vmatprep.mubr.f32.mxu0 0.0
    %1700 = vmatmul.mubr.f32.gmra.mxu0 %v1633
    %v1701 = vpop.f32.mrf.mxu0
    %v1702 = vadd.f32 0.0, %v1701
    %v1703 = vpop.f32.mrf.mxu0
    %1704 = vdwg.mxu0
    %1705 = vrot.lane.b32.xlu0 %v272, 104
    %v1706 = vpop.permute.xlu0 %1705
    %1707 = vrot.lane.b32.xlu0 %v254, 72
    %v1708 = vpop.permute.xlu0 %1707
    %1709 = vrot.lane.b32.xlu0 %v259, 72
    %v1710 = vpop.permute.xlu0 %1709
    %1711 = vrot.lane.b32.xlu0 %v264, 72
    %v1712 = vpop.permute.xlu0 %1711
    %1713 = vrot.lane.b32.xlu0 %v269, 72
    %v1714 = vpop.permute.xlu0 %1713
    %1715 = vrot.lane.b32.xlu0 %v167, 72
    %v1716 = vpop.permute.xlu0 %1715
    %v1717 = vsel %vm355, %v1706, 0
    %v1719 = vsel %vm355, %v1708, 0
    %v1721 = vsel %vm355, %v1710, 0
    %v1723 = vsel %vm355, %v1712, 0
    %v1725 = vsel %vm355, %v1714, 0
    %v1727 = vsel %vm355, %v1716, 0
    %1729 = vmatprep.subr.mxu0 0.0
    %1730 = vmatpush1.xpose.msra.mxu0 0.0
    %1731 = vmatprep.subr.mxu0 0.0
    %1732 = vmatpush1.xpose.msra.mxu0 0.0
    %1733 = vmatprep.subr.mxu0 0.0
    %1734 = vmatpush1.xpose.msra.mxu0 0.0
    %1735 = vmatprep.subr.mxu0 0.0
    %1736 = vmatpush1.xpose.msra.mxu0 0.0
    %1737 = vmatprep.subr.mxu0 0.0
    %1738 = vmatpush1.xpose.msra.mxu0 0.0
    %1739 = vmatprep.subr.mxu0 0.0
    %1740 = vmatpush1.xpose.msra.mxu0 0.0
    %1741 = vmatprep.subr.mxu0 0.0
    %1742 = vmatpush1.xpose.msra.mxu0 0.0
    %1743 = vmatprep.subr.mxu0 0.0
    %1744 = vmatpush1.xpose.msra.mxu0 0.0
    %1745 = vmatprep.subr.mxu0 0.0
    %1746 = vmatpush1.xpose.msra.mxu0 0.0
    %1747 = vmatprep.subr.mxu0 0.0
    %1748 = vmatpush1.xpose.msra.mxu0 0.0
    %1749 = vmatprep.subr.mxu0 0.0
    %1750 = vmatpush1.xpose.msra.mxu0 0.0
    %1751 = vmatprep.subr.mxu0 0.0
    %1752 = vmatpush1.xpose.msra.mxu0 %v1727
    %1753 = vmatprep.subr.mxu0 0.0
    %1754 = vmatpush1.xpose.msra.mxu0 %v1725
    %1755 = vmatprep.subr.mxu0 0.0
    %1756 = vmatpush1.xpose.msra.mxu0 %v1723
    %1757 = vmatprep.subr.mxu0 0.0
    %1758 = vmatpush1.xpose.msra.mxu0 %v1721
    %1759 = vmatprep.subr.mxu0 0.0
    %1760 = vmatpush1.xpose.msra.mxu0 %v1719
    %1761 = vmatprep.subr.mxu0 0.0
    %1762 = vmatpush2.xpose.msra.mxu0 0.0
    %1763 = vmatprep.subr.mxu0 0.0
    %1764 = vmatpush2.xpose.msra.mxu0 0.0
    %1765 = vmatprep.subr.mxu0 0.0
    %1766 = vmatpush2.xpose.msra.mxu0 0.0
    %1767 = vmatprep.subr.mxu0 0.0
    %1768 = vmatpush2.xpose.msra.mxu0 0.0
    %1769 = vmatprep.subr.mxu0 0.0
    %1770 = vmatpush2.xpose.msra.mxu0 0.0
    %1771 = vmatprep.subr.mxu0 0.0
    %1772 = vmatpush2.xpose.msra.mxu0 0.0
    %1773 = vmatprep.subr.mxu0 0.0
    %1774 = vmatpush2.xpose.msra.mxu0 0.0
    %1775 = vmatprep.subr.mxu0 0.0
    %1776 = vmatpush2.xpose.msra.mxu0 0.0
    %1777 = vmatprep.subr.mxu0 0.0
    %1778 = vmatpush2.xpose.msra.mxu0 0.0
    %1779 = vmatprep.subr.mxu0 0.0
    %1780 = vmatpush2.xpose.msra.mxu0 0.0
    %1781 = vmatprep.subr.mxu0 0.0
    %1782 = vmatpush2.xpose.msra.mxu0 0.0
    %1783 = vmatprep.subr.mxu0 0.0
    %1784 = vmatpush2.xpose.msra.mxu0 0.0
    %1785 = vmatprep.subr.mxu0 0.0
    %1786 = vmatpush2.xpose.msra.mxu0 0.0
    %1787 = vmatprep.subr.mxu0 0.0
    %1788 = vmatpush2.xpose.msra.mxu0 0.0
    %1789 = vmatprep.subr.mxu0 0.0
    %1790 = vmatpush2.xpose.msra.mxu0 0.0
    %1791 = vmatprep.subr.mxu0 0.0
    %1792 = vmatpush2.xpose.msra.mxu0 0.0
    %1793 = vmatprep.mubr.f32.mxu0 0.0
    %1794 = vmatmul.mubr.f32.gmra.mxu0 %v1717
    %v1795 = vpop.f32.mrf.mxu0
    %v1796 = vadd.f32 0.0, %v1795
    %v1797 = vpop.f32.mrf.mxu0
    %1798 = vdwg.mxu0
    %1799 = vrot.lane.b32.xlu0 %v274, 104
    %v1800 = vpop.permute.xlu0 %1799
    %1801 = vrot.lane.b32.xlu0 %v275, 104
    %v1802 = vpop.permute.xlu0 %1801
    %1803 = vrot.lane.b32.xlu0 %v276, 104
    %v1804 = vpop.permute.xlu0 %1803
    %1805 = vrot.lane.b32.xlu0 %v277, 104
    %v1806 = vpop.permute.xlu0 %1805
    %v1807 = vsel %vm355, %v1800, 0
    %v1809 = vsel %vm355, %v1802, 0
    %v1811 = vsel %vm355, %v1804, 0
    %v1813 = vsel %vm355, %v1806, 0
    %1815 = vmatprep.subr.mxu0 0.0
    %1816 = vmatpush1.xpose.msra.mxu0 0.0
    %1817 = vmatprep.subr.mxu0 0.0
    %1818 = vmatpush1.xpose.msra.mxu0 0.0
    %1819 = vmatprep.subr.mxu0 0.0
    %1820 = vmatpush1.xpose.msra.mxu0 0.0
    %1821 = vmatprep.subr.mxu0 0.0
    %1822 = vmatpush1.xpose.msra.mxu0 0.0
    %1823 = vmatprep.subr.mxu0 0.0
    %1824 = vmatpush1.xpose.msra.mxu0 0.0
    %1825 = vmatprep.subr.mxu0 0.0
    %1826 = vmatpush1.xpose.msra.mxu0 0.0
    %1827 = vmatprep.subr.mxu0 0.0
    %1828 = vmatpush1.xpose.msra.mxu0 0.0
    %1829 = vmatprep.subr.mxu0 0.0
    %1830 = vmatpush1.xpose.msra.mxu0 0.0
    %1831 = vmatprep.subr.mxu0 0.0
    %1832 = vmatpush1.xpose.msra.mxu0 0.0
    %1833 = vmatprep.subr.mxu0 0.0
    %1834 = vmatpush1.xpose.msra.mxu0 0.0
    %1835 = vmatprep.subr.mxu0 0.0
    %1836 = vmatpush1.xpose.msra.mxu0 0.0
    %1837 = vmatprep.subr.mxu0 0.0
    %1838 = vmatpush1.xpose.msra.mxu0 0.0
    %1839 = vmatprep.subr.mxu0 0.0
    %1840 = vmatpush1.xpose.msra.mxu0 %v1813
    %1841 = vmatprep.subr.mxu0 0.0
    %1842 = vmatpush1.xpose.msra.mxu0 %v1811
    %1843 = vmatprep.subr.mxu0 0.0
    %1844 = vmatpush1.xpose.msra.mxu0 %v1809
    %1845 = vmatprep.subr.mxu0 0.0
    %1846 = vmatpush1.xpose.msra.mxu0 %v1807
    %1847 = vmatprep.subr.mxu0 0.0
    %1848 = vmatpush2.xpose.msra.mxu0 0.0
    %1849 = vmatprep.subr.mxu0 0.0
    %1850 = vmatpush2.xpose.msra.mxu0 0.0
    %1851 = vmatprep.subr.mxu0 0.0
    %1852 = vmatpush2.xpose.msra.mxu0 0.0
    %1853 = vmatprep.subr.mxu0 0.0
    %1854 = vmatpush2.xpose.msra.mxu0 0.0
    %1855 = vmatprep.subr.mxu0 0.0
    %1856 = vmatpush2.xpose.msra.mxu0 0.0
    %1857 = vmatprep.subr.mxu0 0.0
    %1858 = vmatpush2.xpose.msra.mxu0 0.0
    %1859 = vmatprep.subr.mxu0 0.0
    %1860 = vmatpush2.xpose.msra.mxu0 0.0
    %1861 = vmatprep.subr.mxu0 0.0
    %1862 = vmatpush2.xpose.msra.mxu0 0.0
    %1863 = vmatprep.subr.mxu0 0.0
    %1864 = vmatpush2.xpose.msra.mxu0 0.0
    %1865 = vmatprep.subr.mxu0 0.0
    %1866 = vmatpush2.xpose.msra.mxu0 0.0
    %1867 = vmatprep.subr.mxu0 0.0
    %1868 = vmatpush2.xpose.msra.mxu0 0.0
    %1869 = vmatprep.subr.mxu0 0.0
    %1870 = vmatpush2.xpose.msra.mxu0 0.0
    %1871 = vmatprep.subr.mxu0 0.0
    %1872 = vmatpush2.xpose.msra.mxu0 0.0
    %1873 = vmatprep.subr.mxu0 0.0
    %1874 = vmatpush2.xpose.msra.mxu0 0.0
    %1875 = vmatprep.subr.mxu0 0.0
    %1876 = vmatpush2.xpose.msra.mxu0 0.0
    %1877 = vmatprep.subr.mxu0 0.0
    %1878 = vmatpush2.xpose.msra.mxu0 0.0
    %1879 = vmatprep.mubr.f32.mxu0 0.0
    %1880 = vmatmul.mubr.f32.gmra.mxu0 %v1727
    %v1881 = vpop.f32.mrf.mxu0
    %v1882 = vadd.f32 0.0, %v1881
    %v1883 = vpop.f32.mrf.mxu0
    %1884 = vdwg.mxu0
    %v1886 = vcombine.high %v1796, %v1796
    %v1888 = vunpack.c.l.s4 1966171168
    %v1889 = vunpack.c.0.s8 %v1888
    %v1890 = vlaneseq
    %v1891 = vshrl.u32 %v1890, 7
    %v1892 = vsub.s32 %v1889, %v1891
    %v1893 = vrot.slane %v1796, %v1892
    %v1895 = vunpack.c.l.s4 1966171168
    %v1896 = vunpack.c.0.s8 %v1895
    %v1897 = vlaneseq
    %v1898 = vshrl.u32 %v1897, 7
    %v1899 = vsub.s32 %v1896, %v1898
    %v1900 = vrot.slane %v1886, %v1899
    %v1901 = vcombine.high %v1893, %v1893
    %v1902 = vcombine.high %v1900, %v1900
    %v1904 = vunpack.c.l.s4 1966171168
    %v1905 = vunpack.c.0.s8 %v1904
    %v1906 = vlaneseq
    %v1907 = vshrl.u32 %v1906, 7
    %v1908 = vsub.s32 %v1905, %v1907
    %v1909 = vrot.slane %v1893, %v1908
    %v1911 = vunpack.c.l.s4 1966171168
    %v1912 = vunpack.c.0.s8 %v1911
    %v1913 = vlaneseq
    %v1914 = vshrl.u32 %v1913, 7
    %v1915 = vsub.s32 %v1912, %v1914
    %v1916 = vrot.slane %v1900, %v1915
    %v1918 = vunpack.c.l.s4 1966171168
    %v1919 = vunpack.c.0.s8 %v1918
    %v1920 = vlaneseq
    %v1921 = vshrl.u32 %v1920, 7
    %v1922 = vsub.s32 %v1919, %v1921
    %v1923 = vrot.slane %v1901, %v1922
    %v1925 = vunpack.c.l.s4 1966171168
    %v1926 = vunpack.c.0.s8 %v1925
    %v1927 = vlaneseq
    %v1928 = vshrl.u32 %v1927, 7
    %v1929 = vsub.s32 %v1926, %v1928
    %v1930 = vrot.slane %v1902, %v1929
    %v1931 = vcombine.high %v1909, %v1909
    %v1932 = vcombine.high %v1916, %v1916
    %v1933 = vcombine.high %v1923, %v1923
    %v1934 = vcombine.high %v1930, %v1930
    %v1935 = vlaneseq
    %v1936 = vshrl.u32 %v1935, 7
    %v1937 = vsub.s32 0, %v1936
    %v1938 = vrot.slane %v1909, %v1937
    %v1939 = vlaneseq
    %v1940 = vshrl.u32 %v1939, 7
    %v1941 = vsub.s32 0, %v1940
    %v1942 = vrot.slane %v1923, %v1941
    %v1943 = vlaneseq
    %v1944 = vshrl.u32 %v1943, 7
    %v1945 = vsub.s32 0, %v1944
    %v1946 = vrot.slane %v1931, %v1945
    %v1947 = vlaneseq
    %v1948 = vshrl.u32 %v1947, 7
    %v1949 = vsub.s32 0, %v1948
    %v1950 = vrot.slane %v1933, %v1949
    %v1951 = vlaneseq
    %v1952 = vshrl.u32 %v1951, 7
    %v1953 = vsub.s32 0, %v1952
    %v1954 = vrot.slane %v1916, %v1953
    %v1955 = vlaneseq
    %v1956 = vshrl.u32 %v1955, 7
    %v1957 = vsub.s32 0, %v1956
    %v1958 = vrot.slane %v1930, %v1957
    %v1959 = vlaneseq
    %v1960 = vshrl.u32 %v1959, 7
    %v1961 = vsub.s32 0, %v1960
    %v1962 = vrot.slane %v1932, %v1961
    %v1963 = vlaneseq
    %v1964 = vshrl.u32 %v1963, 7
    %v1965 = vsub.s32 0, %v1964
    %v1966 = vrot.slane %v1934, %v1965
    %v1975 = vadd.f32 %v1938, %v1882
    %v1976 = vadd.f32 %v1942, %v1882
    %v1977 = vadd.f32 %v1946, %v1882
    %v1978 = vadd.f32 %v1950, %v1882
    %v1979 = vadd.f32 %v1954, %v1882
    %v1980 = vadd.f32 %v1958, %v1882
    %v1981 = vadd.f32 %v1962, %v1882
    %v1982 = vadd.f32 %v1966, %v1882
    %v1983 = vsel %vm330, %v1975, 0.0
    %v1984 = vsel %vm331, %v1976, 0.0
    %v1985 = vsel %vm332, %v1977, 0.0
    %v1986 = vsel %vm333, %v1978, 0.0
    %v1987 = vsel %vm334, %v1979, 0.0
    %v1988 = vsel %vm335, %v1980, 0.0
    %v1989 = vsel %vm336, %v1981, 0.0
    %v1990 = vsel %vm337, %v1982, 0.0
    %v1991 = vsel %vm93, %v1983, 0.0
    %1992 = vadd.xlane.f32.xlu0 %v1991
    %v1993 = vpop.xlane.xlu0 %1992
    %v1994 = vsel %vm93, %v1984, 0.0
    %1995 = vadd.xlane.f32.xlu0 %v1994
    %v1996 = vpop.xlane.xlu0 %1995
    %v1997 = vsel %vm93, %v1985, 0.0
    %1998 = vadd.xlane.f32.xlu0 %v1997
    %v1999 = vpop.xlane.xlu0 %1998
    %v2000 = vsel %vm93, %v1986, 0.0
    %2001 = vadd.xlane.f32.xlu0 %v2000
    %v2002 = vpop.xlane.xlu0 %2001
    %v2003 = vsel %vm93, %v1987, 0.0
    %2004 = vadd.xlane.f32.xlu0 %v2003
    %v2005 = vpop.xlane.xlu0 %2004
    %v2006 = vsel %vm93, %v1988, 0.0
    %2007 = vadd.xlane.f32.xlu0 %v2006
    %v2008 = vpop.xlane.xlu0 %2007
    %v2009 = vsel %vm93, %v1989, 0.0
    %2010 = vadd.xlane.f32.xlu0 %v2009
    %v2011 = vpop.xlane.xlu0 %2010
    %v2012 = vsel %vm93, %v1990, 0.0
    %2013 = vadd.xlane.f32.xlu0 %v2012
    %v2014 = vpop.xlane.xlu0 %2013
    %v2023 = vlaneseq
    %v2024 = vshrl.u32 %v2023, 7
    %v2025 = vsub.s32 %v659, %v2024
    %v2026 = vrot.slane %v1993, %v2025
    %v2027 = vlaneseq
    %v2028 = vshrl.u32 %v2027, 7
    %v2029 = vsub.s32 %v659, %v2028
    %v2030 = vrot.slane %v1996, %v2029
    %v2031 = vlaneseq
    %v2032 = vshrl.u32 %v2031, 7
    %v2033 = vsub.s32 %v659, %v2032
    %v2034 = vrot.slane %v1999, %v2033
    %v2035 = vlaneseq
    %v2036 = vshrl.u32 %v2035, 7
    %v2037 = vsub.s32 %v659, %v2036
    %v2038 = vrot.slane %v2002, %v2037
    %v2039 = vlaneseq
    %v2040 = vshrl.u32 %v2039, 7
    %v2041 = vsub.s32 %v659, %v2040
    %v2042 = vrot.slane %v2005, %v2041
    %v2043 = vlaneseq
    %v2044 = vshrl.u32 %v2043, 7
    %v2045 = vsub.s32 %v659, %v2044
    %v2046 = vrot.slane %v2008, %v2045
    %v2047 = vlaneseq
    %v2048 = vshrl.u32 %v2047, 7
    %v2049 = vsub.s32 %v659, %v2048
    %v2050 = vrot.slane %v2011, %v2049
    %v2051 = vlaneseq
    %v2052 = vshrl.u32 %v2051, 7
    %v2053 = vsub.s32 %v659, %v2052
    %v2054 = vrot.slane %v2014, %v2053
    %v2055 = vsel %vm692, %v2030, %v2026
    %v2056 = vsel %vm694, %v2034, %v2055
    %v2057 = vsel %vm696, %v2038, %v2056
    %v2058 = vsel %vm698, %v2042, %v2057
    %v2059 = vsel %vm700, %v2046, %v2058
    %v2060 = vsel %vm702, %v2050, %v2059
    %v2061 = vsel %vm704, %v2054, %v2060
    %v2063 = vadd.f32 %v1796, %v2061
    %2065 = vrot.lane.b32.xlu0 %v2063, 96
    %v2066 = vpop.permute.xlu0 %2065
    %v2068 = vsel %vm339, -3.4028235e+38, %v2066
    %v2069 = vsel %vm355, %v2068, -inf
    %2070 = vmax.xlane.f32.xlu0 %v2069
    %v2071 = vpop.xlane.xlu0 %2070
    %v2072 = vsub.f32 %v2068, %v2071
    %v2073 = vmul.f32 %v2072, 1.442695
    %v2074 = vpow.pop %v2073
    %v2075 = vsel %vm355, %v2074, 0.0
    %2076 = vadd.xlane.f32.xlu0 %v2075
    %v2077 = vpop.xlane.xlu0 %2076
    %v2078 = vrcp.pop %v2077
    %v2079 = vmul.f32 %v2074, %v2078
    %v2080 = vsel %vm339, 0.0, %v2079
    %2081 = vrot.lane.b32.xlu0 %v167, 40
    %v2082 = vpop.permute.xlu0 %2081
    %v2085 = vsel %vm355, %v2080, 0
    %2087 = vmatprep.subr.mxu0 0.0
    %2088 = vmatpush1.msra.mxu0 0.0
    %2089 = vmatprep.subr.mxu0 0.0
    %2090 = vmatpush1.msra.mxu0 0.0
    %2091 = vmatprep.subr.mxu0 0.0
    %2092 = vmatpush1.msra.mxu0 0.0
    %2093 = vmatprep.subr.mxu0 0.0
    %2094 = vmatpush1.msra.mxu0 0.0
    %2095 = vmatprep.subr.mxu0 0.0
    %2096 = vmatpush1.msra.mxu0 0.0
    %2097 = vmatprep.subr.mxu0 0.0
    %2098 = vmatpush1.msra.mxu0 0.0
    %2099 = vmatprep.subr.mxu0 0.0
    %2100 = vmatpush1.msra.mxu0 0.0
    %2101 = vmatprep.subr.mxu0 0.0
    %2102 = vmatpush1.msra.mxu0 0.0
    %2103 = vmatprep.subr.mxu0 0.0
    %2104 = vmatpush1.msra.mxu0 0.0
    %2105 = vmatprep.subr.mxu0 0.0
    %2106 = vmatpush1.msra.mxu0 0.0
    %2107 = vmatprep.subr.mxu0 0.0
    %2108 = vmatpush1.msra.mxu0 0.0
    %2109 = vmatprep.subr.mxu0 0.0
    %2110 = vmatpush1.msra.mxu0 0.0
    %2111 = vmatprep.subr.mxu0 0.0
    %2112 = vmatpush1.msra.mxu0 0.0
    %2113 = vmatprep.subr.mxu0 0.0
    %2114 = vmatpush1.msra.mxu0 0.0
    %2115 = vmatprep.subr.mxu0 0.0
    %2116 = vmatpush1.msra.mxu0 0.0
    %2117 = vmatprep.subr.mxu0 0.0
    %2118 = vmatpush1.msra.mxu0 %v2082
    %2119 = vmatprep.subr.mxu0 0.0
    %2120 = vmatpush2.msra.mxu0 0.0
    %2121 = vmatprep.subr.mxu0 0.0
    %2122 = vmatpush2.msra.mxu0 0.0
    %2123 = vmatprep.subr.mxu0 0.0
    %2124 = vmatpush2.msra.mxu0 0.0
    %2125 = vmatprep.subr.mxu0 0.0
    %2126 = vmatpush2.msra.mxu0 0.0
    %2127 = vmatprep.subr.mxu0 0.0
    %2128 = vmatpush2.msra.mxu0 0.0
    %2129 = vmatprep.subr.mxu0 0.0
    %2130 = vmatpush2.msra.mxu0 0.0
    %2131 = vmatprep.subr.mxu0 0.0
    %2132 = vmatpush2.msra.mxu0 0.0
    %2133 = vmatprep.subr.mxu0 0.0
    %2134 = vmatpush2.msra.mxu0 0.0
    %2135 = vmatprep.subr.mxu0 0.0
    %2136 = vmatpush2.msra.mxu0 0.0
    %2137 = vmatprep.subr.mxu0 0.0
    %2138 = vmatpush2.msra.mxu0 0.0
    %2139 = vmatprep.subr.mxu0 0.0
    %2140 = vmatpush2.msra.mxu0 0.0
    %2141 = vmatprep.subr.mxu0 0.0
    %2142 = vmatpush2.msra.mxu0 0.0
    %2143 = vmatprep.subr.mxu0 0.0
    %2144 = vmatpush2.msra.mxu0 0.0
    %2145 = vmatprep.subr.mxu0 0.0
    %2146 = vmatpush2.msra.mxu0 0.0
    %2147 = vmatprep.subr.mxu0 0.0
    %2148 = vmatpush2.msra.mxu0 0.0
    %2149 = vmatprep.subr.mxu0 0.0
    %2150 = vmatpush2.msra.mxu0 0.0
    %2151 = vmatprep.mubr.f32.mxu0 0.0
    %2152 = vmatmul.mubr.f32.gmra.mxu0 %v2085
    %v2153 = vpop.f32.mrf.mxu0
    %v2154 = vadd.f32 0.0, %v2153
    %v2155 = vpop.f32.mrf.mxu0
    %2156 = vdwg.mxu0
    %2158 = vrot.lane.b32.xlu0 %v1250, 8
    %v2159 = vpop.permute.xlu0 %2158
    %2162 = vrot.lane.b32.xlu0 %v1702, 16
    %v2163 = vpop.permute.xlu0 %2162
    %2166 = vrot.lane.b32.xlu0 %v2154, 24
    %v2167 = vpop.permute.xlu0 %2166
    %v2169 = vsel %vm355, %v798, %v2159
    %vm2170 = vcmask 130048
    %v2171 = vsel %vm2170, %v2169, %v2163
    %vm2172 = vcmask 195584
    %v2173 = vsel %vm2172, %v2171, %v2167
    %2174 = vst.msk [vmem:[#allocation10] sm:$0xff] %vm93, %v2173
    %s2175 = scalar_lea.vmem [#allocation8], 8
    %v2176 = vld [vmem:[%s2175] sm:$0xff]
    %vm2177 = vcmp.eq.f32.partialorder %v2176, 0.0
    %2179 = vrot.lane.b32.xlu0 %v172, 96
    %v2180 = vpop.permute.xlu0 %2179
    %v2182 = vsel %vm355, %v273, 0
    %v2184 = vsel %vm355, %v2180, 0
    %2186 = vmatprep.subr.mxu0 0.0
    %2187 = vmatpush1.xpose.msra.mxu0 0.0
    %2188 = vmatprep.subr.mxu0 0.0
    %2189 = vmatpush1.xpose.msra.mxu0 0.0
    %2190 = vmatprep.subr.mxu0 0.0
    %2191 = vmatpush1.xpose.msra.mxu0 0.0
    %2192 = vmatprep.subr.mxu0 0.0
    %2193 = vmatpush1.xpose.msra.mxu0 0.0
    %2194 = vmatprep.subr.mxu0 0.0
    %2195 = vmatpush1.xpose.msra.mxu0 0.0
    %2196 = vmatprep.subr.mxu0 0.0
    %2197 = vmatpush1.xpose.msra.mxu0 0.0
    %2198 = vmatprep.subr.mxu0 0.0
    %2199 = vmatpush1.xpose.msra.mxu0 0.0
    %2200 = vmatprep.subr.mxu0 0.0
    %2201 = vmatpush1.xpose.msra.mxu0 0.0
    %2202 = vmatprep.subr.mxu0 0.0
    %2203 = vmatpush1.xpose.msra.mxu0 0.0
    %2204 = vmatprep.subr.mxu0 0.0
    %2205 = vmatpush1.xpose.msra.mxu0 0.0
    %2206 = vmatprep.subr.mxu0 0.0
    %2207 = vmatpush1.xpose.msra.mxu0 0.0
    %2208 = vmatprep.subr.mxu0 0.0
    %2209 = vmatpush1.xpose.msra.mxu0 %v2184
    %2210 = vmatprep.subr.mxu0 0.0
    %2211 = vmatpush1.xpose.msra.mxu0 %v365
    %2212 = vmatprep.subr.mxu0 0.0
    %2213 = vmatpush1.xpose.msra.mxu0 %v363
    %2214 = vmatprep.subr.mxu0 0.0
    %2215 = vmatpush1.xpose.msra.mxu0 %v361
    %2216 = vmatprep.subr.mxu0 0.0
    %2217 = vmatpush1.xpose.msra.mxu0 %v359
    %2218 = vmatprep.subr.mxu0 0.0
    %2219 = vmatpush2.xpose.msra.mxu0 0.0
    %2220 = vmatprep.subr.mxu0 0.0
    %2221 = vmatpush2.xpose.msra.mxu0 0.0
    %2222 = vmatprep.subr.mxu0 0.0
    %2223 = vmatpush2.xpose.msra.mxu0 0.0
    %2224 = vmatprep.subr.mxu0 0.0
    %2225 = vmatpush2.xpose.msra.mxu0 0.0
    %2226 = vmatprep.subr.mxu0 0.0
    %2227 = vmatpush2.xpose.msra.mxu0 0.0
    %2228 = vmatprep.subr.mxu0 0.0
    %2229 = vmatpush2.xpose.msra.mxu0 0.0
    %2230 = vmatprep.subr.mxu0 0.0
    %2231 = vmatpush2.xpose.msra.mxu0 0.0
    %2232 = vmatprep.subr.mxu0 0.0
    %2233 = vmatpush2.xpose.msra.mxu0 0.0
    %2234 = vmatprep.subr.mxu0 0.0
    %2235 = vmatpush2.xpose.msra.mxu0 0.0
    %2236 = vmatprep.subr.mxu0 0.0
    %2237 = vmatpush2.xpose.msra.mxu0 0.0
    %2238 = vmatprep.subr.mxu0 0.0
    %2239 = vmatpush2.xpose.msra.mxu0 0.0
    %2240 = vmatprep.subr.mxu0 0.0
    %2241 = vmatpush2.xpose.msra.mxu0 0.0
    %2242 = vmatprep.subr.mxu0 0.0
    %2243 = vmatpush2.xpose.msra.mxu0 0.0
    %2244 = vmatprep.subr.mxu0 0.0
    %2245 = vmatpush2.xpose.msra.mxu0 0.0
    %2246 = vmatprep.subr.mxu0 0.0
    %2247 = vmatpush2.xpose.msra.mxu0 0.0
    %2248 = vmatprep.subr.mxu0 0.0
    %2249 = vmatpush2.xpose.msra.mxu0 0.0
    %2250 = vmatprep.mubr.f32.mxu0 0.0
    %2251 = vmatmul.mubr.f32.gmra.mxu0 %v2182
    %v2252 = vpop.f32.mrf.mxu0
    %v2253 = vadd.f32 0.0, %v2252
    %v2254 = vpop.f32.mrf.mxu0
    %2255 = vdwg.mxu0
    %2256 = vmatprep.subr.mxu0 0.0
    %2257 = vmatpush1.xpose.msra.mxu0 0.0
    %2258 = vmatprep.subr.mxu0 0.0
    %2259 = vmatpush1.xpose.msra.mxu0 0.0
    %2260 = vmatprep.subr.mxu0 0.0
    %2261 = vmatpush1.xpose.msra.mxu0 0.0
    %2262 = vmatprep.subr.mxu0 0.0
    %2263 = vmatpush1.xpose.msra.mxu0 0.0
    %2264 = vmatprep.subr.mxu0 0.0
    %2265 = vmatpush1.xpose.msra.mxu0 0.0
    %2266 = vmatprep.subr.mxu0 0.0
    %2267 = vmatpush1.xpose.msra.mxu0 0.0
    %2268 = vmatprep.subr.mxu0 0.0
    %2269 = vmatpush1.xpose.msra.mxu0 0.0
    %2270 = vmatprep.subr.mxu0 0.0
    %2271 = vmatpush1.xpose.msra.mxu0 0.0
    %2272 = vmatprep.subr.mxu0 0.0
    %2273 = vmatpush1.xpose.msra.mxu0 0.0
    %2274 = vmatprep.subr.mxu0 0.0
    %2275 = vmatpush1.xpose.msra.mxu0 0.0
    %2276 = vmatprep.subr.mxu0 0.0
    %2277 = vmatpush1.xpose.msra.mxu0 0.0
    %2278 = vmatprep.subr.mxu0 0.0
    %2279 = vmatpush1.xpose.msra.mxu0 0.0
    %2280 = vmatprep.subr.mxu0 0.0
    %2281 = vmatpush1.xpose.msra.mxu0 %v449
    %2282 = vmatprep.subr.mxu0 0.0
    %2283 = vmatpush1.xpose.msra.mxu0 %v446
    %2284 = vmatprep.subr.mxu0 0.0
    %2285 = vmatpush1.xpose.msra.mxu0 %v443
    %2286 = vmatprep.subr.mxu0 0.0
    %2287 = vmatpush1.xpose.msra.mxu0 %v440
    %2288 = vmatprep.subr.mxu0 0.0
    %2289 = vmatpush2.xpose.msra.mxu0 0.0
    %2290 = vmatprep.subr.mxu0 0.0
    %2291 = vmatpush2.xpose.msra.mxu0 0.0
    %2292 = vmatprep.subr.mxu0 0.0
    %2293 = vmatpush2.xpose.msra.mxu0 0.0
    %2294 = vmatprep.subr.mxu0 0.0
    %2295 = vmatpush2.xpose.msra.mxu0 0.0
    %2296 = vmatprep.subr.mxu0 0.0
    %2297 = vmatpush2.xpose.msra.mxu0 0.0
    %2298 = vmatprep.subr.mxu0 0.0
    %2299 = vmatpush2.xpose.msra.mxu0 0.0
    %2300 = vmatprep.subr.mxu0 0.0
    %2301 = vmatpush2.xpose.msra.mxu0 0.0
    %2302 = vmatprep.subr.mxu0 0.0
    %2303 = vmatpush2.xpose.msra.mxu0 0.0
    %2304 = vmatprep.subr.mxu0 0.0
    %2305 = vmatpush2.xpose.msra.mxu0 0.0
    %2306 = vmatprep.subr.mxu0 0.0
    %2307 = vmatpush2.xpose.msra.mxu0 0.0
    %2308 = vmatprep.subr.mxu0 0.0
    %2309 = vmatpush2.xpose.msra.mxu0 0.0
    %2310 = vmatprep.subr.mxu0 0.0
    %2311 = vmatpush2.xpose.msra.mxu0 0.0
    %2312 = vmatprep.subr.mxu0 0.0
    %2313 = vmatpush2.xpose.msra.mxu0 0.0
    %2314 = vmatprep.subr.mxu0 0.0
    %2315 = vmatpush2.xpose.msra.mxu0 0.0
    %2316 = vmatprep.subr.mxu0 0.0
    %2317 = vmatpush2.xpose.msra.mxu0 0.0
    %2318 = vmatprep.subr.mxu0 0.0
    %2319 = vmatpush2.xpose.msra.mxu0 0.0
    %2320 = vmatprep.mubr.f32.mxu0 0.0
    %2321 = vmatmul.mubr.f32.gmra.mxu0 %v2184
    %v2322 = vpop.f32.mrf.mxu0
    %v2323 = vadd.f32 0.0, %v2322
    %v2324 = vpop.f32.mrf.mxu0
    %2325 = vdwg.mxu0
    %v2327 = vcombine.high %v2253, %v2253
    %v2329 = vunpack.c.l.s4 1966171168
    %v2330 = vunpack.c.0.s8 %v2329
    %v2331 = vlaneseq
    %v2332 = vshrl.u32 %v2331, 7
    %v2333 = vsub.s32 %v2330, %v2332
    %v2334 = vrot.slane %v2253, %v2333
    %v2336 = vunpack.c.l.s4 1966171168
    %v2337 = vunpack.c.0.s8 %v2336
    %v2338 = vlaneseq
    %v2339 = vshrl.u32 %v2338, 7
    %v2340 = vsub.s32 %v2337, %v2339
    %v2341 = vrot.slane %v2327, %v2340
    %v2342 = vcombine.high %v2334, %v2334
    %v2343 = vcombine.high %v2341, %v2341
    %v2345 = vunpack.c.l.s4 1966171168
    %v2346 = vunpack.c.0.s8 %v2345
    %v2347 = vlaneseq
    %v2348 = vshrl.u32 %v2347, 7
    %v2349 = vsub.s32 %v2346, %v2348
    %v2350 = vrot.slane %v2334, %v2349
    %v2352 = vunpack.c.l.s4 1966171168
    %v2353 = vunpack.c.0.s8 %v2352
    %v2354 = vlaneseq
    %v2355 = vshrl.u32 %v2354, 7
    %v2356 = vsub.s32 %v2353, %v2355
    %v2357 = vrot.slane %v2341, %v2356
    %v2359 = vunpack.c.l.s4 1966171168
    %v2360 = vunpack.c.0.s8 %v2359
    %v2361 = vlaneseq
    %v2362 = vshrl.u32 %v2361, 7
    %v2363 = vsub.s32 %v2360, %v2362
    %v2364 = vrot.slane %v2342, %v2363
    %v2366 = vunpack.c.l.s4 1966171168
    %v2367 = vunpack.c.0.s8 %v2366
    %v2368 = vlaneseq
    %v2369 = vshrl.u32 %v2368, 7
    %v2370 = vsub.s32 %v2367, %v2369
    %v2371 = vrot.slane %v2343, %v2370
    %v2372 = vcombine.high %v2350, %v2350
    %v2373 = vcombine.high %v2357, %v2357
    %v2374 = vcombine.high %v2364, %v2364
    %v2375 = vcombine.high %v2371, %v2371
    %v2376 = vlaneseq
    %v2377 = vshrl.u32 %v2376, 7
    %v2378 = vsub.s32 0, %v2377
    %v2379 = vrot.slane %v2350, %v2378
    %v2380 = vlaneseq
    %v2381 = vshrl.u32 %v2380, 7
    %v2382 = vsub.s32 0, %v2381
    %v2383 = vrot.slane %v2364, %v2382
    %v2384 = vlaneseq
    %v2385 = vshrl.u32 %v2384, 7
    %v2386 = vsub.s32 0, %v2385
    %v2387 = vrot.slane %v2372, %v2386
    %v2388 = vlaneseq
    %v2389 = vshrl.u32 %v2388, 7
    %v2390 = vsub.s32 0, %v2389
    %v2391 = vrot.slane %v2374, %v2390
    %v2392 = vlaneseq
    %v2393 = vshrl.u32 %v2392, 7
    %v2394 = vsub.s32 0, %v2393
    %v2395 = vrot.slane %v2357, %v2394
    %v2396 = vlaneseq
    %v2397 = vshrl.u32 %v2396, 7
    %v2398 = vsub.s32 0, %v2397
    %v2399 = vrot.slane %v2371, %v2398
    %v2400 = vlaneseq
    %v2401 = vshrl.u32 %v2400, 7
    %v2402 = vsub.s32 0, %v2401
    %v2403 = vrot.slane %v2373, %v2402
    %v2404 = vlaneseq
    %v2405 = vshrl.u32 %v2404, 7
    %v2406 = vsub.s32 0, %v2405
    %v2407 = vrot.slane %v2375, %v2406
    %v2416 = vadd.f32 %v2379, %v2323
    %v2417 = vadd.f32 %v2383, %v2323
    %v2418 = vadd.f32 %v2387, %v2323
    %v2419 = vadd.f32 %v2391, %v2323
    %v2420 = vadd.f32 %v2395, %v2323
    %v2421 = vadd.f32 %v2399, %v2323
    %v2422 = vadd.f32 %v2403, %v2323
    %v2423 = vadd.f32 %v2407, %v2323
    %v2424 = vsel %vm330, %v2416, 0.0
    %v2425 = vsel %vm331, %v2417, 0.0
    %v2426 = vsel %vm332, %v2418, 0.0
    %v2427 = vsel %vm333, %v2419, 0.0
    %v2428 = vsel %vm334, %v2420, 0.0
    %v2429 = vsel %vm335, %v2421, 0.0
    %v2430 = vsel %vm336, %v2422, 0.0
    %v2431 = vsel %vm337, %v2423, 0.0
    %v2432 = vsel %vm93, %v2424, 0.0
    %2433 = vadd.xlane.f32.xlu0 %v2432
    %v2434 = vpop.xlane.xlu0 %2433
    %v2435 = vsel %vm93, %v2425, 0.0
    %2436 = vadd.xlane.f32.xlu0 %v2435
    %v2437 = vpop.xlane.xlu0 %2436
    %v2438 = vsel %vm93, %v2426, 0.0
    %2439 = vadd.xlane.f32.xlu0 %v2438
    %v2440 = vpop.xlane.xlu0 %2439
    %v2441 = vsel %vm93, %v2427, 0.0
    %2442 = vadd.xlane.f32.xlu0 %v2441
    %v2443 = vpop.xlane.xlu0 %2442
    %v2444 = vsel %vm93, %v2428, 0.0
    %2445 = vadd.xlane.f32.xlu0 %v2444
    %v2446 = vpop.xlane.xlu0 %2445
    %v2447 = vsel %vm93, %v2429, 0.0
    %2448 = vadd.xlane.f32.xlu0 %v2447
    %v2449 = vpop.xlane.xlu0 %2448
    %v2450 = vsel %vm93, %v2430, 0.0
    %2451 = vadd.xlane.f32.xlu0 %v2450
    %v2452 = vpop.xlane.xlu0 %2451
    %v2453 = vsel %vm93, %v2431, 0.0
    %2454 = vadd.xlane.f32.xlu0 %v2453
    %v2455 = vpop.xlane.xlu0 %2454
    %v2464 = vlaneseq
    %v2465 = vshrl.u32 %v2464, 7
    %v2466 = vsub.s32 %v659, %v2465
    %v2467 = vrot.slane %v2434, %v2466
    %v2468 = vlaneseq
    %v2469 = vshrl.u32 %v2468, 7
    %v2470 = vsub.s32 %v659, %v2469
    %v2471 = vrot.slane %v2437, %v2470
    %v2472 = vlaneseq
    %v2473 = vshrl.u32 %v2472, 7
    %v2474 = vsub.s32 %v659, %v2473
    %v2475 = vrot.slane %v2440, %v2474
    %v2476 = vlaneseq
    %v2477 = vshrl.u32 %v2476, 7
    %v2478 = vsub.s32 %v659, %v2477
    %v2479 = vrot.slane %v2443, %v2478
    %v2480 = vlaneseq
    %v2481 = vshrl.u32 %v2480, 7
    %v2482 = vsub.s32 %v659, %v2481
    %v2483 = vrot.slane %v2446, %v2482
    %v2484 = vlaneseq
    %v2485 = vshrl.u32 %v2484, 7
    %v2486 = vsub.s32 %v659, %v2485
    %v2487 = vrot.slane %v2449, %v2486
    %v2488 = vlaneseq
    %v2489 = vshrl.u32 %v2488, 7
    %v2490 = vsub.s32 %v659, %v2489
    %v2491 = vrot.slane %v2452, %v2490
    %v2492 = vlaneseq
    %v2493 = vshrl.u32 %v2492, 7
    %v2494 = vsub.s32 %v659, %v2493
    %v2495 = vrot.slane %v2455, %v2494
    %v2496 = vsel %vm692, %v2471, %v2467
    %v2497 = vsel %vm694, %v2475, %v2496
    %v2498 = vsel %vm696, %v2479, %v2497
    %v2499 = vsel %vm698, %v2483, %v2498
    %v2500 = vsel %vm700, %v2487, %v2499
    %v2501 = vsel %vm702, %v2491, %v2500
    %v2502 = vsel %vm704, %v2495, %v2501
    %v2504 = vadd.f32 %v2253, %v2502
    %2506 = vrot.lane.b32.xlu0 %v2504, 96
    %v2507 = vpop.permute.xlu0 %2506
    %v2509 = vsel %vm2177, -3.4028235e+38, %v2507
    %v2510 = vsel %vm355, %v2509, -inf
    %2511 = vmax.xlane.f32.xlu0 %v2510
    %v2512 = vpop.xlane.xlu0 %2511
    %v2513 = vsub.f32 %v2509, %v2512
    %v2514 = vmul.f32 %v2513, 1.442695
    %v2515 = vpow.pop %v2514
    %v2516 = vsel %vm355, %v2515, 0.0
    %2517 = vadd.xlane.f32.xlu0 %v2516
    %v2518 = vpop.xlane.xlu0 %2517
    %v2519 = vrcp.pop %v2518
    %v2520 = vmul.f32 %v2515, %v2519
    %v2521 = vsel %vm2177, 0.0, %v2520
    %2522 = vrot.lane.b32.xlu0 %v172, 64
    %v2523 = vpop.permute.xlu0 %2522
    %v2526 = vsel %vm355, %v2521, 0
    %2528 = vmatprep.subr.mxu0 0.0
    %2529 = vmatpush1.msra.mxu0 0.0
    %2530 = vmatprep.subr.mxu0 0.0
    %2531 = vmatpush1.msra.mxu0 0.0
    %2532 = vmatprep.subr.mxu0 0.0
    %2533 = vmatpush1.msra.mxu0 0.0
    %2534 = vmatprep.subr.mxu0 0.0
    %2535 = vmatpush1.msra.mxu0 0.0
    %2536 = vmatprep.subr.mxu0 0.0
    %2537 = vmatpush1.msra.mxu0 0.0
    %2538 = vmatprep.subr.mxu0 0.0
    %2539 = vmatpush1.msra.mxu0 0.0
    %2540 = vmatprep.subr.mxu0 0.0
    %2541 = vmatpush1.msra.mxu0 0.0
    %2542 = vmatprep.subr.mxu0 0.0
    %2543 = vmatpush1.msra.mxu0 0.0
    %2544 = vmatprep.subr.mxu0 0.0
    %2545 = vmatpush1.msra.mxu0 0.0
    %2546 = vmatprep.subr.mxu0 0.0
    %2547 = vmatpush1.msra.mxu0 0.0
    %2548 = vmatprep.subr.mxu0 0.0
    %2549 = vmatpush1.msra.mxu0 0.0
    %2550 = vmatprep.subr.mxu0 0.0
    %2551 = vmatpush1.msra.mxu0 0.0
    %2552 = vmatprep.subr.mxu0 0.0
    %2553 = vmatpush1.msra.mxu0 0.0
    %2554 = vmatprep.subr.mxu0 0.0
    %2555 = vmatpush1.msra.mxu0 0.0
    %2556 = vmatprep.subr.mxu0 0.0
    %2557 = vmatpush1.msra.mxu0 0.0
    %2558 = vmatprep.subr.mxu0 0.0
    %2559 = vmatpush1.msra.mxu0 %v2523
    %2560 = vmatprep.subr.mxu0 0.0
    %2561 = vmatpush2.msra.mxu0 0.0
    %2562 = vmatprep.subr.mxu0 0.0
    %2563 = vmatpush2.msra.mxu0 0.0
    %2564 = vmatprep.subr.mxu0 0.0
    %2565 = vmatpush2.msra.mxu0 0.0
    %2566 = vmatprep.subr.mxu0 0.0
    %2567 = vmatpush2.msra.mxu0 0.0
    %2568 = vmatprep.subr.mxu0 0.0
    %2569 = vmatpush2.msra.mxu0 0.0
    %2570 = vmatprep.subr.mxu0 0.0
    %2571 = vmatpush2.msra.mxu0 0.0
    %2572 = vmatprep.subr.mxu0 0.0
    %2573 = vmatpush2.msra.mxu0 0.0
    %2574 = vmatprep.subr.mxu0 0.0
    %2575 = vmatpush2.msra.mxu0 0.0
    %2576 = vmatprep.subr.mxu0 0.0
    %2577 = vmatpush2.msra.mxu0 0.0
    %2578 = vmatprep.subr.mxu0 0.0
    %2579 = vmatpush2.msra.mxu0 0.0
    %2580 = vmatprep.subr.mxu0 0.0
    %2581 = vmatpush2.msra.mxu0 0.0
    %2582 = vmatprep.subr.mxu0 0.0
    %2583 = vmatpush2.msra.mxu0 0.0
    %2584 = vmatprep.subr.mxu0 0.0
    %2585 = vmatpush2.msra.mxu0 0.0
    %2586 = vmatprep.subr.mxu0 0.0
    %2587 = vmatpush2.msra.mxu0 0.0
    %2588 = vmatprep.subr.mxu0 0.0
    %2589 = vmatpush2.msra.mxu0 0.0
    %2590 = vmatprep.subr.mxu0 0.0
    %2591 = vmatpush2.msra.mxu0 0.0
    %2592 = vmatprep.mubr.f32.mxu0 0.0
    %2593 = vmatmul.mubr.f32.gmra.mxu0 %v2526
    %v2594 = vpop.f32.mrf.mxu0
    %v2595 = vadd.f32 0.0, %v2594
    %v2596 = vpop.f32.mrf.mxu0
    %2597 = vdwg.mxu0
    %2598 = vrot.lane.b32.xlu0 %v273, 120
    %v2599 = vpop.permute.xlu0 %2598
    %2600 = vrot.lane.b32.xlu0 %v172, 88
    %v2601 = vpop.permute.xlu0 %2600
    %v2602 = vsel %vm355, %v2599, 0
    %v2604 = vsel %vm355, %v2601, 0
    %2606 = vmatprep.subr.mxu0 0.0
    %2607 = vmatpush1.xpose.msra.mxu0 0.0
    %2608 = vmatprep.subr.mxu0 0.0
    %2609 = vmatpush1.xpose.msra.mxu0 0.0
    %2610 = vmatprep.subr.mxu0 0.0
    %2611 = vmatpush1.xpose.msra.mxu0 0.0
    %2612 = vmatprep.subr.mxu0 0.0
    %2613 = vmatpush1.xpose.msra.mxu0 0.0
    %2614 = vmatprep.subr.mxu0 0.0
    %2615 = vmatpush1.xpose.msra.mxu0 0.0
    %2616 = vmatprep.subr.mxu0 0.0
    %2617 = vmatpush1.xpose.msra.mxu0 0.0
    %2618 = vmatprep.subr.mxu0 0.0
    %2619 = vmatpush1.xpose.msra.mxu0 0.0
    %2620 = vmatprep.subr.mxu0 0.0
    %2621 = vmatpush1.xpose.msra.mxu0 0.0
    %2622 = vmatprep.subr.mxu0 0.0
    %2623 = vmatpush1.xpose.msra.mxu0 0.0
    %2624 = vmatprep.subr.mxu0 0.0
    %2625 = vmatpush1.xpose.msra.mxu0 0.0
    %2626 = vmatprep.subr.mxu0 0.0
    %2627 = vmatpush1.xpose.msra.mxu0 0.0
    %2628 = vmatprep.subr.mxu0 0.0
    %2629 = vmatpush1.xpose.msra.mxu0 %v2604
    %2630 = vmatprep.subr.mxu0 0.0
    %2631 = vmatpush1.xpose.msra.mxu0 %v821
    %2632 = vmatprep.subr.mxu0 0.0
    %2633 = vmatpush1.xpose.msra.mxu0 %v819
    %2634 = vmatprep.subr.mxu0 0.0
    %2635 = vmatpush1.xpose.msra.mxu0 %v817
    %2636 = vmatprep.subr.mxu0 0.0
    %2637 = vmatpush1.xpose.msra.mxu0 %v815
    %2638 = vmatprep.subr.mxu0 0.0
    %2639 = vmatpush2.xpose.msra.mxu0 0.0
    %2640 = vmatprep.subr.mxu0 0.0
    %2641 = vmatpush2.xpose.msra.mxu0 0.0
    %2642 = vmatprep.subr.mxu0 0.0
    %2643 = vmatpush2.xpose.msra.mxu0 0.0
    %2644 = vmatprep.subr.mxu0 0.0
    %2645 = vmatpush2.xpose.msra.mxu0 0.0
    %2646 = vmatprep.subr.mxu0 0.0
    %2647 = vmatpush2.xpose.msra.mxu0 0.0
    %2648 = vmatprep.subr.mxu0 0.0
    %2649 = vmatpush2.xpose.msra.mxu0 0.0
    %2650 = vmatprep.subr.mxu0 0.0
    %2651 = vmatpush2.xpose.msra.mxu0 0.0
    %2652 = vmatprep.subr.mxu0 0.0
    %2653 = vmatpush2.xpose.msra.mxu0 0.0
    %2654 = vmatprep.subr.mxu0 0.0
    %2655 = vmatpush2.xpose.msra.mxu0 0.0
    %2656 = vmatprep.subr.mxu0 0.0
    %2657 = vmatpush2.xpose.msra.mxu0 0.0
    %2658 = vmatprep.subr.mxu0 0.0
    %2659 = vmatpush2.xpose.msra.mxu0 0.0
    %2660 = vmatprep.subr.mxu0 0.0
    %2661 = vmatpush2.xpose.msra.mxu0 0.0
    %2662 = vmatprep.subr.mxu0 0.0
    %2663 = vmatpush2.xpose.msra.mxu0 0.0
    %2664 = vmatprep.subr.mxu0 0.0
    %2665 = vmatpush2.xpose.msra.mxu0 0.0
    %2666 = vmatprep.subr.mxu0 0.0
    %2667 = vmatpush2.xpose.msra.mxu0 0.0
    %2668 = vmatprep.subr.mxu0 0.0
    %2669 = vmatpush2.xpose.msra.mxu0 0.0
    %2670 = vmatprep.mubr.f32.mxu0 0.0
    %2671 = vmatmul.mubr.f32.gmra.mxu0 %v2602
    %v2672 = vpop.f32.mrf.mxu0
    %v2673 = vadd.f32 0.0, %v2672
    %v2674 = vpop.f32.mrf.mxu0
    %2675 = vdwg.mxu0
    %2676 = vmatprep.subr.mxu0 0.0
    %2677 = vmatpush1.xpose.msra.mxu0 0.0
    %2678 = vmatprep.subr.mxu0 0.0
    %2679 = vmatpush1.xpose.msra.mxu0 0.0
    %2680 = vmatprep.subr.mxu0 0.0
    %2681 = vmatpush1.xpose.msra.mxu0 0.0
    %2682 = vmatprep.subr.mxu0 0.0
    %2683 = vmatpush1.xpose.msra.mxu0 0.0
    %2684 = vmatprep.subr.mxu0 0.0
    %2685 = vmatpush1.xpose.msra.mxu0 0.0
    %2686 = vmatprep.subr.mxu0 0.0
    %2687 = vmatpush1.xpose.msra.mxu0 0.0
    %2688 = vmatprep.subr.mxu0 0.0
    %2689 = vmatpush1.xpose.msra.mxu0 0.0
    %2690 = vmatprep.subr.mxu0 0.0
    %2691 = vmatpush1.xpose.msra.mxu0 0.0
    %2692 = vmatprep.subr.mxu0 0.0
    %2693 = vmatpush1.xpose.msra.mxu0 0.0
    %2694 = vmatprep.subr.mxu0 0.0
    %2695 = vmatpush1.xpose.msra.mxu0 0.0
    %2696 = vmatprep.subr.mxu0 0.0
    %2697 = vmatpush1.xpose.msra.mxu0 0.0
    %2698 = vmatprep.subr.mxu0 0.0
    %2699 = vmatpush1.xpose.msra.mxu0 0.0
    %2700 = vmatprep.subr.mxu0 0.0
    %2701 = vmatpush1.xpose.msra.mxu0 %v909
    %2702 = vmatprep.subr.mxu0 0.0
    %2703 = vmatpush1.xpose.msra.mxu0 %v907
    %2704 = vmatprep.subr.mxu0 0.0
    %2705 = vmatpush1.xpose.msra.mxu0 %v905
    %2706 = vmatprep.subr.mxu0 0.0
    %2707 = vmatpush1.xpose.msra.mxu0 %v903
    %2708 = vmatprep.subr.mxu0 0.0
    %2709 = vmatpush2.xpose.msra.mxu0 0.0
    %2710 = vmatprep.subr.mxu0 0.0
    %2711 = vmatpush2.xpose.msra.mxu0 0.0
    %2712 = vmatprep.subr.mxu0 0.0
    %2713 = vmatpush2.xpose.msra.mxu0 0.0
    %2714 = vmatprep.subr.mxu0 0.0
    %2715 = vmatpush2.xpose.msra.mxu0 0.0
    %2716 = vmatprep.subr.mxu0 0.0
    %2717 = vmatpush2.xpose.msra.mxu0 0.0
    %2718 = vmatprep.subr.mxu0 0.0
    %2719 = vmatpush2.xpose.msra.mxu0 0.0
    %2720 = vmatprep.subr.mxu0 0.0
    %2721 = vmatpush2.xpose.msra.mxu0 0.0
    %2722 = vmatprep.subr.mxu0 0.0
    %2723 = vmatpush2.xpose.msra.mxu0 0.0
    %2724 = vmatprep.subr.mxu0 0.0
    %2725 = vmatpush2.xpose.msra.mxu0 0.0
    %2726 = vmatprep.subr.mxu0 0.0
    %2727 = vmatpush2.xpose.msra.mxu0 0.0
    %2728 = vmatprep.subr.mxu0 0.0
    %2729 = vmatpush2.xpose.msra.mxu0 0.0
    %2730 = vmatprep.subr.mxu0 0.0
    %2731 = vmatpush2.xpose.msra.mxu0 0.0
    %2732 = vmatprep.subr.mxu0 0.0
    %2733 = vmatpush2.xpose.msra.mxu0 0.0
    %2734 = vmatprep.subr.mxu0 0.0
    %2735 = vmatpush2.xpose.msra.mxu0 0.0
    %2736 = vmatprep.subr.mxu0 0.0
    %2737 = vmatpush2.xpose.msra.mxu0 0.0
    %2738 = vmatprep.subr.mxu0 0.0
    %2739 = vmatpush2.xpose.msra.mxu0 0.0
    %2740 = vmatprep.mubr.f32.mxu0 0.0
    %2741 = vmatmul.mubr.f32.gmra.mxu0 %v2604
    %v2742 = vpop.f32.mrf.mxu0
    %v2743 = vadd.f32 0.0, %v2742
    %v2744 = vpop.f32.mrf.mxu0
    %2745 = vdwg.mxu0
    %v2747 = vcombine.high %v2673, %v2673
    %v2749 = vunpack.c.l.s4 1966171168
    %v2750 = vunpack.c.0.s8 %v2749
    %v2751 = vlaneseq
    %v2752 = vshrl.u32 %v2751, 7
    %v2753 = vsub.s32 %v2750, %v2752
    %v2754 = vrot.slane %v2673, %v2753
    %v2756 = vunpack.c.l.s4 1966171168
    %v2757 = vunpack.c.0.s8 %v2756
    %v2758 = vlaneseq
    %v2759 = vshrl.u32 %v2758, 7
    %v2760 = vsub.s32 %v2757, %v2759
    %v2761 = vrot.slane %v2747, %v2760
    %v2762 = vcombine.high %v2754, %v2754
    %v2763 = vcombine.high %v2761, %v2761
    %v2765 = vunpack.c.l.s4 1966171168
    %v2766 = vunpack.c.0.s8 %v2765
    %v2767 = vlaneseq
    %v2768 = vshrl.u32 %v2767, 7
    %v2769 = vsub.s32 %v2766, %v2768
    %v2770 = vrot.slane %v2754, %v2769
    %v2772 = vunpack.c.l.s4 1966171168
    %v2773 = vunpack.c.0.s8 %v2772
    %v2774 = vlaneseq
    %v2775 = vshrl.u32 %v2774, 7
    %v2776 = vsub.s32 %v2773, %v2775
    %v2777 = vrot.slane %v2761, %v2776
    %v2779 = vunpack.c.l.s4 1966171168
    %v2780 = vunpack.c.0.s8 %v2779
    %v2781 = vlaneseq
    %v2782 = vshrl.u32 %v2781, 7
    %v2783 = vsub.s32 %v2780, %v2782
    %v2784 = vrot.slane %v2762, %v2783
    %v2786 = vunpack.c.l.s4 1966171168
    %v2787 = vunpack.c.0.s8 %v2786
    %v2788 = vlaneseq
    %v2789 = vshrl.u32 %v2788, 7
    %v2790 = vsub.s32 %v2787, %v2789
    %v2791 = vrot.slane %v2763, %v2790
    %v2792 = vcombine.high %v2770, %v2770
    %v2793 = vcombine.high %v2777, %v2777
    %v2794 = vcombine.high %v2784, %v2784
    %v2795 = vcombine.high %v2791, %v2791
    %v2796 = vlaneseq
    %v2797 = vshrl.u32 %v2796, 7
    %v2798 = vsub.s32 0, %v2797
    %v2799 = vrot.slane %v2770, %v2798
    %v2800 = vlaneseq
    %v2801 = vshrl.u32 %v2800, 7
    %v2802 = vsub.s32 0, %v2801
    %v2803 = vrot.slane %v2784, %v2802
    %v2804 = vlaneseq
    %v2805 = vshrl.u32 %v2804, 7
    %v2806 = vsub.s32 0, %v2805
    %v2807 = vrot.slane %v2792, %v2806
    %v2808 = vlaneseq
    %v2809 = vshrl.u32 %v2808, 7
    %v2810 = vsub.s32 0, %v2809
    %v2811 = vrot.slane %v2794, %v2810
    %v2812 = vlaneseq
    %v2813 = vshrl.u32 %v2812, 7
    %v2814 = vsub.s32 0, %v2813
    %v2815 = vrot.slane %v2777, %v2814
    %v2816 = vlaneseq
    %v2817 = vshrl.u32 %v2816, 7
    %v2818 = vsub.s32 0, %v2817
    %v2819 = vrot.slane %v2791, %v2818
    %v2820 = vlaneseq
    %v2821 = vshrl.u32 %v2820, 7
    %v2822 = vsub.s32 0, %v2821
    %v2823 = vrot.slane %v2793, %v2822
    %v2824 = vlaneseq
    %v2825 = vshrl.u32 %v2824, 7
    %v2826 = vsub.s32 0, %v2825
    %v2827 = vrot.slane %v2795, %v2826
    %v2836 = vadd.f32 %v2799, %v2743
    %v2837 = vadd.f32 %v2803, %v2743
    %v2838 = vadd.f32 %v2807, %v2743
    %v2839 = vadd.f32 %v2811, %v2743
    %v2840 = vadd.f32 %v2815, %v2743
    %v2841 = vadd.f32 %v2819, %v2743
    %v2842 = vadd.f32 %v2823, %v2743
    %v2843 = vadd.f32 %v2827, %v2743
    %v2844 = vsel %vm330, %v2836, 0.0
    %v2845 = vsel %vm331, %v2837, 0.0
    %v2846 = vsel %vm332, %v2838, 0.0
    %v2847 = vsel %vm333, %v2839, 0.0
    %v2848 = vsel %vm334, %v2840, 0.0
    %v2849 = vsel %vm335, %v2841, 0.0
    %v2850 = vsel %vm336, %v2842, 0.0
    %v2851 = vsel %vm337, %v2843, 0.0
    %v2852 = vsel %vm93, %v2844, 0.0
    %2853 = vadd.xlane.f32.xlu0 %v2852
    %v2854 = vpop.xlane.xlu0 %2853
    %v2855 = vsel %vm93, %v2845, 0.0
    %2856 = vadd.xlane.f32.xlu0 %v2855
    %v2857 = vpop.xlane.xlu0 %2856
    %v2858 = vsel %vm93, %v2846, 0.0
    %2859 = vadd.xlane.f32.xlu0 %v2858
    %v2860 = vpop.xlane.xlu0 %2859
    %v2861 = vsel %vm93, %v2847, 0.0
    %2862 = vadd.xlane.f32.xlu0 %v2861
    %v2863 = vpop.xlane.xlu0 %2862
    %v2864 = vsel %vm93, %v2848, 0.0
    %2865 = vadd.xlane.f32.xlu0 %v2864
    %v2866 = vpop.xlane.xlu0 %2865
    %v2867 = vsel %vm93, %v2849, 0.0
    %2868 = vadd.xlane.f32.xlu0 %v2867
    %v2869 = vpop.xlane.xlu0 %2868
    %v2870 = vsel %vm93, %v2850, 0.0
    %2871 = vadd.xlane.f32.xlu0 %v2870
    %v2872 = vpop.xlane.xlu0 %2871
    %v2873 = vsel %vm93, %v2851, 0.0
    %2874 = vadd.xlane.f32.xlu0 %v2873
    %v2875 = vpop.xlane.xlu0 %2874
    %v2884 = vlaneseq
    %v2885 = vshrl.u32 %v2884, 7
    %v2886 = vsub.s32 %v659, %v2885
    %v2887 = vrot.slane %v2854, %v2886
    %v2888 = vlaneseq
    %v2889 = vshrl.u32 %v2888, 7
    %v2890 = vsub.s32 %v659, %v2889
    %v2891 = vrot.slane %v2857, %v2890
    %v2892 = vlaneseq
    %v2893 = vshrl.u32 %v2892, 7
    %v2894 = vsub.s32 %v659, %v2893
    %v2895 = vrot.slane %v2860, %v2894
    %v2896 = vlaneseq
    %v2897 = vshrl.u32 %v2896, 7
    %v2898 = vsub.s32 %v659, %v2897
    %v2899 = vrot.slane %v2863, %v2898
    %v2900 = vlaneseq
    %v2901 = vshrl.u32 %v2900, 7
    %v2902 = vsub.s32 %v659, %v2901
    %v2903 = vrot.slane %v2866, %v2902
    %v2904 = vlaneseq
    %v2905 = vshrl.u32 %v2904, 7
    %v2906 = vsub.s32 %v659, %v2905
    %v2907 = vrot.slane %v2869, %v2906
    %v2908 = vlaneseq
    %v2909 = vshrl.u32 %v2908, 7
    %v2910 = vsub.s32 %v659, %v2909
    %v2911 = vrot.slane %v2872, %v2910
    %v2912 = vlaneseq
    %v2913 = vshrl.u32 %v2912, 7
    %v2914 = vsub.s32 %v659, %v2913
    %v2915 = vrot.slane %v2875, %v2914
    %v2916 = vsel %vm692, %v2891, %v2887
    %v2917 = vsel %vm694, %v2895, %v2916
    %v2918 = vsel %vm696, %v2899, %v2917
    %v2919 = vsel %vm698, %v2903, %v2918
    %v2920 = vsel %vm700, %v2907, %v2919
    %v2921 = vsel %vm702, %v2911, %v2920
    %v2922 = vsel %vm704, %v2915, %v2921
    %v2924 = vadd.f32 %v2673, %v2922
    %2926 = vrot.lane.b32.xlu0 %v2924, 96
    %v2927 = vpop.permute.xlu0 %2926
    %v2929 = vsel %vm2177, -3.4028235e+38, %v2927
    %v2930 = vsel %vm355, %v2929, -inf
    %2931 = vmax.xlane.f32.xlu0 %v2930
    %v2932 = vpop.xlane.xlu0 %2931
    %v2933 = vsub.f32 %v2929, %v2932
    %v2934 = vmul.f32 %v2933, 1.442695
    %v2935 = vpow.pop %v2934
    %v2936 = vsel %vm355, %v2935, 0.0
    %2937 = vadd.xlane.f32.xlu0 %v2936
    %v2938 = vpop.xlane.xlu0 %2937
    %v2939 = vrcp.pop %v2938
    %v2940 = vmul.f32 %v2935, %v2939
    %v2941 = vsel %vm2177, 0.0, %v2940
    %2942 = vrot.lane.b32.xlu0 %v172, 56
    %v2943 = vpop.permute.xlu0 %2942
    %v2946 = vsel %vm355, %v2941, 0
    %2948 = vmatprep.subr.mxu0 0.0
    %2949 = vmatpush1.msra.mxu0 0.0
    %2950 = vmatprep.subr.mxu0 0.0
    %2951 = vmatpush1.msra.mxu0 0.0
    %2952 = vmatprep.subr.mxu0 0.0
    %2953 = vmatpush1.msra.mxu0 0.0
    %2954 = vmatprep.subr.mxu0 0.0
    %2955 = vmatpush1.msra.mxu0 0.0
    %2956 = vmatprep.subr.mxu0 0.0
    %2957 = vmatpush1.msra.mxu0 0.0
    %2958 = vmatprep.subr.mxu0 0.0
    %2959 = vmatpush1.msra.mxu0 0.0
    %2960 = vmatprep.subr.mxu0 0.0
    %2961 = vmatpush1.msra.mxu0 0.0
    %2962 = vmatprep.subr.mxu0 0.0
    %2963 = vmatpush1.msra.mxu0 0.0
    %2964 = vmatprep.subr.mxu0 0.0
    %2965 = vmatpush1.msra.mxu0 0.0
    %2966 = vmatprep.subr.mxu0 0.0
    %2967 = vmatpush1.msra.mxu0 0.0
    %2968 = vmatprep.subr.mxu0 0.0
    %2969 = vmatpush1.msra.mxu0 0.0
    %2970 = vmatprep.subr.mxu0 0.0
    %2971 = vmatpush1.msra.mxu0 0.0
    %2972 = vmatprep.subr.mxu0 0.0
    %2973 = vmatpush1.msra.mxu0 0.0
    %2974 = vmatprep.subr.mxu0 0.0
    %2975 = vmatpush1.msra.mxu0 0.0
    %2976 = vmatprep.subr.mxu0 0.0
    %2977 = vmatpush1.msra.mxu0 0.0
    %2978 = vmatprep.subr.mxu0 0.0
    %2979 = vmatpush1.msra.mxu0 %v2943
    %2980 = vmatprep.subr.mxu0 0.0
    %2981 = vmatpush2.msra.mxu0 0.0
    %2982 = vmatprep.subr.mxu0 0.0
    %2983 = vmatpush2.msra.mxu0 0.0
    %2984 = vmatprep.subr.mxu0 0.0
    %2985 = vmatpush2.msra.mxu0 0.0
    %2986 = vmatprep.subr.mxu0 0.0
    %2987 = vmatpush2.msra.mxu0 0.0
    %2988 = vmatprep.subr.mxu0 0.0
    %2989 = vmatpush2.msra.mxu0 0.0
    %2990 = vmatprep.subr.mxu0 0.0
    %2991 = vmatpush2.msra.mxu0 0.0
    %2992 = vmatprep.subr.mxu0 0.0
    %2993 = vmatpush2.msra.mxu0 0.0
    %2994 = vmatprep.subr.mxu0 0.0
    %2995 = vmatpush2.msra.mxu0 0.0
    %2996 = vmatprep.subr.mxu0 0.0
    %2997 = vmatpush2.msra.mxu0 0.0
    %2998 = vmatprep.subr.mxu0 0.0
    %2999 = vmatpush2.msra.mxu0 0.0
    %3000 = vmatprep.subr.mxu0 0.0
    %3001 = vmatpush2.msra.mxu0 0.0
    %3002 = vmatprep.subr.mxu0 0.0
    %3003 = vmatpush2.msra.mxu0 0.0
    %3004 = vmatprep.subr.mxu0 0.0
    %3005 = vmatpush2.msra.mxu0 0.0
    %3006 = vmatprep.subr.mxu0 0.0
    %3007 = vmatpush2.msra.mxu0 0.0
    %3008 = vmatprep.subr.mxu0 0.0
    %3009 = vmatpush2.msra.mxu0 0.0
    %3010 = vmatprep.subr.mxu0 0.0
    %3011 = vmatpush2.msra.mxu0 0.0
    %3012 = vmatprep.mubr.f32.mxu0 0.0
    %3013 = vmatmul.mubr.f32.gmra.mxu0 %v2946
    %v3014 = vpop.f32.mrf.mxu0
    %v3015 = vadd.f32 0.0, %v3014
    %v3016 = vpop.f32.mrf.mxu0
    %3017 = vdwg.mxu0
    %3018 = vrot.lane.b32.xlu0 %v273, 112
    %v3019 = vpop.permute.xlu0 %3018
    %3020 = vrot.lane.b32.xlu0 %v172, 80
    %v3021 = vpop.permute.xlu0 %3020
    %v3022 = vsel %vm355, %v3019, 0
    %v3024 = vsel %vm355, %v3021, 0
    %3026 = vmatprep.subr.mxu0 0.0
    %3027 = vmatpush1.xpose.msra.mxu0 0.0
    %3028 = vmatprep.subr.mxu0 0.0
    %3029 = vmatpush1.xpose.msra.mxu0 0.0
    %3030 = vmatprep.subr.mxu0 0.0
    %3031 = vmatpush1.xpose.msra.mxu0 0.0
    %3032 = vmatprep.subr.mxu0 0.0
    %3033 = vmatpush1.xpose.msra.mxu0 0.0
    %3034 = vmatprep.subr.mxu0 0.0
    %3035 = vmatpush1.xpose.msra.mxu0 0.0
    %3036 = vmatprep.subr.mxu0 0.0
    %3037 = vmatpush1.xpose.msra.mxu0 0.0
    %3038 = vmatprep.subr.mxu0 0.0
    %3039 = vmatpush1.xpose.msra.mxu0 0.0
    %3040 = vmatprep.subr.mxu0 0.0
    %3041 = vmatpush1.xpose.msra.mxu0 0.0
    %3042 = vmatprep.subr.mxu0 0.0
    %3043 = vmatpush1.xpose.msra.mxu0 0.0
    %3044 = vmatprep.subr.mxu0 0.0
    %3045 = vmatpush1.xpose.msra.mxu0 0.0
    %3046 = vmatprep.subr.mxu0 0.0
    %3047 = vmatpush1.xpose.msra.mxu0 0.0
    %3048 = vmatprep.subr.mxu0 0.0
    %3049 = vmatpush1.xpose.msra.mxu0 %v3024
    %3050 = vmatprep.subr.mxu0 0.0
    %3051 = vmatpush1.xpose.msra.mxu0 %v1273
    %3052 = vmatprep.subr.mxu0 0.0
    %3053 = vmatpush1.xpose.msra.mxu0 %v1271
    %3054 = vmatprep.subr.mxu0 0.0
    %3055 = vmatpush1.xpose.msra.mxu0 %v1269
    %3056 = vmatprep.subr.mxu0 0.0
    %3057 = vmatpush1.xpose.msra.mxu0 %v1267
    %3058 = vmatprep.subr.mxu0 0.0
    %3059 = vmatpush2.xpose.msra.mxu0 0.0
    %3060 = vmatprep.subr.mxu0 0.0
    %3061 = vmatpush2.xpose.msra.mxu0 0.0
    %3062 = vmatprep.subr.mxu0 0.0
    %3063 = vmatpush2.xpose.msra.mxu0 0.0
    %3064 = vmatprep.subr.mxu0 0.0
    %3065 = vmatpush2.xpose.msra.mxu0 0.0
    %3066 = vmatprep.subr.mxu0 0.0
    %3067 = vmatpush2.xpose.msra.mxu0 0.0
    %3068 = vmatprep.subr.mxu0 0.0
    %3069 = vmatpush2.xpose.msra.mxu0 0.0
    %3070 = vmatprep.subr.mxu0 0.0
    %3071 = vmatpush2.xpose.msra.mxu0 0.0
    %3072 = vmatprep.subr.mxu0 0.0
    %3073 = vmatpush2.xpose.msra.mxu0 0.0
    %3074 = vmatprep.subr.mxu0 0.0
    %3075 = vmatpush2.xpose.msra.mxu0 0.0
    %3076 = vmatprep.subr.mxu0 0.0
    %3077 = vmatpush2.xpose.msra.mxu0 0.0
    %3078 = vmatprep.subr.mxu0 0.0
    %3079 = vmatpush2.xpose.msra.mxu0 0.0
    %3080 = vmatprep.subr.mxu0 0.0
    %3081 = vmatpush2.xpose.msra.mxu0 0.0
    %3082 = vmatprep.subr.mxu0 0.0
    %3083 = vmatpush2.xpose.msra.mxu0 0.0
    %3084 = vmatprep.subr.mxu0 0.0
    %3085 = vmatpush2.xpose.msra.mxu0 0.0
    %3086 = vmatprep.subr.mxu0 0.0
    %3087 = vmatpush2.xpose.msra.mxu0 0.0
    %3088 = vmatprep.subr.mxu0 0.0
    %3089 = vmatpush2.xpose.msra.mxu0 0.0
    %3090 = vmatprep.mubr.f32.mxu0 0.0
    %3091 = vmatmul.mubr.f32.gmra.mxu0 %v3022
    %v3092 = vpop.f32.mrf.mxu0
    %v3093 = vadd.f32 0.0, %v3092
    %v3094 = vpop.f32.mrf.mxu0
    %3095 = vdwg.mxu0
    %3096 = vmatprep.subr.mxu0 0.0
    %3097 = vmatpush1.xpose.msra.mxu0 0.0
    %3098 = vmatprep.subr.mxu0 0.0
    %3099 = vmatpush1.xpose.msra.mxu0 0.0
    %3100 = vmatprep.subr.mxu0 0.0
    %3101 = vmatpush1.xpose.msra.mxu0 0.0
    %3102 = vmatprep.subr.mxu0 0.0
    %3103 = vmatpush1.xpose.msra.mxu0 0.0
    %3104 = vmatprep.subr.mxu0 0.0
    %3105 = vmatpush1.xpose.msra.mxu0 0.0
    %3106 = vmatprep.subr.mxu0 0.0
    %3107 = vmatpush1.xpose.msra.mxu0 0.0
    %3108 = vmatprep.subr.mxu0 0.0
    %3109 = vmatpush1.xpose.msra.mxu0 0.0
    %3110 = vmatprep.subr.mxu0 0.0
    %3111 = vmatpush1.xpose.msra.mxu0 0.0
    %3112 = vmatprep.subr.mxu0 0.0
    %3113 = vmatpush1.xpose.msra.mxu0 0.0
    %3114 = vmatprep.subr.mxu0 0.0
    %3115 = vmatpush1.xpose.msra.mxu0 0.0
    %3116 = vmatprep.subr.mxu0 0.0
    %3117 = vmatpush1.xpose.msra.mxu0 0.0
    %3118 = vmatprep.subr.mxu0 0.0
    %3119 = vmatpush1.xpose.msra.mxu0 0.0
    %3120 = vmatprep.subr.mxu0 0.0
    %3121 = vmatpush1.xpose.msra.mxu0 %v1361
    %3122 = vmatprep.subr.mxu0 0.0
    %3123 = vmatpush1.xpose.msra.mxu0 %v1359
    %3124 = vmatprep.subr.mxu0 0.0
    %3125 = vmatpush1.xpose.msra.mxu0 %v1357
    %3126 = vmatprep.subr.mxu0 0.0
    %3127 = vmatpush1.xpose.msra.mxu0 %v1355
    %3128 = vmatprep.subr.mxu0 0.0
    %3129 = vmatpush2.xpose.msra.mxu0 0.0
    %3130 = vmatprep.subr.mxu0 0.0
    %3131 = vmatpush2.xpose.msra.mxu0 0.0
    %3132 = vmatprep.subr.mxu0 0.0
    %3133 = vmatpush2.xpose.msra.mxu0 0.0
    %3134 = vmatprep.subr.mxu0 0.0
    %3135 = vmatpush2.xpose.msra.mxu0 0.0
    %3136 = vmatprep.subr.mxu0 0.0
    %3137 = vmatpush2.xpose.msra.mxu0 0.0
    %3138 = vmatprep.subr.mxu0 0.0
    %3139 = vmatpush2.xpose.msra.mxu0 0.0
    %3140 = vmatprep.subr.mxu0 0.0
    %3141 = vmatpush2.xpose.msra.mxu0 0.0
    %3142 = vmatprep.subr.mxu0 0.0
    %3143 = vmatpush2.xpose.msra.mxu0 0.0
    %3144 = vmatprep.subr.mxu0 0.0
    %3145 = vmatpush2.xpose.msra.mxu0 0.0
    %3146 = vmatprep.subr.mxu0 0.0
    %3147 = vmatpush2.xpose.msra.mxu0 0.0
    %3148 = vmatprep.subr.mxu0 0.0
    %3149 = vmatpush2.xpose.msra.mxu0 0.0
    %3150 = vmatprep.subr.mxu0 0.0
    %3151 = vmatpush2.xpose.msra.mxu0 0.0
    %3152 = vmatprep.subr.mxu0 0.0
    %3153 = vmatpush2.xpose.msra.mxu0 0.0
    %3154 = vmatprep.subr.mxu0 0.0
    %3155 = vmatpush2.xpose.msra.mxu0 0.0
    %3156 = vmatprep.subr.mxu0 0.0
    %3157 = vmatpush2.xpose.msra.mxu0 0.0
    %3158 = vmatprep.subr.mxu0 0.0
    %3159 = vmatpush2.xpose.msra.mxu0 0.0
    %3160 = vmatprep.mubr.f32.mxu0 0.0
    %3161 = vmatmul.mubr.f32.gmra.mxu0 %v3024
    %v3162 = vpop.f32.mrf.mxu0
    %v3163 = vadd.f32 0.0, %v3162
    %v3164 = vpop.f32.mrf.mxu0
    %3165 = vdwg.mxu0
    %v3167 = vcombine.high %v3093, %v3093
    %v3169 = vunpack.c.l.s4 1966171168
    %v3170 = vunpack.c.0.s8 %v3169
    %v3171 = vlaneseq
    %v3172 = vshrl.u32 %v3171, 7
    %v3173 = vsub.s32 %v3170, %v3172
    %v3174 = vrot.slane %v3093, %v3173
    %v3176 = vunpack.c.l.s4 1966171168
    %v3177 = vunpack.c.0.s8 %v3176
    %v3178 = vlaneseq
    %v3179 = vshrl.u32 %v3178, 7
    %v3180 = vsub.s32 %v3177, %v3179
    %v3181 = vrot.slane %v3167, %v3180
    %v3182 = vcombine.high %v3174, %v3174
    %v3183 = vcombine.high %v3181, %v3181
    %v3185 = vunpack.c.l.s4 1966171168
    %v3186 = vunpack.c.0.s8 %v3185
    %v3187 = vlaneseq
    %v3188 = vshrl.u32 %v3187, 7
    %v3189 = vsub.s32 %v3186, %v3188
    %v3190 = vrot.slane %v3174, %v3189
    %v3192 = vunpack.c.l.s4 1966171168
    %v3193 = vunpack.c.0.s8 %v3192
    %v3194 = vlaneseq
    %v3195 = vshrl.u32 %v3194, 7
    %v3196 = vsub.s32 %v3193, %v3195
    %v3197 = vrot.slane %v3181, %v3196
    %v3199 = vunpack.c.l.s4 1966171168
    %v3200 = vunpack.c.0.s8 %v3199
    %v3201 = vlaneseq
    %v3202 = vshrl.u32 %v3201, 7
    %v3203 = vsub.s32 %v3200, %v3202
    %v3204 = vrot.slane %v3182, %v3203
    %v3206 = vunpack.c.l.s4 1966171168
    %v3207 = vunpack.c.0.s8 %v3206
    %v3208 = vlaneseq
    %v3209 = vshrl.u32 %v3208, 7
    %v3210 = vsub.s32 %v3207, %v3209
    %v3211 = vrot.slane %v3183, %v3210
    %v3212 = vcombine.high %v3190, %v3190
    %v3213 = vcombine.high %v3197, %v3197
    %v3214 = vcombine.high %v3204, %v3204
    %v3215 = vcombine.high %v3211, %v3211
    %v3216 = vlaneseq
    %v3217 = vshrl.u32 %v3216, 7
    %v3218 = vsub.s32 0, %v3217
    %v3219 = vrot.slane %v3190, %v3218
    %v3220 = vlaneseq
    %v3221 = vshrl.u32 %v3220, 7
    %v3222 = vsub.s32 0, %v3221
    %v3223 = vrot.slane %v3204, %v3222
    %v3224 = vlaneseq
    %v3225 = vshrl.u32 %v3224, 7
    %v3226 = vsub.s32 0, %v3225
    %v3227 = vrot.slane %v3212, %v3226
    %v3228 = vlaneseq
    %v3229 = vshrl.u32 %v3228, 7
    %v3230 = vsub.s32 0, %v3229
    %v3231 = vrot.slane %v3214, %v3230
    %v3232 = vlaneseq
    %v3233 = vshrl.u32 %v3232, 7
    %v3234 = vsub.s32 0, %v3233
    %v3235 = vrot.slane %v3197, %v3234
    %v3236 = vlaneseq
    %v3237 = vshrl.u32 %v3236, 7
    %v3238 = vsub.s32 0, %v3237
    %v3239 = vrot.slane %v3211, %v3238
    %v3240 = vlaneseq
    %v3241 = vshrl.u32 %v3240, 7
    %v3242 = vsub.s32 0, %v3241
    %v3243 = vrot.slane %v3213, %v3242
    %v3244 = vlaneseq
    %v3245 = vshrl.u32 %v3244, 7
    %v3246 = vsub.s32 0, %v3245
    %v3247 = vrot.slane %v3215, %v3246
    %v3256 = vadd.f32 %v3219, %v3163
    %v3257 = vadd.f32 %v3223, %v3163
    %v3258 = vadd.f32 %v3227, %v3163
    %v3259 = vadd.f32 %v3231, %v3163
    %v3260 = vadd.f32 %v3235, %v3163
    %v3261 = vadd.f32 %v3239, %v3163
    %v3262 = vadd.f32 %v3243, %v3163
    %v3263 = vadd.f32 %v3247, %v3163
    %v3264 = vsel %vm330, %v3256, 0.0
    %v3265 = vsel %vm331, %v3257, 0.0
    %v3266 = vsel %vm332, %v3258, 0.0
    %v3267 = vsel %vm333, %v3259, 0.0
    %v3268 = vsel %vm334, %v3260, 0.0
    %v3269 = vsel %vm335, %v3261, 0.0
    %v3270 = vsel %vm336, %v3262, 0.0
    %v3271 = vsel %vm337, %v3263, 0.0
    %v3272 = vsel %vm93, %v3264, 0.0
    %3273 = vadd.xlane.f32.xlu0 %v3272
    %v3274 = vpop.xlane.xlu0 %3273
    %v3275 = vsel %vm93, %v3265, 0.0
    %3276 = vadd.xlane.f32.xlu0 %v3275
    %v3277 = vpop.xlane.xlu0 %3276
    %v3278 = vsel %vm93, %v3266, 0.0
    %3279 = vadd.xlane.f32.xlu0 %v3278
    %v3280 = vpop.xlane.xlu0 %3279
    %v3281 = vsel %vm93, %v3267, 0.0
    %3282 = vadd.xlane.f32.xlu0 %v3281
    %v3283 = vpop.xlane.xlu0 %3282
    %v3284 = vsel %vm93, %v3268, 0.0
    %3285 = vadd.xlane.f32.xlu0 %v3284
    %v3286 = vpop.xlane.xlu0 %3285
    %v3287 = vsel %vm93, %v3269, 0.0
    %3288 = vadd.xlane.f32.xlu0 %v3287
    %v3289 = vpop.xlane.xlu0 %3288
    %v3290 = vsel %vm93, %v3270, 0.0
    %3291 = vadd.xlane.f32.xlu0 %v3290
    %v3292 = vpop.xlane.xlu0 %3291
    %v3293 = vsel %vm93, %v3271, 0.0
    %3294 = vadd.xlane.f32.xlu0 %v3293
    %v3295 = vpop.xlane.xlu0 %3294
    %v3304 = vlaneseq
    %v3305 = vshrl.u32 %v3304, 7
    %v3306 = vsub.s32 %v659, %v3305
    %v3307 = vrot.slane %v3274, %v3306
    %v3308 = vlaneseq
    %v3309 = vshrl.u32 %v3308, 7
    %v3310 = vsub.s32 %v659, %v3309
    %v3311 = vrot.slane %v3277, %v3310
    %v3312 = vlaneseq
    %v3313 = vshrl.u32 %v3312, 7
    %v3314 = vsub.s32 %v659, %v3313
    %v3315 = vrot.slane %v3280, %v3314
    %v3316 = vlaneseq
    %v3317 = vshrl.u32 %v3316, 7
    %v3318 = vsub.s32 %v659, %v3317
    %v3319 = vrot.slane %v3283, %v3318
    %v3320 = vlaneseq
    %v3321 = vshrl.u32 %v3320, 7
    %v3322 = vsub.s32 %v659, %v3321
    %v3323 = vrot.slane %v3286, %v3322
    %v3324 = vlaneseq
    %v3325 = vshrl.u32 %v3324, 7
    %v3326 = vsub.s32 %v659, %v3325
    %v3327 = vrot.slane %v3289, %v3326
    %v3328 = vlaneseq
    %v3329 = vshrl.u32 %v3328, 7
    %v3330 = vsub.s32 %v659, %v3329
    %v3331 = vrot.slane %v3292, %v3330
    %v3332 = vlaneseq
    %v3333 = vshrl.u32 %v3332, 7
    %v3334 = vsub.s32 %v659, %v3333
    %v3335 = vrot.slane %v3295, %v3334
    %v3336 = vsel %vm692, %v3311, %v3307
    %v3337 = vsel %vm694, %v3315, %v3336
    %v3338 = vsel %vm696, %v3319, %v3337
    %v3339 = vsel %vm698, %v3323, %v3338
    %v3340 = vsel %vm700, %v3327, %v3339
    %v3341 = vsel %vm702, %v3331, %v3340
    %v3342 = vsel %vm704, %v3335, %v3341
    %v3344 = vadd.f32 %v3093, %v3342
    %3346 = vrot.lane.b32.xlu0 %v3344, 96
    %v3347 = vpop.permute.xlu0 %3346
    %v3349 = vsel %vm2177, -3.4028235e+38, %v3347
    %v3350 = vsel %vm355, %v3349, -inf
    %3351 = vmax.xlane.f32.xlu0 %v3350
    %v3352 = vpop.xlane.xlu0 %3351
    %v3353 = vsub.f32 %v3349, %v3352
    %v3354 = vmul.f32 %v3353, 1.442695
    %v3355 = vpow.pop %v3354
    %v3356 = vsel %vm355, %v3355, 0.0
    %3357 = vadd.xlane.f32.xlu0 %v3356
    %v3358 = vpop.xlane.xlu0 %3357
    %v3359 = vrcp.pop %v3358
    %v3360 = vmul.f32 %v3355, %v3359
    %v3361 = vsel %vm2177, 0.0, %v3360
    %3362 = vrot.lane.b32.xlu0 %v172, 48
    %v3363 = vpop.permute.xlu0 %3362
    %v3366 = vsel %vm355, %v3361, 0
    %3368 = vmatprep.subr.mxu0 0.0
    %3369 = vmatpush1.msra.mxu0 0.0
    %3370 = vmatprep.subr.mxu0 0.0
    %3371 = vmatpush1.msra.mxu0 0.0
    %3372 = vmatprep.subr.mxu0 0.0
    %3373 = vmatpush1.msra.mxu0 0.0
    %3374 = vmatprep.subr.mxu0 0.0
    %3375 = vmatpush1.msra.mxu0 0.0
    %3376 = vmatprep.subr.mxu0 0.0
    %3377 = vmatpush1.msra.mxu0 0.0
    %3378 = vmatprep.subr.mxu0 0.0
    %3379 = vmatpush1.msra.mxu0 0.0
    %3380 = vmatprep.subr.mxu0 0.0
    %3381 = vmatpush1.msra.mxu0 0.0
    %3382 = vmatprep.subr.mxu0 0.0
    %3383 = vmatpush1.msra.mxu0 0.0
    %3384 = vmatprep.subr.mxu0 0.0
    %3385 = vmatpush1.msra.mxu0 0.0
    %3386 = vmatprep.subr.mxu0 0.0
    %3387 = vmatpush1.msra.mxu0 0.0
    %3388 = vmatprep.subr.mxu0 0.0
    %3389 = vmatpush1.msra.mxu0 0.0
    %3390 = vmatprep.subr.mxu0 0.0
    %3391 = vmatpush1.msra.mxu0 0.0
    %3392 = vmatprep.subr.mxu0 0.0
    %3393 = vmatpush1.msra.mxu0 0.0
    %3394 = vmatprep.subr.mxu0 0.0
    %3395 = vmatpush1.msra.mxu0 0.0
    %3396 = vmatprep.subr.mxu0 0.0
    %3397 = vmatpush1.msra.mxu0 0.0
    %3398 = vmatprep.subr.mxu0 0.0
    %3399 = vmatpush1.msra.mxu0 %v3363
    %3400 = vmatprep.subr.mxu0 0.0
    %3401 = vmatpush2.msra.mxu0 0.0
    %3402 = vmatprep.subr.mxu0 0.0
    %3403 = vmatpush2.msra.mxu0 0.0
    %3404 = vmatprep.subr.mxu0 0.0
    %3405 = vmatpush2.msra.mxu0 0.0
    %3406 = vmatprep.subr.mxu0 0.0
    %3407 = vmatpush2.msra.mxu0 0.0
    %3408 = vmatprep.subr.mxu0 0.0
    %3409 = vmatpush2.msra.mxu0 0.0
    %3410 = vmatprep.subr.mxu0 0.0
    %3411 = vmatpush2.msra.mxu0 0.0
    %3412 = vmatprep.subr.mxu0 0.0
    %3413 = vmatpush2.msra.mxu0 0.0
    %3414 = vmatprep.subr.mxu0 0.0
    %3415 = vmatpush2.msra.mxu0 0.0
    %3416 = vmatprep.subr.mxu0 0.0
    %3417 = vmatpush2.msra.mxu0 0.0
    %3418 = vmatprep.subr.mxu0 0.0
    %3419 = vmatpush2.msra.mxu0 0.0
    %3420 = vmatprep.subr.mxu0 0.0
    %3421 = vmatpush2.msra.mxu0 0.0
    %3422 = vmatprep.subr.mxu0 0.0
    %3423 = vmatpush2.msra.mxu0 0.0
    %3424 = vmatprep.subr.mxu0 0.0
    %3425 = vmatpush2.msra.mxu0 0.0
    %3426 = vmatprep.subr.mxu0 0.0
    %3427 = vmatpush2.msra.mxu0 0.0
    %3428 = vmatprep.subr.mxu0 0.0
    %3429 = vmatpush2.msra.mxu0 0.0
    %3430 = vmatprep.subr.mxu0 0.0
    %3431 = vmatpush2.msra.mxu0 0.0
    %3432 = vmatprep.mubr.f32.mxu0 0.0
    %3433 = vmatmul.mubr.f32.gmra.mxu0 %v3366
    %v3434 = vpop.f32.mrf.mxu0
    %v3435 = vadd.f32 0.0, %v3434
    %v3436 = vpop.f32.mrf.mxu0
    %3437 = vdwg.mxu0
    %3438 = vrot.lane.b32.xlu0 %v273, 104
    %v3439 = vpop.permute.xlu0 %3438
    %3440 = vrot.lane.b32.xlu0 %v172, 72
    %v3441 = vpop.permute.xlu0 %3440
    %v3442 = vsel %vm355, %v3439, 0
    %v3444 = vsel %vm355, %v3441, 0
    %3446 = vmatprep.subr.mxu0 0.0
    %3447 = vmatpush1.xpose.msra.mxu0 0.0
    %3448 = vmatprep.subr.mxu0 0.0
    %3449 = vmatpush1.xpose.msra.mxu0 0.0
    %3450 = vmatprep.subr.mxu0 0.0
    %3451 = vmatpush1.xpose.msra.mxu0 0.0
    %3452 = vmatprep.subr.mxu0 0.0
    %3453 = vmatpush1.xpose.msra.mxu0 0.0
    %3454 = vmatprep.subr.mxu0 0.0
    %3455 = vmatpush1.xpose.msra.mxu0 0.0
    %3456 = vmatprep.subr.mxu0 0.0
    %3457 = vmatpush1.xpose.msra.mxu0 0.0
    %3458 = vmatprep.subr.mxu0 0.0
    %3459 = vmatpush1.xpose.msra.mxu0 0.0
    %3460 = vmatprep.subr.mxu0 0.0
    %3461 = vmatpush1.xpose.msra.mxu0 0.0
    %3462 = vmatprep.subr.mxu0 0.0
    %3463 = vmatpush1.xpose.msra.mxu0 0.0
    %3464 = vmatprep.subr.mxu0 0.0
    %3465 = vmatpush1.xpose.msra.mxu0 0.0
    %3466 = vmatprep.subr.mxu0 0.0
    %3467 = vmatpush1.xpose.msra.mxu0 0.0
    %3468 = vmatprep.subr.mxu0 0.0
    %3469 = vmatpush1.xpose.msra.mxu0 %v3444
    %3470 = vmatprep.subr.mxu0 0.0
    %3471 = vmatpush1.xpose.msra.mxu0 %v1725
    %3472 = vmatprep.subr.mxu0 0.0
    %3473 = vmatpush1.xpose.msra.mxu0 %v1723
    %3474 = vmatprep.subr.mxu0 0.0
    %3475 = vmatpush1.xpose.msra.mxu0 %v1721
    %3476 = vmatprep.subr.mxu0 0.0
    %3477 = vmatpush1.xpose.msra.mxu0 %v1719
    %3478 = vmatprep.subr.mxu0 0.0
    %3479 = vmatpush2.xpose.msra.mxu0 0.0
    %3480 = vmatprep.subr.mxu0 0.0
    %3481 = vmatpush2.xpose.msra.mxu0 0.0
    %3482 = vmatprep.subr.mxu0 0.0
    %3483 = vmatpush2.xpose.msra.mxu0 0.0
    %3484 = vmatprep.subr.mxu0 0.0
    %3485 = vmatpush2.xpose.msra.mxu0 0.0
    %3486 = vmatprep.subr.mxu0 0.0
    %3487 = vmatpush2.xpose.msra.mxu0 0.0
    %3488 = vmatprep.subr.mxu0 0.0
    %3489 = vmatpush2.xpose.msra.mxu0 0.0
    %3490 = vmatprep.subr.mxu0 0.0
    %3491 = vmatpush2.xpose.msra.mxu0 0.0
    %3492 = vmatprep.subr.mxu0 0.0
    %3493 = vmatpush2.xpose.msra.mxu0 0.0
    %3494 = vmatprep.subr.mxu0 0.0
    %3495 = vmatpush2.xpose.msra.mxu0 0.0
    %3496 = vmatprep.subr.mxu0 0.0
    %3497 = vmatpush2.xpose.msra.mxu0 0.0
    %3498 = vmatprep.subr.mxu0 0.0
    %3499 = vmatpush2.xpose.msra.mxu0 0.0
    %3500 = vmatprep.subr.mxu0 0.0
    %3501 = vmatpush2.xpose.msra.mxu0 0.0
    %3502 = vmatprep.subr.mxu0 0.0
    %3503 = vmatpush2.xpose.msra.mxu0 0.0
    %3504 = vmatprep.subr.mxu0 0.0
    %3505 = vmatpush2.xpose.msra.mxu0 0.0
    %3506 = vmatprep.subr.mxu0 0.0
    %3507 = vmatpush2.xpose.msra.mxu0 0.0
    %3508 = vmatprep.subr.mxu0 0.0
    %3509 = vmatpush2.xpose.msra.mxu0 0.0
    %3510 = vmatprep.mubr.f32.mxu0 0.0
    %3511 = vmatmul.mubr.f32.gmra.mxu0 %v3442
    %v3512 = vpop.f32.mrf.mxu0
    %v3513 = vadd.f32 0.0, %v3512
    %v3514 = vpop.f32.mrf.mxu0
    %3515 = vdwg.mxu0
    %3516 = vmatprep.subr.mxu0 0.0
    %3517 = vmatpush1.xpose.msra.mxu0 0.0
    %3518 = vmatprep.subr.mxu0 0.0
    %3519 = vmatpush1.xpose.msra.mxu0 0.0
    %3520 = vmatprep.subr.mxu0 0.0
    %3521 = vmatpush1.xpose.msra.mxu0 0.0
    %3522 = vmatprep.subr.mxu0 0.0
    %3523 = vmatpush1.xpose.msra.mxu0 0.0
    %3524 = vmatprep.subr.mxu0 0.0
    %3525 = vmatpush1.xpose.msra.mxu0 0.0
    %3526 = vmatprep.subr.mxu0 0.0
    %3527 = vmatpush1.xpose.msra.mxu0 0.0
    %3528 = vmatprep.subr.mxu0 0.0
    %3529 = vmatpush1.xpose.msra.mxu0 0.0
    %3530 = vmatprep.subr.mxu0 0.0
    %3531 = vmatpush1.xpose.msra.mxu0 0.0
    %3532 = vmatprep.subr.mxu0 0.0
    %3533 = vmatpush1.xpose.msra.mxu0 0.0
    %3534 = vmatprep.subr.mxu0 0.0
    %3535 = vmatpush1.xpose.msra.mxu0 0.0
    %3536 = vmatprep.subr.mxu0 0.0
    %3537 = vmatpush1.xpose.msra.mxu0 0.0
    %3538 = vmatprep.subr.mxu0 0.0
    %3539 = vmatpush1.xpose.msra.mxu0 0.0
    %3540 = vmatprep.subr.mxu0 0.0
    %3541 = vmatpush1.xpose.msra.mxu0 %v1813
    %3542 = vmatprep.subr.mxu0 0.0
    %3543 = vmatpush1.xpose.msra.mxu0 %v1811
    %3544 = vmatprep.subr.mxu0 0.0
    %3545 = vmatpush1.xpose.msra.mxu0 %v1809
    %3546 = vmatprep.subr.mxu0 0.0
    %3547 = vmatpush1.xpose.msra.mxu0 %v1807
    %3548 = vmatprep.subr.mxu0 0.0
    %3549 = vmatpush2.xpose.msra.mxu0 0.0
    %3550 = vmatprep.subr.mxu0 0.0
    %3551 = vmatpush2.xpose.msra.mxu0 0.0
    %3552 = vmatprep.subr.mxu0 0.0
    %3553 = vmatpush2.xpose.msra.mxu0 0.0
    %3554 = vmatprep.subr.mxu0 0.0
    %3555 = vmatpush2.xpose.msra.mxu0 0.0
    %3556 = vmatprep.subr.mxu0 0.0
    %3557 = vmatpush2.xpose.msra.mxu0 0.0
    %3558 = vmatprep.subr.mxu0 0.0
    %3559 = vmatpush2.xpose.msra.mxu0 0.0
    %3560 = vmatprep.subr.mxu0 0.0
    %3561 = vmatpush2.xpose.msra.mxu0 0.0
    %3562 = vmatprep.subr.mxu0 0.0
    %3563 = vmatpush2.xpose.msra.mxu0 0.0
    %3564 = vmatprep.subr.mxu0 0.0
    %3565 = vmatpush2.xpose.msra.mxu0 0.0
    %3566 = vmatprep.subr.mxu0 0.0
    %3567 = vmatpush2.xpose.msra.mxu0 0.0
    %3568 = vmatprep.subr.mxu0 0.0
    %3569 = vmatpush2.xpose.msra.mxu0 0.0
    %3570 = vmatprep.subr.mxu0 0.0
    %3571 = vmatpush2.xpose.msra.mxu0 0.0
    %3572 = vmatprep.subr.mxu0 0.0
    %3573 = vmatpush2.xpose.msra.mxu0 0.0
    %3574 = vmatprep.subr.mxu0 0.0
    %3575 = vmatpush2.xpose.msra.mxu0 0.0
    %3576 = vmatprep.subr.mxu0 0.0
    %3577 = vmatpush2.xpose.msra.mxu0 0.0
    %3578 = vmatprep.subr.mxu0 0.0
    %3579 = vmatpush2.xpose.msra.mxu0 0.0
    %3580 = vmatprep.mubr.f32.mxu0 0.0
    %3581 = vmatmul.mubr.f32.gmra.mxu0 %v3444
    %v3582 = vpop.f32.mrf.mxu0
    %v3583 = vadd.f32 0.0, %v3582
    %v3584 = vpop.f32.mrf.mxu0
    %3585 = vdwg.mxu0
    %v3587 = vcombine.high %v3513, %v3513
    %v3589 = vunpack.c.l.s4 1966171168
    %v3590 = vunpack.c.0.s8 %v3589
    %v3591 = vlaneseq
    %v3592 = vshrl.u32 %v3591, 7
    %v3593 = vsub.s32 %v3590, %v3592
    %v3594 = vrot.slane %v3513, %v3593
    %v3596 = vunpack.c.l.s4 1966171168
    %v3597 = vunpack.c.0.s8 %v3596
    %v3598 = vlaneseq
    %v3599 = vshrl.u32 %v3598, 7
    %v3600 = vsub.s32 %v3597, %v3599
    %v3601 = vrot.slane %v3587, %v3600
    %v3602 = vcombine.high %v3594, %v3594
    %v3603 = vcombine.high %v3601, %v3601
    %v3605 = vunpack.c.l.s4 1966171168
    %v3606 = vunpack.c.0.s8 %v3605
    %v3607 = vlaneseq
    %v3608 = vshrl.u32 %v3607, 7
    %v3609 = vsub.s32 %v3606, %v3608
    %v3610 = vrot.slane %v3594, %v3609
    %v3612 = vunpack.c.l.s4 1966171168
    %v3613 = vunpack.c.0.s8 %v3612
    %v3614 = vlaneseq
    %v3615 = vshrl.u32 %v3614, 7
    %v3616 = vsub.s32 %v3613, %v3615
    %v3617 = vrot.slane %v3601, %v3616
    %v3619 = vunpack.c.l.s4 1966171168
    %v3620 = vunpack.c.0.s8 %v3619
    %v3621 = vlaneseq
    %v3622 = vshrl.u32 %v3621, 7
    %v3623 = vsub.s32 %v3620, %v3622
    %v3624 = vrot.slane %v3602, %v3623
    %v3626 = vunpack.c.l.s4 1966171168
    %v3627 = vunpack.c.0.s8 %v3626
    %v3628 = vlaneseq
    %v3629 = vshrl.u32 %v3628, 7
    %v3630 = vsub.s32 %v3627, %v3629
    %v3631 = vrot.slane %v3603, %v3630
    %v3632 = vcombine.high %v3610, %v3610
    %v3633 = vcombine.high %v3617, %v3617
    %v3634 = vcombine.high %v3624, %v3624
    %v3635 = vcombine.high %v3631, %v3631
    %v3636 = vlaneseq
    %v3637 = vshrl.u32 %v3636, 7
    %v3638 = vsub.s32 0, %v3637
    %v3639 = vrot.slane %v3610, %v3638
    %v3640 = vlaneseq
    %v3641 = vshrl.u32 %v3640, 7
    %v3642 = vsub.s32 0, %v3641
    %v3643 = vrot.slane %v3624, %v3642
    %v3644 = vlaneseq
    %v3645 = vshrl.u32 %v3644, 7
    %v3646 = vsub.s32 0, %v3645
    %v3647 = vrot.slane %v3632, %v3646
    %v3648 = vlaneseq
    %v3649 = vshrl.u32 %v3648, 7
    %v3650 = vsub.s32 0, %v3649
    %v3651 = vrot.slane %v3634, %v3650
    %v3652 = vlaneseq
    %v3653 = vshrl.u32 %v3652, 7
    %v3654 = vsub.s32 0, %v3653
    %v3655 = vrot.slane %v3617, %v3654
    %v3656 = vlaneseq
    %v3657 = vshrl.u32 %v3656, 7
    %v3658 = vsub.s32 0, %v3657
    %v3659 = vrot.slane %v3631, %v3658
    %v3660 = vlaneseq
    %v3661 = vshrl.u32 %v3660, 7
    %v3662 = vsub.s32 0, %v3661
    %v3663 = vrot.slane %v3633, %v3662
    %v3664 = vlaneseq
    %v3665 = vshrl.u32 %v3664, 7
    %v3666 = vsub.s32 0, %v3665
    %v3667 = vrot.slane %v3635, %v3666
    %v3676 = vadd.f32 %v3639, %v3583
    %v3677 = vadd.f32 %v3643, %v3583
    %v3678 = vadd.f32 %v3647, %v3583
    %v3679 = vadd.f32 %v3651, %v3583
    %v3680 = vadd.f32 %v3655, %v3583
    %v3681 = vadd.f32 %v3659, %v3583
    %v3682 = vadd.f32 %v3663, %v3583
    %v3683 = vadd.f32 %v3667, %v3583
    %v3684 = vsel %vm330, %v3676, 0.0
    %v3685 = vsel %vm331, %v3677, 0.0
    %v3686 = vsel %vm332, %v3678, 0.0
    %v3687 = vsel %vm333, %v3679, 0.0
    %v3688 = vsel %vm334, %v3680, 0.0
    %v3689 = vsel %vm335, %v3681, 0.0
    %v3690 = vsel %vm336, %v3682, 0.0
    %v3691 = vsel %vm337, %v3683, 0.0
    %v3692 = vsel %vm93, %v3684, 0.0
    %3693 = vadd.xlane.f32.xlu0 %v3692
    %v3694 = vpop.xlane.xlu0 %3693
    %v3695 = vsel %vm93, %v3685, 0.0
    %3696 = vadd.xlane.f32.xlu0 %v3695
    %v3697 = vpop.xlane.xlu0 %3696
    %v3698 = vsel %vm93, %v3686, 0.0
    %3699 = vadd.xlane.f32.xlu0 %v3698
    %v3700 = vpop.xlane.xlu0 %3699
    %v3701 = vsel %vm93, %v3687, 0.0
    %3702 = vadd.xlane.f32.xlu0 %v3701
    %v3703 = vpop.xlane.xlu0 %3702
    %v3704 = vsel %vm93, %v3688, 0.0
    %3705 = vadd.xlane.f32.xlu0 %v3704
    %v3706 = vpop.xlane.xlu0 %3705
    %v3707 = vsel %vm93, %v3689, 0.0
    %3708 = vadd.xlane.f32.xlu0 %v3707
    %v3709 = vpop.xlane.xlu0 %3708
    %v3710 = vsel %vm93, %v3690, 0.0
    %3711 = vadd.xlane.f32.xlu0 %v3710
    %v3712 = vpop.xlane.xlu0 %3711
    %v3713 = vsel %vm93, %v3691, 0.0
    %3714 = vadd.xlane.f32.xlu0 %v3713
    %v3715 = vpop.xlane.xlu0 %3714
    %v3724 = vlaneseq
    %v3725 = vshrl.u32 %v3724, 7
    %v3726 = vsub.s32 %v659, %v3725
    %v3727 = vrot.slane %v3694, %v3726
    %v3728 = vlaneseq
    %v3729 = vshrl.u32 %v3728, 7
    %v3730 = vsub.s32 %v659, %v3729
    %v3731 = vrot.slane %v3697, %v3730
    %v3732 = vlaneseq
    %v3733 = vshrl.u32 %v3732, 7
    %v3734 = vsub.s32 %v659, %v3733
    %v3735 = vrot.slane %v3700, %v3734
    %v3736 = vlaneseq
    %v3737 = vshrl.u32 %v3736, 7
    %v3738 = vsub.s32 %v659, %v3737
    %v3739 = vrot.slane %v3703, %v3738
    %v3740 = vlaneseq
    %v3741 = vshrl.u32 %v3740, 7
    %v3742 = vsub.s32 %v659, %v3741
    %v3743 = vrot.slane %v3706, %v3742
    %v3744 = vlaneseq
    %v3745 = vshrl.u32 %v3744, 7
    %v3746 = vsub.s32 %v659, %v3745
    %v3747 = vrot.slane %v3709, %v3746
    %v3748 = vlaneseq
    %v3749 = vshrl.u32 %v3748, 7
    %v3750 = vsub.s32 %v659, %v3749
    %v3751 = vrot.slane %v3712, %v3750
    %v3752 = vlaneseq
    %v3753 = vshrl.u32 %v3752, 7
    %v3754 = vsub.s32 %v659, %v3753
    %v3755 = vrot.slane %v3715, %v3754
    %v3756 = vsel %vm692, %v3731, %v3727
    %v3757 = vsel %vm694, %v3735, %v3756
    %v3758 = vsel %vm696, %v3739, %v3757
    %v3759 = vsel %vm698, %v3743, %v3758
    %v3760 = vsel %vm700, %v3747, %v3759
    %v3761 = vsel %vm702, %v3751, %v3760
    %v3762 = vsel %vm704, %v3755, %v3761
    %v3764 = vadd.f32 %v3513, %v3762
    %3766 = vrot.lane.b32.xlu0 %v3764, 96
    %v3767 = vpop.permute.xlu0 %3766
    %v3769 = vsel %vm2177, -3.4028235e+38, %v3767
    %v3770 = vsel %vm355, %v3769, -inf
    %3771 = vmax.xlane.f32.xlu0 %v3770
    %v3772 = vpop.xlane.xlu0 %3771
    %v3773 = vsub.f32 %v3769, %v3772
    %v3774 = vmul.f32 %v3773, 1.442695
    %v3775 = vpow.pop %v3774
    %v3776 = vsel %vm355, %v3775, 0.0
    %3777 = vadd.xlane.f32.xlu0 %v3776
    %v3778 = vpop.xlane.xlu0 %3777
    %v3779 = vrcp.pop %v3778
    %v3780 = vmul.f32 %v3775, %v3779
    %v3781 = vsel %vm2177, 0.0, %v3780
    %3782 = vrot.lane.b32.xlu0 %v172, 40
    %v3783 = vpop.permute.xlu0 %3782
    %v3786 = vsel %vm355, %v3781, 0
    %3788 = vmatprep.subr.mxu0 0.0
    %3789 = vmatpush1.msra.mxu0 0.0
    %3790 = vmatprep.subr.mxu0 0.0
    %3791 = vmatpush1.msra.mxu0 0.0
    %3792 = vmatprep.subr.mxu0 0.0
    %3793 = vmatpush1.msra.mxu0 0.0
    %3794 = vmatprep.subr.mxu0 0.0
    %3795 = vmatpush1.msra.mxu0 0.0
    %3796 = vmatprep.subr.mxu0 0.0
    %3797 = vmatpush1.msra.mxu0 0.0
    %3798 = vmatprep.subr.mxu0 0.0
    %3799 = vmatpush1.msra.mxu0 0.0
    %3800 = vmatprep.subr.mxu0 0.0
    %3801 = vmatpush1.msra.mxu0 0.0
    %3802 = vmatprep.subr.mxu0 0.0
    %3803 = vmatpush1.msra.mxu0 0.0
    %3804 = vmatprep.subr.mxu0 0.0
    %3805 = vmatpush1.msra.mxu0 0.0
    %3806 = vmatprep.subr.mxu0 0.0
    %3807 = vmatpush1.msra.mxu0 0.0
    %3808 = vmatprep.subr.mxu0 0.0
    %3809 = vmatpush1.msra.mxu0 0.0
    %3810 = vmatprep.subr.mxu0 0.0
    %3811 = vmatpush1.msra.mxu0 0.0
    %3812 = vmatprep.subr.mxu0 0.0
    %3813 = vmatpush1.msra.mxu0 0.0
    %3814 = vmatprep.subr.mxu0 0.0
    %3815 = vmatpush1.msra.mxu0 0.0
    %3816 = vmatprep.subr.mxu0 0.0
    %3817 = vmatpush1.msra.mxu0 0.0
    %3818 = vmatprep.subr.mxu0 0.0
    %3819 = vmatpush1.msra.mxu0 %v3783
    %3820 = vmatprep.subr.mxu0 0.0
    %3821 = vmatpush2.msra.mxu0 0.0
    %3822 = vmatprep.subr.mxu0 0.0
    %3823 = vmatpush2.msra.mxu0 0.0
    %3824 = vmatprep.subr.mxu0 0.0
    %3825 = vmatpush2.msra.mxu0 0.0
    %3826 = vmatprep.subr.mxu0 0.0
    %3827 = vmatpush2.msra.mxu0 0.0
    %3828 = vmatprep.subr.mxu0 0.0
    %3829 = vmatpush2.msra.mxu0 0.0
    %3830 = vmatprep.subr.mxu0 0.0
    %3831 = vmatpush2.msra.mxu0 0.0
    %3832 = vmatprep.subr.mxu0 0.0
    %3833 = vmatpush2.msra.mxu0 0.0
    %3834 = vmatprep.subr.mxu0 0.0
    %3835 = vmatpush2.msra.mxu0 0.0
    %3836 = vmatprep.subr.mxu0 0.0
    %3837 = vmatpush2.msra.mxu0 0.0
    %3838 = vmatprep.subr.mxu0 0.0
    %3839 = vmatpush2.msra.mxu0 0.0
    %3840 = vmatprep.subr.mxu0 0.0
    %3841 = vmatpush2.msra.mxu0 0.0
    %3842 = vmatprep.subr.mxu0 0.0
    %3843 = vmatpush2.msra.mxu0 0.0
    %3844 = vmatprep.subr.mxu0 0.0
    %3845 = vmatpush2.msra.mxu0 0.0
    %3846 = vmatprep.subr.mxu0 0.0
    %3847 = vmatpush2.msra.mxu0 0.0
    %3848 = vmatprep.subr.mxu0 0.0
    %3849 = vmatpush2.msra.mxu0 0.0
    %3850 = vmatprep.subr.mxu0 0.0
    %3851 = vmatpush2.msra.mxu0 0.0
    %3852 = vmatprep.mubr.f32.mxu0 0.0
    %3853 = vmatmul.mubr.f32.gmra.mxu0 %v3786
    %v3854 = vpop.f32.mrf.mxu0
    %v3855 = vadd.f32 0.0, %v3854
    %v3856 = vpop.f32.mrf.mxu0
    %3857 = vdwg.mxu0
    %3859 = vrot.lane.b32.xlu0 %v3015, 8
    %v3860 = vpop.permute.xlu0 %3859
    %3863 = vrot.lane.b32.xlu0 %v3435, 16
    %v3864 = vpop.permute.xlu0 %3863
    %3867 = vrot.lane.b32.xlu0 %v3855, 24
    %v3868 = vpop.permute.xlu0 %3867
    %v3870 = vsel %vm355, %v2595, %v3860
    %v3871 = vsel %vm2170, %v3870, %v3864
    %v3872 = vsel %vm2172, %v3871, %v3868
    %s3873 = scalar_lea.vmem [#allocation10], 8
    %3874 = vst.msk [vmem:[%s3873] sm:$0xff] %vm93, %v3872
    // Predicated region
    $region38: #{disentangled_self_attention.1} parent=1 // pred_check
      _
    $region39: #{disentangled_self_attention.1} parent=1 // pred_check_branch
      %3876 = sbr.rel (0) target = $region41
    $region40: #{disentangled_self_attention.1} parent=1 // pred_region
      %s3878 = ssub.s32 256, 256
      %3879 = vsyncadd [#allocation4], %s3878
      %s3880 = sshll.u32 [#allocation10], 4
      %s3881 = int_to_ptr.vmem [resolvable:$true] %s3880
      %3886 = dma.vmem_to_hbm [thread:$0]  %s3881, 256, %s5, [#allocation4], 128, 128, 8
    $region41: #{disentangled_self_attention.1} parent=1 // pred_fallthru
      _
    // Predicated region
    $region42: #{disentangled_self_attention.1} parent=1 // pred_check
      _
    $region43: #{disentangled_self_attention.1} parent=1 // pred_check_branch
      %3888 = sbr.rel (0) target = $region45
    $region44: #{disentangled_self_attention.1} parent=1 // pred_region
      %3889 = dma.done [#allocation4], 256
    $region45: #{disentangled_self_attention.1} parent=1 // pred_fallthru
      _
    %3890 = vsyncpa [#allocation3], 1
    %3891 = vsyncpa [#allocation6], 1
    %3892 = vsyncpa [#allocation9], 1
    %3893 = vsyncpa [#allocation4], 1

</llo_original>
